<compile_context>
chip_gen: v7x
topology: tpu7x:2x2x1
jax: 0.10.0
libtpu: 0.0.40
codegen_flags: <defaults>
</compile_context>

<pallas_src>
import jax
import jax.numpy as jnp
from jax.experimental import pallas as pl
from jax.experimental.pallas import tpu as pltpu


IN_DIM = 28 * 28          # 784 (multiple of 16 -> fine for bf16 sublane tiling)
HID = 512
OUT_DIM = 10
N_PAD = 128               # lane-dense output slab; wrapper slices [:, :10]
MAX_TB = 1024             # cap on the batch tile (keeps VMEM working set small)


def _choose_tile(B):
    """Batch tile: multiple of 128, big enough to amortize per-step overhead,
    but >=2 tiles when B > 128 so v7x's two TensorCores both get work."""
    if B <= 128:
        return 128
    half = -(-B // 2)                       # ceil(B/2): aim for ~2 tiles
    tb = -(-half // 128) * 128              # round up to multiple of 128
    return min(tb, MAX_TB)


def mlp_kernel(x_ref, w1_ref, b1_ref, w2_ref, b2_ref,
               w3_ref, b3_ref, w4_ref, b4_ref, o_ref):
    # x tile: (TB, 784) bf16; weights bf16 (VMEM-resident across tiles);
    # b1..b3 bf16, b4 f32. MXU accumulates in f32; the bias+ReLU epilogue runs
    # in bf16 (one f32->bf16 cast per layer) to halve VALU-slot traffic.
    x = x_ref[...]

    h = jnp.dot(x, w1_ref[...], preferred_element_type=jnp.float32)
    h = jnp.maximum(h.astype(jnp.bfloat16) + b1_ref[...], 0.0)   # ReLU (dropout = id)

    h = jnp.dot(h, w2_ref[...], preferred_element_type=jnp.float32)
    h = jnp.maximum(h.astype(jnp.bfloat16) + b2_ref[...], 0.0)

    h = jnp.dot(h, w3_ref[...], preferred_element_type=jnp.float32)
    h = jnp.maximum(h.astype(jnp.bfloat16) + b3_ref[...], 0.0)

    y = jnp.dot(h, w4_ref[...], preferred_element_type=jnp.float32)
    o_ref[...] = (y + b4_ref[...]).astype(o_ref.dtype)


def prepare_params(params):
    """One-time weight/bias preparation (bf16 cast + output-column padding).
    Hoisted out of the forward path so per-call launch latency stays minimal."""
    (w1, b1), (w2, b2), (w3, b3), (w4, b4) = params
    w1p = w1.astype(jnp.bfloat16)                                   # (784, 512)
    w2p = w2.astype(jnp.bfloat16)                                   # (512, 512)
    w3p = w3.astype(jnp.bfloat16)                                   # (512, 512)
    w4p = jnp.pad(w4, ((0, 0), (0, N_PAD - OUT_DIM))).astype(jnp.bfloat16)
    b1p = b1.astype(jnp.bfloat16)
    b2p = b2.astype(jnp.bfloat16)
    b3p = b3.astype(jnp.bfloat16)
    b4p = jnp.pad(b4, ((0, 0), (0, N_PAD - OUT_DIM)))               # f32
    return (w1p, b1p, w2p, b2p, w3p, b3p, w4p, b4p)


def net_forward(x, prepared):
    """x: (B, 1, 28, 28) or (B, 784) float32. prepared = prepare_params(params).
    Returns (B, 10) float32."""
    x2d = x.reshape(-1, IN_DIM)
    B = x2d.shape[0]
    w1p, b1p, w2p, b2p, w3p, b3p, w4p, b4p = prepared

    TB = _choose_tile(B)
    num_tiles = pl.cdiv(B, TB)
    B_pad = num_tiles * TB

    # Batch-only padding + bf16 cast (single fused XLA op; zeros are benign).
    x_pad = jnp.pad(x2d.astype(jnp.bfloat16), ((0, B_pad - B), (0, 0)))

    # Grid-invariant index_map -> weights/biases stay resident in VMEM.
    # (pl.Buffered(1) single-buffering considered but skipped: default double
    #  buffers cost <2 MiB here, well inside even v7x's 64 MiB VMEM.)
    resident = lambda shape: pl.BlockSpec(shape, lambda i: (0, 0))

    # Advisory cost hint for XLA's scheduler.
    flops = 2 * B_pad * (IN_DIM * HID + HID * HID + HID * HID + HID * N_PAD)
    bytes_accessed = (
        2 * (IN_DIM * HID + 2 * HID * HID + HID * N_PAD)   # bf16 weights
        + 2 * 3 * HID + 4 * N_PAD                          # biases
        + 2 * B_pad * IN_DIM                               # bf16 input
        + 4 * B_pad * N_PAD                                # f32 output
    )

    out = pl.pallas_call(
        mlp_kernel,
        out_shape=jax.ShapeDtypeStruct((B_pad, N_PAD), jnp.float32),
        grid_spec=pltpu.PrefetchScalarGridSpec(
            num_scalar_prefetch=0,
            grid=(num_tiles,),
            in_specs=[
                pl.BlockSpec((TB, IN_DIM), lambda i: (i, 0)),   # x: tiled over batch
                resident((IN_DIM, HID)), resident((1, HID)),
                resident((HID, HID)),    resident((1, HID)),
                resident((HID, HID)),    resident((1, HID)),
                resident((HID, N_PAD)),  resident((1, N_PAD)),
            ],
            out_specs=pl.BlockSpec((TB, N_PAD), lambda i: (i, 0)),
        ),
        compiler_params=pltpu.CompilerParams(
            dimension_semantics=("parallel",),     # v7x: shard tiles across 2 TCs
            vmem_limit_bytes=32 << 20,             # working set <~16 MiB at TB=1024
        ),
        cost_estimate=pl.CostEstimate(
            flops=flops, transcendentals=0, bytes_accessed=bytes_accessed),
    )(x_pad, w1p, b1p, w2p, b2p, w3p, b3p, w4p, b4p)

    return out[:B, :OUT_DIM]


def init_params(key):
    """Deterministic init mimicking PyTorch nn.Linear default (U[-1/sqrt(fan_in), +])."""
    def linear(key, fan_in, fan_out):
        kw, kb = jax.random.split(key)
        bound = 1.0 / jnp.sqrt(fan_in)
        w = jax.random.uniform(kw, (fan_in, fan_out), jnp.float32, -bound, bound)
        b = jax.random.uniform(kb, (1, fan_out), jnp.float32, -bound, bound)
        return w, b

    k1, k2, k3, k4 = jax.random.split(key, 4)
    return (
        linear(k1, IN_DIM, HID),
        linear(k2, HID, HID),
        linear(k3, HID, HID),
        linear(k4, HID, OUT_DIM),
    )


def reference_forward(x, params):
    """Pure-JAX reference mirroring the kernel's precision path exactly
    (bf16 operands, f32 MXU accumulation, bf16 bias+ReLU epilogue)."""
    bf = lambda a: a.astype(jnp.bfloat16)
    (w1, b1), (w2, b2), (w3, b3), (w4, b4) = params

    def layer(h, w, b):
        y = jnp.dot(h, bf(w), preferred_element_type=jnp.float32)
        return jnp.maximum(bf(y) + bf(b), 0.0)

    h = bf(x.reshape(-1, IN_DIM))
    h = layer(h, w1, b1)
    h = layer(h, w2, b2)
    h = layer(h, w3, b3)
    return jnp.dot(h, bf(w4), preferred_element_type=jnp.float32) + b4


if __name__ == "__main__":
    key = jax.random.PRNGKey(0)
    kx, kp = jax.random.split(key)

    B = 8  # small batch -> one TB=128 tile inside the wrapper
    x = jax.random.normal(kx, (B, 1, 28, 28), jnp.float32)
    params = init_params(kp)
    prepared = prepare_params(params)          # one-time weight prep

    fwd = jax.jit(net_forward)
    out = jax.block_until_ready(fwd(x, prepared))

    ref = reference_forward(x, params)
    assert out.shape == (B, OUT_DIM), out.shape
    assert jnp.allclose(out, ref, atol=1e-2, rtol=1e-2), "mismatch vs reference"

    print("KERNEL_OK")
</pallas_src>

<mosaic_0001>
module attributes {stable_mosaic.version = 11 : i64} {
  func.func @mlp_kernel(%arg0: i32, %arg1: memref<128x784xbf16, #tpu.memory_space<vmem>>, %arg2: memref<784x512xbf16, #tpu.memory_space<vmem>>, %arg3: memref<1x512xbf16, #tpu.memory_space<vmem>>, %arg4: memref<512x512xbf16, #tpu.memory_space<vmem>>, %arg5: memref<1x512xbf16, #tpu.memory_space<vmem>>, %arg6: memref<512x512xbf16, #tpu.memory_space<vmem>>, %arg7: memref<1x512xbf16, #tpu.memory_space<vmem>>, %arg8: memref<512x128xbf16, #tpu.memory_space<vmem>>, %arg9: memref<1x128xf32, #tpu.memory_space<vmem>>, %arg10: memref<128x128xf32, #tpu.memory_space<vmem>>) attributes {dimension_semantics = [#tpu.dimension_semantics<parallel>], iteration_bounds = array<i64: 1>, scalar_prefetch = 0 : i64, scratch_operands = 0 : i64, tpu.core_type = #tpu.core_type<tc>, window_params = [{transform_indices = @transform_0, window_bounds = array<i64: 128, 784>}, {pipeline_mode = #tpu.pipeline_mode<synchronous>, transform_indices = @transform_1, window_bounds = array<i64: 784, 512>}, {pipeline_mode = #tpu.pipeline_mode<synchronous>, transform_indices = @transform_2, window_bounds = array<i64: 1, 512>}, {pipeline_mode = #tpu.pipeline_mode<synchronous>, transform_indices = @transform_3, window_bounds = array<i64: 512, 512>}, {pipeline_mode = #tpu.pipeline_mode<synchronous>, transform_indices = @transform_4, window_bounds = array<i64: 1, 512>}, {pipeline_mode = #tpu.pipeline_mode<synchronous>, transform_indices = @transform_5, window_bounds = array<i64: 512, 512>}, {pipeline_mode = #tpu.pipeline_mode<synchronous>, transform_indices = @transform_6, window_bounds = array<i64: 1, 512>}, {pipeline_mode = #tpu.pipeline_mode<synchronous>, transform_indices = @transform_7, window_bounds = array<i64: 512, 128>}, {pipeline_mode = #tpu.pipeline_mode<synchronous>, transform_indices = @transform_8, window_bounds = array<i64: 1, 128>}, {transform_indices = @transform_9, window_bounds = array<i64: 128, 128>}]} {
    %c0 = arith.constant 0 : index
    %c0_0 = arith.constant 0 : index
    %0 = vector.load %arg1[%c0, %c0_0] : memref<128x784xbf16, #tpu.memory_space<vmem>>, vector<128x784xbf16>
    %c0_1 = arith.constant 0 : index
    %c0_2 = arith.constant 0 : index
    %1 = vector.load %arg2[%c0_1, %c0_2] : memref<784x512xbf16, #tpu.memory_space<vmem>>, vector<784x512xbf16>
    %cst = arith.constant dense<0.000000e+00> : vector<128x512xf32>
    %2 = tpu.matmul %0, %1, %cst {dimension_numbers = #tpu.dot_dimension_numbers<[1], [0], [0], [1], [0, 0, 1, 1], [], []>} : vector<128x784xbf16>, vector<784x512xbf16>, vector<128x512xf32> -> vector<128x512xf32>
    %3 = arith.truncf %2 : vector<128x512xf32> to vector<128x512xbf16>
    %c0_3 = arith.constant 0 : index
    %c0_4 = arith.constant 0 : index
    %4 = vector.load %arg3[%c0_3, %c0_4] : memref<1x512xbf16, #tpu.memory_space<vmem>>, vector<1x512xbf16>
    %5 = vector.broadcast %4 : vector<1x512xbf16> to vector<128x512xbf16>
    %6 = arith.addf %3, %5 : vector<128x512xbf16>
    %cst_5 = arith.constant 0.000000e+00 : bf16
    %7 = vector.broadcast %cst_5 : bf16 to vector<128x512xbf16>
    %8 = arith.maximumf %6, %7 : vector<128x512xbf16>
    %c0_6 = arith.constant 0 : index
    %c0_7 = arith.constant 0 : index
    %9 = vector.load %arg4[%c0_6, %c0_7] : memref<512x512xbf16, #tpu.memory_space<vmem>>, vector<512x512xbf16>
    %cst_8 = arith.constant dense<0.000000e+00> : vector<128x512xf32>
    %10 = tpu.matmul %8, %9, %cst_8 {dimension_numbers = #tpu.dot_dimension_numbers<[1], [0], [0], [1], [0, 0, 1, 1], [], []>} : vector<128x512xbf16>, vector<512x512xbf16>, vector<128x512xf32> -> vector<128x512xf32>
    %11 = arith.truncf %10 : vector<128x512xf32> to vector<128x512xbf16>
    %c0_9 = arith.constant 0 : index
    %c0_10 = arith.constant 0 : index
    %12 = vector.load %arg5[%c0_9, %c0_10] : memref<1x512xbf16, #tpu.memory_space<vmem>>, vector<1x512xbf16>
    %13 = vector.broadcast %12 : vector<1x512xbf16> to vector<128x512xbf16>
    %14 = arith.addf %11, %13 : vector<128x512xbf16>
    %cst_11 = arith.constant 0.000000e+00 : bf16
    %15 = vector.broadcast %cst_11 : bf16 to vector<128x512xbf16>
    %16 = arith.maximumf %14, %15 : vector<128x512xbf16>
    %c0_12 = arith.constant 0 : index
    %c0_13 = arith.constant 0 : index
    %17 = vector.load %arg6[%c0_12, %c0_13] : memref<512x512xbf16, #tpu.memory_space<vmem>>, vector<512x512xbf16>
    %cst_14 = arith.constant dense<0.000000e+00> : vector<128x512xf32>
    %18 = tpu.matmul %16, %17, %cst_14 {dimension_numbers = #tpu.dot_dimension_numbers<[1], [0], [0], [1], [0, 0, 1, 1], [], []>} : vector<128x512xbf16>, vector<512x512xbf16>, vector<128x512xf32> -> vector<128x512xf32>
    %19 = arith.truncf %18 : vector<128x512xf32> to vector<128x512xbf16>
    %c0_15 = arith.constant 0 : index
    %c0_16 = arith.constant 0 : index
    %20 = vector.load %arg7[%c0_15, %c0_16] : memref<1x512xbf16, #tpu.memory_space<vmem>>, vector<1x512xbf16>
    %21 = vector.broadcast %20 : vector<1x512xbf16> to vector<128x512xbf16>
    %22 = arith.addf %19, %21 : vector<128x512xbf16>
    %cst_17 = arith.constant 0.000000e+00 : bf16
    %23 = vector.broadcast %cst_17 : bf16 to vector<128x512xbf16>
    %24 = arith.maximumf %22, %23 : vector<128x512xbf16>
    %c0_18 = arith.constant 0 : index
    %c0_19 = arith.constant 0 : index
    %25 = vector.load %arg8[%c0_18, %c0_19] : memref<512x128xbf16, #tpu.memory_space<vmem>>, vector<512x128xbf16>
    %cst_20 = arith.constant dense<0.000000e+00> : vector<128x128xf32>
    %26 = tpu.matmul %24, %25, %cst_20 {dimension_numbers = #tpu.dot_dimension_numbers<[1], [0], [0], [1], [0, 0, 1, 1], [], []>} : vector<128x512xbf16>, vector<512x128xbf16>, vector<128x128xf32> -> vector<128x128xf32>
    %c0_21 = arith.constant 0 : index
    %c0_22 = arith.constant 0 : index
    %27 = vector.load %arg9[%c0_21, %c0_22] : memref<1x128xf32, #tpu.memory_space<vmem>>, vector<1x128xf32>
    %28 = vector.broadcast %27 : vector<1x128xf32> to vector<128x128xf32>
    %29 = arith.addf %26, %28 : vector<128x128xf32>
    %c0_23 = arith.constant 0 : index
    %c0_24 = arith.constant 0 : index
    %30 = vector.load %arg10[%c0_23, %c0_24] : memref<128x128xf32, #tpu.memory_space<vmem>>, vector<128x128xf32>
    tpu.vector_store %arg10[%c0_23, %c0_24], %29 {strides = array<i32>} : memref<128x128xf32, #tpu.memory_space<vmem>>, vector<128x128xf32>,
    return
  }
  func.func @transform_0(%arg0: i32) -> (i32, i32) {
    %c0_i32 = arith.constant 0 : i32
    %c0_i32_0 = arith.constant 0 : i32
    return %arg0, %c0_i32 : i32, i32
  }
  func.func @transform_1(%arg0: i32) -> (i32, i32) {
    %c0_i32 = arith.constant 0 : i32
    %c0_i32_0 = arith.constant 0 : i32
    %c0_i32_1 = arith.constant 0 : i32
    return %c0_i32, %c0_i32_0 : i32, i32
  }
  func.func @transform_2(%arg0: i32) -> (i32, i32) {
    %c0_i32 = arith.constant 0 : i32
    %c0_i32_0 = arith.constant 0 : i32
    %c0_i32_1 = arith.constant 0 : i32
    return %c0_i32, %c0_i32_0 : i32, i32
  }
  func.func @transform_3(%arg0: i32) -> (i32, i32) {
    %c0_i32 = arith.constant 0 : i32
    %c0_i32_0 = arith.constant 0 : i32
    %c0_i32_1 = arith.constant 0 : i32
    return %c0_i32, %c0_i32_0 : i32, i32
  }
  func.func @transform_4(%arg0: i32) -> (i32, i32) {
    %c0_i32 = arith.constant 0 : i32
    %c0_i32_0 = arith.constant 0 : i32
    %c0_i32_1 = arith.constant 0 : i32
    return %c0_i32, %c0_i32_0 : i32, i32
  }
  func.func @transform_5(%arg0: i32) -> (i32, i32) {
    %c0_i32 = arith.constant 0 : i32
    %c0_i32_0 = arith.constant 0 : i32
    %c0_i32_1 = arith.constant 0 : i32
    return %c0_i32, %c0_i32_0 : i32, i32
  }
  func.func @transform_6(%arg0: i32) -> (i32, i32) {
    %c0_i32 = arith.constant 0 : i32
    %c0_i32_0 = arith.constant 0 : i32
    %c0_i32_1 = arith.constant 0 : i32
    return %c0_i32, %c0_i32_0 : i32, i32
  }
  func.func @transform_7(%arg0: i32) -> (i32, i32) {
    %c0_i32 = arith.constant 0 : i32
    %c0_i32_0 = arith.constant 0 : i32
    %c0_i32_1 = arith.constant 0 : i32
    return %c0_i32, %c0_i32_0 : i32, i32
  }
  func.func @transform_8(%arg0: i32) -> (i32, i32) {
    %c0_i32 = arith.constant 0 : i32
    %c0_i32_0 = arith.constant 0 : i32
    %c0_i32_1 = arith.constant 0 : i32
    return %c0_i32, %c0_i32_0 : i32, i32
  }
  func.func @transform_9(%arg0: i32) -> (i32, i32) {
    %c0_i32 = arith.constant 0 : i32
    %c0_i32_0 = arith.constant 0 : i32
    return %arg0, %c0_i32 : i32, i32
  }
}

</mosaic_0001>

<llo_original>
// kernel: net_forward.1
$region0: #{net_forward.1}
  #allocation0 [shape = 'u32[]', space=smem, size = 0x4, offset = 0x4, fixed_abs, tag = 'smem constant byte address 0x4 - core index']
  #allocation1 [shape = 'u32[144,128]{1,0:T(1,128)}', space=vmem, size = 0x12000, scoped, tag = 'internal scratch']
  %s0 = inlined_call_operand.vmem [shape: bf16[128,784], index: 0, kind: input, shape index: {}]
  %s1 = inlined_call_operand.hbm [shape: bf16[784,512], index: 1, kind: input, shape index: {}]
  %s2 = inlined_call_operand.vmem [shape: bf16[1,512], index: 2, kind: input, shape index: {}]
  %s3 = inlined_call_operand.hbm [shape: bf16[512,512], index: 3, kind: input, shape index: {}]
  %s4 = inlined_call_operand.vmem [shape: bf16[1,512], index: 4, kind: input, shape index: {}]
  %s5 = inlined_call_operand.hbm [shape: bf16[512,512], index: 5, kind: input, shape index: {}]
  %s6 = inlined_call_operand.vmem [shape: bf16[1,512], index: 6, kind: input, shape index: {}]
  %s7 = inlined_call_operand.vmem [shape: bf16[512,128], index: 7, kind: input, shape index: {}]
  %s8 = inlined_call_operand.vmem [shape: f32[1,128], index: 8, kind: input, shape index: {}]
  %s9 = inlined_call_operand.vmem [shape: f32[128,128], index: 9, kind: output, shape index: {}]
  %s10 = sld [smem:[#allocation0]]
  $region58: #{net_forward.1} parent=0
    _
  %s12 = ssub.s32 1, %s10
  %s13 = scalar_select 0, %s12, %s10
  $region1: #{net_forward.1} parent=0
    #allocation2 [shape = 'u8[802816]{0}', space=vmem, size = 0xc4000, scoped, tag = 'input window, operand 1, single buffered']
    #allocation3 [shape = 's32[1]{0}', space=sflag, size = 0x4, scoped, tag = 'scoped memory for net_forward.1']
    #allocation4 [shape = 'u8[524288]{0}', space=vmem, size = 0x80000, scoped, tag = 'input window, operand 3, single buffered']
    #allocation5 [shape = 's32[1]{0}', space=sflag, size = 0x4, scoped, tag = 'scoped memory for net_forward.1']
    #allocation6 [shape = 'u8[524288]{0}', space=vmem, size = 0x80000, scoped, tag = 'input window, operand 5, single buffered']
    %14 = vsyncpa [#allocation3], 0
    %15 = vsyncpa [#allocation5], 0
    // Predicated region
    $region2: #{net_forward.1} parent=1 // pred_check
      _
    $region3: #{net_forward.1} parent=1 // pred_check_branch
      %17 = sbr.rel (0) target = $region5
    $region4: #{net_forward.1} parent=1 // pred_region
      _
    $region5: #{net_forward.1} parent=1 // pred_fallthru
      _
    // Predicated region
    $region6: #{net_forward.1} parent=1 // pred_check
      _
    $region7: #{net_forward.1} parent=1 // pred_check_branch
      %19 = sbr.rel (0) target = $region9
    $region8: #{net_forward.1} parent=1 // pred_region
      %s21 = ssub.s32 25088, 25088
      %22 = vsyncadd [#allocation3], %s21
      %s23 = sshll.u32 [#allocation2], 4
      %s24 = int_to_ptr.vmem [resolvable:$true] %s23
      %29 = dma.hbm_to_vmem [thread:$0]  %s1, 25088, %s24, [#allocation3], 256, 256, 16
    $region9: #{net_forward.1} parent=1 // pred_fallthru
      _
    // Predicated region
    $region10: #{net_forward.1} parent=1 // pred_check
      _
    $region11: #{net_forward.1} parent=1 // pred_check_branch
      %31 = sbr.rel (0) target = $region13
    $region12: #{net_forward.1} parent=1 // pred_region
      _
    $region13: #{net_forward.1} parent=1 // pred_fallthru
      _
    // Predicated region
    $region14: #{net_forward.1} parent=1 // pred_check
      _
    $region15: #{net_forward.1} parent=1 // pred_check_branch
      %33 = sbr.rel (0) target = $region17
    $region16: #{net_forward.1} parent=1 // pred_region
      %s35 = ssub.s32 16384, 16384
      %36 = vsyncadd [#allocation5], %s35
      %s37 = sshll.u32 [#allocation4], 4
      %s38 = int_to_ptr.vmem [resolvable:$true] %s37
      %43 = dma.hbm_to_vmem [thread:$0]  %s3, 16384, %s38, [#allocation5], 256, 256, 16
    $region17: #{net_forward.1} parent=1 // pred_fallthru
      _
    // Predicated region
    $region18: #{net_forward.1} parent=1 // pred_check
      _
    $region19: #{net_forward.1} parent=1 // pred_check_branch
      %45 = sbr.rel (0) target = $region21
    $region20: #{net_forward.1} parent=1 // pred_region
      _
    $region21: #{net_forward.1} parent=1 // pred_fallthru
      _
    // Predicated region
    $region22: #{net_forward.1} parent=1 // pred_check
      _
    $region23: #{net_forward.1} parent=1 // pred_check_branch
      %47 = sbr.rel (0) target = $region25
    $region24: #{net_forward.1} parent=1 // pred_region
      %s49 = ssub.s32 16384, 16384
      %50 = vsyncadd [#allocation5], %s49
      %s51 = sshll.u32 [#allocation6], 4
      %s52 = int_to_ptr.vmem [resolvable:$true] %s51
      %57 = dma.hbm_to_vmem [thread:$0]  %s5, 16384, %s52, [#allocation5], 256, 256, 16
    $region25: #{net_forward.1} parent=1 // pred_fallthru
      _
    // Predicated region
    $region26: #{net_forward.1} parent=1 // pred_check
      _
    $region27: #{net_forward.1} parent=1 // pred_check_branch
      %59 = sbr.rel (0) target = $region29
    $region28: #{net_forward.1} parent=1 // pred_region
      _
    $region29: #{net_forward.1} parent=1 // pred_fallthru
      _
    // Predicated region
    $region30: #{net_forward.1} parent=1 // pred_check
      _
    $region31: #{net_forward.1} parent=1 // pred_check_branch
      %61 = sbr.rel (0) target = $region33
    $region32: #{net_forward.1} parent=1 // pred_region
      _
    $region33: #{net_forward.1} parent=1 // pred_fallthru
      _
    // Predicated region
    $region34: #{net_forward.1} parent=1 // pred_check
      _
    $region35: #{net_forward.1} parent=1 // pred_check_branch
      %63 = sbr.rel (0) target = $region37
    $region36: #{net_forward.1} parent=1 // pred_region
      _
    $region37: #{net_forward.1} parent=1 // pred_fallthru
      _
    // Predicated region
    $region38: #{net_forward.1} parent=1 // pred_check
      _
    $region39: #{net_forward.1} parent=1 // pred_check_branch
      %65 = sbr.rel (0) target = $region41
    $region40: #{net_forward.1} parent=1 // pred_region
      %66 = dma.done [#allocation3], 25088
    $region41: #{net_forward.1} parent=1 // pred_fallthru
      _
    // Predicated region
    $region42: #{net_forward.1} parent=1 // pred_check
      _
    $region43: #{net_forward.1} parent=1 // pred_check_branch
      %68 = sbr.rel (0) target = $region45
    $region44: #{net_forward.1} parent=1 // pred_region
      %69 = dma.done [#allocation5], 16384
    $region45: #{net_forward.1} parent=1 // pred_fallthru
      _
    // Predicated region
    $region46: #{net_forward.1} parent=1 // pred_check
      _
    $region47: #{net_forward.1} parent=1 // pred_check_branch
      %71 = sbr.rel (0) target = $region49
    $region48: #{net_forward.1} parent=1 // pred_region
      %72 = dma.done [#allocation5], 16384
    $region49: #{net_forward.1} parent=1 // pred_fallthru
      _
    %v74 = vld [vmem:[%s0] sm:$0xff]
    %v75 = vld [vmem:[%s0 + $0x8] sm:$0xff]
    %v76 = vld [vmem:[%s0 + $0x10] sm:$0xff]
    %v77 = vld [vmem:[%s0 + $0x18] sm:$0xf]
    %v78 = vld [vmem:[%s0 + $0x1c] sm:$0xff]
    %v79 = vld [vmem:[%s0 + $0x24] sm:$0xff]
    %v80 = vld [vmem:[%s0 + $0x2c] sm:$0xff]
    %v81 = vld [vmem:[%s0 + $0x34] sm:$0xf]
    %v82 = vld [vmem:[%s0 + $0x38] sm:$0xff]
    %v83 = vld [vmem:[%s0 + $0x40] sm:$0xff]
    %v84 = vld [vmem:[%s0 + $0x48] sm:$0xff]
    %v85 = vld [vmem:[%s0 + $0x50] sm:$0xf]
    %v86 = vld [vmem:[%s0 + $0x54] sm:$0xff]
    %v87 = vld [vmem:[%s0 + $0x5c] sm:$0xff]
    %v88 = vld [vmem:[%s0 + $0x64] sm:$0xff]
    %v89 = vld [vmem:[%s0 + $0x6c] sm:$0xf]
    %v90 = vld [vmem:[%s0 + $0x70] sm:$0xff]
    %v91 = vld [vmem:[%s0 + $0x78] sm:$0xff]
    %v92 = vld [vmem:[%s0 + $0x80] sm:$0xff]
    %v93 = vld [vmem:[%s0 + $0x88] sm:$0xf]
    %v94 = vld [vmem:[%s0 + $0x8c] sm:$0xff]
    %v95 = vld [vmem:[%s0 + $0x94] sm:$0xff]
    %v96 = vld [vmem:[%s0 + $0x9c] sm:$0xff]
    %v97 = vld [vmem:[%s0 + $0xa4] sm:$0xf]
    %v98 = vld [vmem:[%s0 + $0xa8] sm:$0xff]
    %v99 = vld [vmem:[%s0 + $0xb0] sm:$0xff]
    %v100 = vld [vmem:[%s0 + $0xb8] sm:$0xff]
    %v101 = vld [vmem:[%s0 + $0xc0] sm:$0xf]
    %v102 = vld [vmem:[%s0 + $0xc4] sm:$0xff]
    %v103 = vld [vmem:[%s0 + $0xcc] sm:$0xff]
    %v104 = vld [vmem:[%s0 + $0xd4] sm:$0xff]
    %v105 = vld [vmem:[%s0 + $0xdc] sm:$0xf]
    %v106 = vld [vmem:[%s0 + $0xe0] sm:$0xff]
    %v107 = vld [vmem:[%s0 + $0xe8] sm:$0xff]
    %v108 = vld [vmem:[%s0 + $0xf0] sm:$0xff]
    %v109 = vld [vmem:[%s0 + $0xf8] sm:$0xf]
    %v110 = vld [vmem:[%s0 + $0xfc] sm:$0xff]
    %v111 = vld [vmem:[%s0 + $0x104] sm:$0xff]
    %v112 = vld [vmem:[%s0 + $0x10c] sm:$0xff]
    %v113 = vld [vmem:[%s0 + $0x114] sm:$0xf]
    %v114 = vld [vmem:[%s0 + $0x118] sm:$0xff]
    %v115 = vld [vmem:[%s0 + $0x120] sm:$0xff]
    %v116 = vld [vmem:[%s0 + $0x128] sm:$0xff]
    %v117 = vld [vmem:[%s0 + $0x130] sm:$0xf]
    %v118 = vld [vmem:[%s0 + $0x134] sm:$0xff]
    %v119 = vld [vmem:[%s0 + $0x13c] sm:$0xff]
    %v120 = vld [vmem:[%s0 + $0x144] sm:$0xff]
    %v121 = vld [vmem:[%s0 + $0x14c] sm:$0xf]
    %v122 = vld [vmem:[%s0 + $0x150] sm:$0xff]
    %v123 = vld [vmem:[%s0 + $0x158] sm:$0xff]
    %v124 = vld [vmem:[%s0 + $0x160] sm:$0xff]
    %v125 = vld [vmem:[%s0 + $0x168] sm:$0xf]
    %v126 = vld [vmem:[%s0 + $0x16c] sm:$0xff]
    %v127 = vld [vmem:[%s0 + $0x174] sm:$0xff]
    %v128 = vld [vmem:[%s0 + $0x17c] sm:$0xff]
    %v129 = vld [vmem:[%s0 + $0x184] sm:$0xf]
    %v130 = vld [vmem:[%s0 + $0x188] sm:$0xff]
    %v131 = vld [vmem:[%s0 + $0x190] sm:$0xff]
    %v132 = vld [vmem:[%s0 + $0x198] sm:$0xff]
    %v133 = vld [vmem:[%s0 + $0x1a0] sm:$0xf]
    %v134 = vld [vmem:[%s0 + $0x1a4] sm:$0xff]
    %v135 = vld [vmem:[%s0 + $0x1ac] sm:$0xff]
    %v136 = vld [vmem:[%s0 + $0x1b4] sm:$0xff]
    %v137 = vld [vmem:[%s0 + $0x1bc] sm:$0xf]
    %v138 = vld [vmem:[#allocation2] sm:$0xff]
    %v139 = vld [vmem:[#allocation2 + $0x8] sm:$0xff]
    %v140 = vld [vmem:[#allocation2 + $0x10] sm:$0xff]
    %v141 = vld [vmem:[#allocation2 + $0x18] sm:$0xff]
    %v142 = vld [vmem:[#allocation2 + $0x20] sm:$0xff]
    %v143 = vld [vmem:[#allocation2 + $0x28] sm:$0xff]
    %v144 = vld [vmem:[#allocation2 + $0x30] sm:$0xff]
    %v145 = vld [vmem:[#allocation2 + $0x38] sm:$0xff]
    %v146 = vld [vmem:[#allocation2 + $0x40] sm:$0xff]
    %v147 = vld [vmem:[#allocation2 + $0x48] sm:$0xff]
    %v148 = vld [vmem:[#allocation2 + $0x50] sm:$0xff]
    %v149 = vld [vmem:[#allocation2 + $0x58] sm:$0xff]
    %v150 = vld [vmem:[#allocation2 + $0x60] sm:$0xff]
    %v151 = vld [vmem:[#allocation2 + $0x68] sm:$0xff]
    %v152 = vld [vmem:[#allocation2 + $0x70] sm:$0xff]
    %v153 = vld [vmem:[#allocation2 + $0x78] sm:$0xff]
    %v154 = vld [vmem:[#allocation2 + $0x80] sm:$0xff]
    %v155 = vld [vmem:[#allocation2 + $0x88] sm:$0xff]
    %v156 = vld [vmem:[#allocation2 + $0x90] sm:$0xff]
    %v157 = vld [vmem:[#allocation2 + $0x98] sm:$0xff]
    %v158 = vld [vmem:[#allocation2 + $0xa0] sm:$0xff]
    %v159 = vld [vmem:[#allocation2 + $0xa8] sm:$0xff]
    %v160 = vld [vmem:[#allocation2 + $0xb0] sm:$0xff]
    %v161 = vld [vmem:[#allocation2 + $0xb8] sm:$0xff]
    %v162 = vld [vmem:[#allocation2 + $0xc0] sm:$0xff]
    %v163 = vld [vmem:[#allocation2 + $0xc8] sm:$0xff]
    %v164 = vld [vmem:[#allocation2 + $0xd0] sm:$0xff]
    %v165 = vld [vmem:[#allocation2 + $0xd8] sm:$0xff]
    %v166 = vld [vmem:[#allocation2 + $0xe0] sm:$0xff]
    %v167 = vld [vmem:[#allocation2 + $0xe8] sm:$0xff]
    %v168 = vld [vmem:[#allocation2 + $0xf0] sm:$0xff]
    %v169 = vld [vmem:[#allocation2 + $0xf8] sm:$0xff]
    %v170 = vld [vmem:[#allocation2 + $0x100] sm:$0xff]
    %v171 = vld [vmem:[#allocation2 + $0x108] sm:$0xff]
    %v172 = vld [vmem:[#allocation2 + $0x110] sm:$0xff]
    %v173 = vld [vmem:[#allocation2 + $0x118] sm:$0xff]
    %v174 = vld [vmem:[#allocation2 + $0x120] sm:$0xff]
    %v175 = vld [vmem:[#allocation2 + $0x128] sm:$0xff]
    %v176 = vld [vmem:[#allocation2 + $0x130] sm:$0xff]
    %v177 = vld [vmem:[#allocation2 + $0x138] sm:$0xff]
    %v178 = vld [vmem:[#allocation2 + $0x140] sm:$0xff]
    %v179 = vld [vmem:[#allocation2 + $0x148] sm:$0xff]
    %v180 = vld [vmem:[#allocation2 + $0x150] sm:$0xff]
    %v181 = vld [vmem:[#allocation2 + $0x158] sm:$0xff]
    %v182 = vld [vmem:[#allocation2 + $0x160] sm:$0xff]
    %v183 = vld [vmem:[#allocation2 + $0x168] sm:$0xff]
    %v184 = vld [vmem:[#allocation2 + $0x170] sm:$0xff]
    %v185 = vld [vmem:[#allocation2 + $0x178] sm:$0xff]
    %v186 = vld [vmem:[#allocation2 + $0x180] sm:$0xff]
    %v187 = vld [vmem:[#allocation2 + $0x188] sm:$0xff]
    %v188 = vld [vmem:[#allocation2 + $0x190] sm:$0xff]
    %v189 = vld [vmem:[#allocation2 + $0x198] sm:$0xff]
    %v190 = vld [vmem:[#allocation2 + $0x1a0] sm:$0xff]
    %v191 = vld [vmem:[#allocation2 + $0x1a8] sm:$0xff]
    %v192 = vld [vmem:[#allocation2 + $0x1b0] sm:$0xff]
    %v193 = vld [vmem:[#allocation2 + $0x1b8] sm:$0xff]
    %v194 = vld [vmem:[#allocation2 + $0x1c0] sm:$0xff]
    %v195 = vld [vmem:[#allocation2 + $0x1c8] sm:$0xff]
    %v196 = vld [vmem:[#allocation2 + $0x1d0] sm:$0xff]
    %v197 = vld [vmem:[#allocation2 + $0x1d8] sm:$0xff]
    %v198 = vld [vmem:[#allocation2 + $0x1e0] sm:$0xff]
    %v199 = vld [vmem:[#allocation2 + $0x1e8] sm:$0xff]
    %v200 = vld [vmem:[#allocation2 + $0x1f0] sm:$0xff]
    %v201 = vld [vmem:[#allocation2 + $0x1f8] sm:$0xff]
    %v202 = vld [vmem:[#allocation2 + $0x200] sm:$0xff]
    %v203 = vld [vmem:[#allocation2 + $0x208] sm:$0xff]
    %v204 = vld [vmem:[#allocation2 + $0x210] sm:$0xff]
    %v205 = vld [vmem:[#allocation2 + $0x218] sm:$0xff]
    %v206 = vld [vmem:[#allocation2 + $0x220] sm:$0xff]
    %v207 = vld [vmem:[#allocation2 + $0x228] sm:$0xff]
    %v208 = vld [vmem:[#allocation2 + $0x230] sm:$0xff]
    %v209 = vld [vmem:[#allocation2 + $0x238] sm:$0xff]
    %v210 = vld [vmem:[#allocation2 + $0x240] sm:$0xff]
    %v211 = vld [vmem:[#allocation2 + $0x248] sm:$0xff]
    %v212 = vld [vmem:[#allocation2 + $0x250] sm:$0xff]
    %v213 = vld [vmem:[#allocation2 + $0x258] sm:$0xff]
    %v214 = vld [vmem:[#allocation2 + $0x260] sm:$0xff]
    %v215 = vld [vmem:[#allocation2 + $0x268] sm:$0xff]
    %v216 = vld [vmem:[#allocation2 + $0x270] sm:$0xff]
    %v217 = vld [vmem:[#allocation2 + $0x278] sm:$0xff]
    %v218 = vld [vmem:[#allocation2 + $0x280] sm:$0xff]
    %v219 = vld [vmem:[#allocation2 + $0x288] sm:$0xff]
    %v220 = vld [vmem:[#allocation2 + $0x290] sm:$0xff]
    %v221 = vld [vmem:[#allocation2 + $0x298] sm:$0xff]
    %v222 = vld [vmem:[#allocation2 + $0x2a0] sm:$0xff]
    %v223 = vld [vmem:[#allocation2 + $0x2a8] sm:$0xff]
    %v224 = vld [vmem:[#allocation2 + $0x2b0] sm:$0xff]
    %v225 = vld [vmem:[#allocation2 + $0x2b8] sm:$0xff]
    %v226 = vld [vmem:[#allocation2 + $0x2c0] sm:$0xff]
    %v227 = vld [vmem:[#allocation2 + $0x2c8] sm:$0xff]
    %v228 = vld [vmem:[#allocation2 + $0x2d0] sm:$0xff]
    %v229 = vld [vmem:[#allocation2 + $0x2d8] sm:$0xff]
    %v230 = vld [vmem:[#allocation2 + $0x2e0] sm:$0xff]
    %v231 = vld [vmem:[#allocation2 + $0x2e8] sm:$0xff]
    %v232 = vld [vmem:[#allocation2 + $0x2f0] sm:$0xff]
    %v233 = vld [vmem:[#allocation2 + $0x2f8] sm:$0xff]
    %v234 = vld [vmem:[#allocation2 + $0x300] sm:$0xff]
    %v235 = vld [vmem:[#allocation2 + $0x308] sm:$0xff]
    %v236 = vld [vmem:[#allocation2 + $0x310] sm:$0xff]
    %v237 = vld [vmem:[#allocation2 + $0x318] sm:$0xff]
    %v238 = vld [vmem:[#allocation2 + $0x320] sm:$0xff]
    %v239 = vld [vmem:[#allocation2 + $0x328] sm:$0xff]
    %v240 = vld [vmem:[#allocation2 + $0x330] sm:$0xff]
    %v241 = vld [vmem:[#allocation2 + $0x338] sm:$0xff]
    %v242 = vld [vmem:[#allocation2 + $0x340] sm:$0xff]
    %v243 = vld [vmem:[#allocation2 + $0x348] sm:$0xff]
    %v244 = vld [vmem:[#allocation2 + $0x350] sm:$0xff]
    %v245 = vld [vmem:[#allocation2 + $0x358] sm:$0xff]
    %v246 = vld [vmem:[#allocation2 + $0x360] sm:$0xff]
    %v247 = vld [vmem:[#allocation2 + $0x368] sm:$0xff]
    %v248 = vld [vmem:[#allocation2 + $0x370] sm:$0xff]
    %v249 = vld [vmem:[#allocation2 + $0x378] sm:$0xff]
    %v250 = vld [vmem:[#allocation2 + $0x380] sm:$0xff]
    %v251 = vld [vmem:[#allocation2 + $0x388] sm:$0xff]
    %v252 = vld [vmem:[#allocation2 + $0x390] sm:$0xff]
    %v253 = vld [vmem:[#allocation2 + $0x398] sm:$0xff]
    %v254 = vld [vmem:[#allocation2 + $0x3a0] sm:$0xff]
    %v255 = vld [vmem:[#allocation2 + $0x3a8] sm:$0xff]
    %v256 = vld [vmem:[#allocation2 + $0x3b0] sm:$0xff]
    %v257 = vld [vmem:[#allocation2 + $0x3b8] sm:$0xff]
    %v258 = vld [vmem:[#allocation2 + $0x3c0] sm:$0xff]
    %v259 = vld [vmem:[#allocation2 + $0x3c8] sm:$0xff]
    %v260 = vld [vmem:[#allocation2 + $0x3d0] sm:$0xff]
    %v261 = vld [vmem:[#allocation2 + $0x3d8] sm:$0xff]
    %v262 = vld [vmem:[#allocation2 + $0x3e0] sm:$0xff]
    %v263 = vld [vmem:[#allocation2 + $0x3e8] sm:$0xff]
    %v264 = vld [vmem:[#allocation2 + $0x3f0] sm:$0xff]
    %v265 = vld [vmem:[#allocation2 + $0x3f8] sm:$0xff]
    %v266 = vld [vmem:[#allocation2 + $0x400] sm:$0xff]
    %v267 = vld [vmem:[#allocation2 + $0x408] sm:$0xff]
    %v268 = vld [vmem:[#allocation2 + $0x410] sm:$0xff]
    %v269 = vld [vmem:[#allocation2 + $0x418] sm:$0xff]
    %v270 = vld [vmem:[#allocation2 + $0x420] sm:$0xff]
    %v271 = vld [vmem:[#allocation2 + $0x428] sm:$0xff]
    %v272 = vld [vmem:[#allocation2 + $0x430] sm:$0xff]
    %v273 = vld [vmem:[#allocation2 + $0x438] sm:$0xff]
    %v274 = vld [vmem:[#allocation2 + $0x440] sm:$0xff]
    %v275 = vld [vmem:[#allocation2 + $0x448] sm:$0xff]
    %v276 = vld [vmem:[#allocation2 + $0x450] sm:$0xff]
    %v277 = vld [vmem:[#allocation2 + $0x458] sm:$0xff]
    %v278 = vld [vmem:[#allocation2 + $0x460] sm:$0xff]
    %v279 = vld [vmem:[#allocation2 + $0x468] sm:$0xff]
    %v280 = vld [vmem:[#allocation2 + $0x470] sm:$0xff]
    %v281 = vld [vmem:[#allocation2 + $0x478] sm:$0xff]
    %v282 = vld [vmem:[#allocation2 + $0x480] sm:$0xff]
    %v283 = vld [vmem:[#allocation2 + $0x488] sm:$0xff]
    %v284 = vld [vmem:[#allocation2 + $0x490] sm:$0xff]
    %v285 = vld [vmem:[#allocation2 + $0x498] sm:$0xff]
    %v286 = vld [vmem:[#allocation2 + $0x4a0] sm:$0xff]
    %v287 = vld [vmem:[#allocation2 + $0x4a8] sm:$0xff]
    %v288 = vld [vmem:[#allocation2 + $0x4b0] sm:$0xff]
    %v289 = vld [vmem:[#allocation2 + $0x4b8] sm:$0xff]
    %v290 = vld [vmem:[#allocation2 + $0x4c0] sm:$0xff]
    %v291 = vld [vmem:[#allocation2 + $0x4c8] sm:$0xff]
    %v292 = vld [vmem:[#allocation2 + $0x4d0] sm:$0xff]
    %v293 = vld [vmem:[#allocation2 + $0x4d8] sm:$0xff]
    %v294 = vld [vmem:[#allocation2 + $0x4e0] sm:$0xff]
    %v295 = vld [vmem:[#allocation2 + $0x4e8] sm:$0xff]
    %v296 = vld [vmem:[#allocation2 + $0x4f0] sm:$0xff]
    %v297 = vld [vmem:[#allocation2 + $0x4f8] sm:$0xff]
    %v298 = vld [vmem:[#allocation2 + $0x500] sm:$0xff]
    %v299 = vld [vmem:[#allocation2 + $0x508] sm:$0xff]
    %v300 = vld [vmem:[#allocation2 + $0x510] sm:$0xff]
    %v301 = vld [vmem:[#allocation2 + $0x518] sm:$0xff]
    %v302 = vld [vmem:[#allocation2 + $0x520] sm:$0xff]
    %v303 = vld [vmem:[#allocation2 + $0x528] sm:$0xff]
    %v304 = vld [vmem:[#allocation2 + $0x530] sm:$0xff]
    %v305 = vld [vmem:[#allocation2 + $0x538] sm:$0xff]
    %v306 = vld [vmem:[#allocation2 + $0x540] sm:$0xff]
    %v307 = vld [vmem:[#allocation2 + $0x548] sm:$0xff]
    %v308 = vld [vmem:[#allocation2 + $0x550] sm:$0xff]
    %v309 = vld [vmem:[#allocation2 + $0x558] sm:$0xff]
    %v310 = vld [vmem:[#allocation2 + $0x560] sm:$0xff]
    %v311 = vld [vmem:[#allocation2 + $0x568] sm:$0xff]
    %v312 = vld [vmem:[#allocation2 + $0x570] sm:$0xff]
    %v313 = vld [vmem:[#allocation2 + $0x578] sm:$0xff]
    %v314 = vld [vmem:[#allocation2 + $0x580] sm:$0xff]
    %v315 = vld [vmem:[#allocation2 + $0x588] sm:$0xff]
    %v316 = vld [vmem:[#allocation2 + $0x590] sm:$0xff]
    %v317 = vld [vmem:[#allocation2 + $0x598] sm:$0xff]
    %v318 = vld [vmem:[#allocation2 + $0x5a0] sm:$0xff]
    %v319 = vld [vmem:[#allocation2 + $0x5a8] sm:$0xff]
    %v320 = vld [vmem:[#allocation2 + $0x5b0] sm:$0xff]
    %v321 = vld [vmem:[#allocation2 + $0x5b8] sm:$0xff]
    %v322 = vld [vmem:[#allocation2 + $0x5c0] sm:$0xff]
    %v323 = vld [vmem:[#allocation2 + $0x5c8] sm:$0xff]
    %v324 = vld [vmem:[#allocation2 + $0x5d0] sm:$0xff]
    %v325 = vld [vmem:[#allocation2 + $0x5d8] sm:$0xff]
    %v326 = vld [vmem:[#allocation2 + $0x5e0] sm:$0xff]
    %v327 = vld [vmem:[#allocation2 + $0x5e8] sm:$0xff]
    %v328 = vld [vmem:[#allocation2 + $0x5f0] sm:$0xff]
    %v329 = vld [vmem:[#allocation2 + $0x5f8] sm:$0xff]
    %v330 = vld [vmem:[#allocation2 + $0x600] sm:$0xff]
    %v331 = vld [vmem:[#allocation2 + $0x608] sm:$0xff]
    %v332 = vld [vmem:[#allocation2 + $0x610] sm:$0xff]
    %v333 = vld [vmem:[#allocation2 + $0x618] sm:$0xff]
    %v398 = vunpack.c.l.b16 %v74
    %v399 = vunpack.c.h.b16 %v74
    %v400 = vunpack.c.l.b16 %v75
    %v401 = vunpack.c.h.b16 %v75
    %v402 = vunpack.c.l.b16 %v76
    %v403 = vunpack.c.h.b16 %v76
    %v404 = vunpack.c.l.b16 %v77
    %v405 = vunpack.c.l.b16 %v78
    %v406 = vunpack.c.h.b16 %v78
    %v407 = vunpack.c.l.b16 %v79
    %v408 = vunpack.c.h.b16 %v79
    %v409 = vunpack.c.l.b16 %v80
    %v410 = vunpack.c.h.b16 %v80
    %v411 = vunpack.c.l.b16 %v81
    %v412 = vunpack.c.l.b16 %v82
    %v413 = vunpack.c.h.b16 %v82
    %v414 = vunpack.c.l.b16 %v83
    %v415 = vunpack.c.h.b16 %v83
    %v416 = vunpack.c.l.b16 %v84
    %v417 = vunpack.c.h.b16 %v84
    %v418 = vunpack.c.l.b16 %v85
    %v419 = vunpack.c.l.b16 %v86
    %v420 = vunpack.c.h.b16 %v86
    %v421 = vunpack.c.l.b16 %v87
    %v422 = vunpack.c.h.b16 %v87
    %v423 = vunpack.c.l.b16 %v88
    %v424 = vunpack.c.h.b16 %v88
    %v425 = vunpack.c.l.b16 %v89
    %v426 = vunpack.c.l.b16 %v90
    %v427 = vunpack.c.h.b16 %v90
    %v428 = vunpack.c.l.b16 %v91
    %v429 = vunpack.c.h.b16 %v91
    %v430 = vunpack.c.l.b16 %v92
    %v431 = vunpack.c.h.b16 %v92
    %v432 = vunpack.c.l.b16 %v93
    %v433 = vunpack.c.l.b16 %v94
    %v434 = vunpack.c.h.b16 %v94
    %v435 = vunpack.c.l.b16 %v95
    %v436 = vunpack.c.h.b16 %v95
    %v437 = vunpack.c.l.b16 %v96
    %v438 = vunpack.c.h.b16 %v96
    %v439 = vunpack.c.l.b16 %v97
    %v440 = vunpack.c.l.b16 %v98
    %v441 = vunpack.c.h.b16 %v98
    %v442 = vunpack.c.l.b16 %v99
    %v443 = vunpack.c.h.b16 %v99
    %v444 = vunpack.c.l.b16 %v100
    %v445 = vunpack.c.h.b16 %v100
    %v446 = vunpack.c.l.b16 %v101
    %v447 = vunpack.c.l.b16 %v102
    %v448 = vunpack.c.h.b16 %v102
    %v449 = vunpack.c.l.b16 %v103
    %v450 = vunpack.c.h.b16 %v103
    %v451 = vunpack.c.l.b16 %v104
    %v452 = vunpack.c.h.b16 %v104
    %v453 = vunpack.c.l.b16 %v105
    %v454 = vunpack.c.l.b16 %v106
    %v455 = vunpack.c.h.b16 %v106
    %v456 = vunpack.c.l.b16 %v107
    %v457 = vunpack.c.h.b16 %v107
    %v458 = vunpack.c.l.b16 %v108
    %v459 = vunpack.c.h.b16 %v108
    %v460 = vunpack.c.l.b16 %v109
    %v461 = vunpack.c.l.b16 %v110
    %v462 = vunpack.c.h.b16 %v110
    %v463 = vunpack.c.l.b16 %v111
    %v464 = vunpack.c.h.b16 %v111
    %v465 = vunpack.c.l.b16 %v112
    %v466 = vunpack.c.h.b16 %v112
    %v467 = vunpack.c.l.b16 %v113
    %v468 = vunpack.c.l.b16 %v114
    %v469 = vunpack.c.h.b16 %v114
    %v470 = vunpack.c.l.b16 %v115
    %v471 = vunpack.c.h.b16 %v115
    %v472 = vunpack.c.l.b16 %v116
    %v473 = vunpack.c.h.b16 %v116
    %v474 = vunpack.c.l.b16 %v117
    %v475 = vunpack.c.l.b16 %v118
    %v476 = vunpack.c.h.b16 %v118
    %v477 = vunpack.c.l.b16 %v119
    %v478 = vunpack.c.h.b16 %v119
    %v479 = vunpack.c.l.b16 %v120
    %v480 = vunpack.c.h.b16 %v120
    %v481 = vunpack.c.l.b16 %v121
    %v482 = vunpack.c.l.b16 %v122
    %v483 = vunpack.c.h.b16 %v122
    %v484 = vunpack.c.l.b16 %v123
    %v485 = vunpack.c.h.b16 %v123
    %v486 = vunpack.c.l.b16 %v124
    %v487 = vunpack.c.h.b16 %v124
    %v488 = vunpack.c.l.b16 %v125
    %v489 = vunpack.c.l.b16 %v126
    %v490 = vunpack.c.h.b16 %v126
    %v491 = vunpack.c.l.b16 %v127
    %v492 = vunpack.c.h.b16 %v127
    %v493 = vunpack.c.l.b16 %v128
    %v494 = vunpack.c.h.b16 %v128
    %v495 = vunpack.c.l.b16 %v129
    %v496 = vunpack.c.l.b16 %v130
    %v497 = vunpack.c.h.b16 %v130
    %v498 = vunpack.c.l.b16 %v131
    %v499 = vunpack.c.h.b16 %v131
    %v500 = vunpack.c.l.b16 %v132
    %v501 = vunpack.c.h.b16 %v132
    %v502 = vunpack.c.l.b16 %v133
    %v503 = vunpack.c.l.b16 %v134
    %v504 = vunpack.c.h.b16 %v134
    %v505 = vunpack.c.l.b16 %v135
    %v506 = vunpack.c.h.b16 %v135
    %v507 = vunpack.c.l.b16 %v136
    %v508 = vunpack.c.h.b16 %v136
    %v509 = vunpack.c.l.b16 %v137
    %v510 = vpack.c.b16 %v405, %v398
    %v511 = vpack.c.b16 %v406, %v399
    %v512 = vpack.c.b16 %v407, %v400
    %v513 = vpack.c.b16 %v408, %v401
    %v514 = vpack.c.b16 %v409, %v402
    %v515 = vpack.c.b16 %v410, %v403
    %v516 = vpack.c.b16 %v411, %v404
    %v517 = vpack.c.b16 %v419, %v412
    %v518 = vpack.c.b16 %v420, %v413
    %v519 = vpack.c.b16 %v421, %v414
    %v520 = vpack.c.b16 %v422, %v415
    %v521 = vpack.c.b16 %v423, %v416
    %v522 = vpack.c.b16 %v424, %v417
    %v523 = vpack.c.b16 %v425, %v418
    %v524 = vpack.c.b16 %v433, %v426
    %v525 = vpack.c.b16 %v434, %v427
    %v526 = vpack.c.b16 %v435, %v428
    %v527 = vpack.c.b16 %v436, %v429
    %v528 = vpack.c.b16 %v437, %v430
    %v529 = vpack.c.b16 %v438, %v431
    %v530 = vpack.c.b16 %v439, %v432
    %v531 = vpack.c.b16 %v447, %v440
    %v532 = vpack.c.b16 %v448, %v441
    %v533 = vpack.c.b16 %v449, %v442
    %v534 = vpack.c.b16 %v450, %v443
    %v535 = vpack.c.b16 %v451, %v444
    %v536 = vpack.c.b16 %v452, %v445
    %v537 = vpack.c.b16 %v453, %v446
    %v538 = vpack.c.b16 %v461, %v454
    %v539 = vpack.c.b16 %v462, %v455
    %v540 = vpack.c.b16 %v463, %v456
    %v541 = vpack.c.b16 %v464, %v457
    %v542 = vpack.c.b16 %v465, %v458
    %v543 = vpack.c.b16 %v466, %v459
    %v544 = vpack.c.b16 %v467, %v460
    %v545 = vpack.c.b16 %v475, %v468
    %v546 = vpack.c.b16 %v476, %v469
    %v547 = vpack.c.b16 %v477, %v470
    %v548 = vpack.c.b16 %v478, %v471
    %v549 = vpack.c.b16 %v479, %v472
    %v550 = vpack.c.b16 %v480, %v473
    %v551 = vpack.c.b16 %v481, %v474
    %v552 = vpack.c.b16 %v489, %v482
    %v553 = vpack.c.b16 %v490, %v483
    %v554 = vpack.c.b16 %v491, %v484
    %v555 = vpack.c.b16 %v492, %v485
    %v556 = vpack.c.b16 %v493, %v486
    %v557 = vpack.c.b16 %v494, %v487
    %v558 = vpack.c.b16 %v495, %v488
    %v559 = vpack.c.b16 %v503, %v496
    %v560 = vpack.c.b16 %v504, %v497
    %v561 = vpack.c.b16 %v505, %v498
    %v562 = vpack.c.b16 %v506, %v499
    %v563 = vpack.c.b16 %v507, %v500
    %v564 = vpack.c.b16 %v508, %v501
    %v565 = vpack.c.b16 %v509, %v502
    %v810 = vunpack.c.l.b16 %v138
    %v811 = vunpack.c.h.b16 %v138
    %v812 = vunpack.c.l.b16 %v139
    %v813 = vunpack.c.h.b16 %v139
    %v814 = vunpack.c.l.b16 %v140
    %v815 = vunpack.c.h.b16 %v140
    %v816 = vunpack.c.l.b16 %v141
    %v817 = vunpack.c.h.b16 %v141
    %v818 = vunpack.c.l.b16 %v142
    %v819 = vunpack.c.h.b16 %v142
    %v820 = vunpack.c.l.b16 %v143
    %v821 = vunpack.c.h.b16 %v143
    %v822 = vunpack.c.l.b16 %v144
    %v823 = vunpack.c.h.b16 %v144
    %v824 = vunpack.c.l.b16 %v145
    %v825 = vunpack.c.h.b16 %v145
    %v826 = vunpack.c.l.b16 %v146
    %v827 = vunpack.c.h.b16 %v146
    %v828 = vunpack.c.l.b16 %v147
    %v829 = vunpack.c.h.b16 %v147
    %v830 = vunpack.c.l.b16 %v148
    %v831 = vunpack.c.h.b16 %v148
    %v832 = vunpack.c.l.b16 %v149
    %v833 = vunpack.c.h.b16 %v149
    %v834 = vunpack.c.l.b16 %v150
    %v835 = vunpack.c.h.b16 %v150
    %v836 = vunpack.c.l.b16 %v151
    %v837 = vunpack.c.h.b16 %v151
    %v838 = vunpack.c.l.b16 %v152
    %v839 = vunpack.c.h.b16 %v152
    %v840 = vunpack.c.l.b16 %v153
    %v841 = vunpack.c.h.b16 %v153
    %v842 = vunpack.c.l.b16 %v154
    %v843 = vunpack.c.h.b16 %v154
    %v844 = vunpack.c.l.b16 %v155
    %v845 = vunpack.c.h.b16 %v155
    %v846 = vunpack.c.l.b16 %v156
    %v847 = vunpack.c.h.b16 %v156
    %v848 = vunpack.c.l.b16 %v157
    %v849 = vunpack.c.h.b16 %v157
    %v850 = vunpack.c.l.b16 %v158
    %v851 = vunpack.c.h.b16 %v158
    %v852 = vunpack.c.l.b16 %v159
    %v853 = vunpack.c.h.b16 %v159
    %v854 = vunpack.c.l.b16 %v160
    %v855 = vunpack.c.h.b16 %v160
    %v856 = vunpack.c.l.b16 %v161
    %v857 = vunpack.c.h.b16 %v161
    %v858 = vunpack.c.l.b16 %v162
    %v859 = vunpack.c.h.b16 %v162
    %v860 = vunpack.c.l.b16 %v163
    %v861 = vunpack.c.h.b16 %v163
    %v862 = vunpack.c.l.b16 %v164
    %v863 = vunpack.c.h.b16 %v164
    %v864 = vunpack.c.l.b16 %v165
    %v865 = vunpack.c.h.b16 %v165
    %v866 = vunpack.c.l.b16 %v166
    %v867 = vunpack.c.h.b16 %v166
    %v868 = vunpack.c.l.b16 %v167
    %v869 = vunpack.c.h.b16 %v167
    %v870 = vunpack.c.l.b16 %v168
    %v871 = vunpack.c.h.b16 %v168
    %v872 = vunpack.c.l.b16 %v169
    %v873 = vunpack.c.h.b16 %v169
    %v874 = vunpack.c.l.b16 %v170
    %v875 = vunpack.c.h.b16 %v170
    %v876 = vunpack.c.l.b16 %v171
    %v877 = vunpack.c.h.b16 %v171
    %v878 = vunpack.c.l.b16 %v172
    %v879 = vunpack.c.h.b16 %v172
    %v880 = vunpack.c.l.b16 %v173
    %v881 = vunpack.c.h.b16 %v173
    %v882 = vunpack.c.l.b16 %v174
    %v883 = vunpack.c.h.b16 %v174
    %v884 = vunpack.c.l.b16 %v175
    %v885 = vunpack.c.h.b16 %v175
    %v886 = vunpack.c.l.b16 %v176
    %v887 = vunpack.c.h.b16 %v176
    %v888 = vunpack.c.l.b16 %v177
    %v889 = vunpack.c.h.b16 %v177
    %v890 = vunpack.c.l.b16 %v178
    %v891 = vunpack.c.h.b16 %v178
    %v892 = vunpack.c.l.b16 %v179
    %v893 = vunpack.c.h.b16 %v179
    %v894 = vunpack.c.l.b16 %v180
    %v895 = vunpack.c.h.b16 %v180
    %v896 = vunpack.c.l.b16 %v181
    %v897 = vunpack.c.h.b16 %v181
    %v898 = vunpack.c.l.b16 %v182
    %v899 = vunpack.c.h.b16 %v182
    %v900 = vunpack.c.l.b16 %v183
    %v901 = vunpack.c.h.b16 %v183
    %v902 = vunpack.c.l.b16 %v184
    %v903 = vunpack.c.h.b16 %v184
    %v904 = vunpack.c.l.b16 %v185
    %v905 = vunpack.c.h.b16 %v185
    %v906 = vunpack.c.l.b16 %v186
    %v907 = vunpack.c.h.b16 %v186
    %v908 = vunpack.c.l.b16 %v187
    %v909 = vunpack.c.h.b16 %v187
    %v910 = vunpack.c.l.b16 %v188
    %v911 = vunpack.c.h.b16 %v188
    %v912 = vunpack.c.l.b16 %v189
    %v913 = vunpack.c.h.b16 %v189
    %v914 = vunpack.c.l.b16 %v190
    %v915 = vunpack.c.h.b16 %v190
    %v916 = vunpack.c.l.b16 %v191
    %v917 = vunpack.c.h.b16 %v191
    %v918 = vunpack.c.l.b16 %v192
    %v919 = vunpack.c.h.b16 %v192
    %v920 = vunpack.c.l.b16 %v193
    %v921 = vunpack.c.h.b16 %v193
    %v922 = vunpack.c.l.b16 %v194
    %v923 = vunpack.c.h.b16 %v194
    %v924 = vunpack.c.l.b16 %v195
    %v925 = vunpack.c.h.b16 %v195
    %v926 = vunpack.c.l.b16 %v196
    %v927 = vunpack.c.h.b16 %v196
    %v928 = vunpack.c.l.b16 %v197
    %v929 = vunpack.c.h.b16 %v197
    %v930 = vunpack.c.l.b16 %v198
    %v931 = vunpack.c.h.b16 %v198
    %v932 = vunpack.c.l.b16 %v199
    %v933 = vunpack.c.h.b16 %v199
    %v934 = vunpack.c.l.b16 %v200
    %v935 = vunpack.c.h.b16 %v200
    %v936 = vunpack.c.l.b16 %v201
    %v937 = vunpack.c.h.b16 %v201
    %v938 = vunpack.c.l.b16 %v202
    %v939 = vunpack.c.h.b16 %v202
    %v940 = vunpack.c.l.b16 %v203
    %v941 = vunpack.c.h.b16 %v203
    %v942 = vunpack.c.l.b16 %v204
    %v943 = vunpack.c.h.b16 %v204
    %v944 = vunpack.c.l.b16 %v205
    %v945 = vunpack.c.h.b16 %v205
    %v946 = vunpack.c.l.b16 %v206
    %v947 = vunpack.c.h.b16 %v206
    %v948 = vunpack.c.l.b16 %v207
    %v949 = vunpack.c.h.b16 %v207
    %v950 = vunpack.c.l.b16 %v208
    %v951 = vunpack.c.h.b16 %v208
    %v952 = vunpack.c.l.b16 %v209
    %v953 = vunpack.c.h.b16 %v209
    %v954 = vunpack.c.l.b16 %v210
    %v955 = vunpack.c.h.b16 %v210
    %v956 = vunpack.c.l.b16 %v211
    %v957 = vunpack.c.h.b16 %v211
    %v958 = vunpack.c.l.b16 %v212
    %v959 = vunpack.c.h.b16 %v212
    %v960 = vunpack.c.l.b16 %v213
    %v961 = vunpack.c.h.b16 %v213
    %v962 = vunpack.c.l.b16 %v214
    %v963 = vunpack.c.h.b16 %v214
    %v964 = vunpack.c.l.b16 %v215
    %v965 = vunpack.c.h.b16 %v215
    %v966 = vunpack.c.l.b16 %v216
    %v967 = vunpack.c.h.b16 %v216
    %v968 = vunpack.c.l.b16 %v217
    %v969 = vunpack.c.h.b16 %v217
    %v970 = vunpack.c.l.b16 %v218
    %v971 = vunpack.c.h.b16 %v218
    %v972 = vunpack.c.l.b16 %v219
    %v973 = vunpack.c.h.b16 %v219
    %v974 = vunpack.c.l.b16 %v220
    %v975 = vunpack.c.h.b16 %v220
    %v976 = vunpack.c.l.b16 %v221
    %v977 = vunpack.c.h.b16 %v221
    %v978 = vunpack.c.l.b16 %v222
    %v979 = vunpack.c.h.b16 %v222
    %v980 = vunpack.c.l.b16 %v223
    %v981 = vunpack.c.h.b16 %v223
    %v982 = vunpack.c.l.b16 %v224
    %v983 = vunpack.c.h.b16 %v224
    %v984 = vunpack.c.l.b16 %v225
    %v985 = vunpack.c.h.b16 %v225
    %v986 = vunpack.c.l.b16 %v226
    %v987 = vunpack.c.h.b16 %v226
    %v988 = vunpack.c.l.b16 %v227
    %v989 = vunpack.c.h.b16 %v227
    %v990 = vunpack.c.l.b16 %v228
    %v991 = vunpack.c.h.b16 %v228
    %v992 = vunpack.c.l.b16 %v229
    %v993 = vunpack.c.h.b16 %v229
    %v994 = vunpack.c.l.b16 %v230
    %v995 = vunpack.c.h.b16 %v230
    %v996 = vunpack.c.l.b16 %v231
    %v997 = vunpack.c.h.b16 %v231
    %v998 = vunpack.c.l.b16 %v232
    %v999 = vunpack.c.h.b16 %v232
    %v1000 = vunpack.c.l.b16 %v233
    %v1001 = vunpack.c.h.b16 %v233
    %v1002 = vunpack.c.l.b16 %v234
    %v1003 = vunpack.c.h.b16 %v234
    %v1004 = vunpack.c.l.b16 %v235
    %v1005 = vunpack.c.h.b16 %v235
    %v1006 = vunpack.c.l.b16 %v236
    %v1007 = vunpack.c.h.b16 %v236
    %v1008 = vunpack.c.l.b16 %v237
    %v1009 = vunpack.c.h.b16 %v237
    %v1010 = vunpack.c.l.b16 %v238
    %v1011 = vunpack.c.h.b16 %v238
    %v1012 = vunpack.c.l.b16 %v239
    %v1013 = vunpack.c.h.b16 %v239
    %v1014 = vunpack.c.l.b16 %v240
    %v1015 = vunpack.c.h.b16 %v240
    %v1016 = vunpack.c.l.b16 %v241
    %v1017 = vunpack.c.h.b16 %v241
    %v1018 = vunpack.c.l.b16 %v242
    %v1019 = vunpack.c.h.b16 %v242
    %v1020 = vunpack.c.l.b16 %v243
    %v1021 = vunpack.c.h.b16 %v243
    %v1022 = vunpack.c.l.b16 %v244
    %v1023 = vunpack.c.h.b16 %v244
    %v1024 = vunpack.c.l.b16 %v245
    %v1025 = vunpack.c.h.b16 %v245
    %v1026 = vunpack.c.l.b16 %v246
    %v1027 = vunpack.c.h.b16 %v246
    %v1028 = vunpack.c.l.b16 %v247
    %v1029 = vunpack.c.h.b16 %v247
    %v1030 = vunpack.c.l.b16 %v248
    %v1031 = vunpack.c.h.b16 %v248
    %v1032 = vunpack.c.l.b16 %v249
    %v1033 = vunpack.c.h.b16 %v249
    %v1034 = vunpack.c.l.b16 %v250
    %v1035 = vunpack.c.h.b16 %v250
    %v1036 = vunpack.c.l.b16 %v251
    %v1037 = vunpack.c.h.b16 %v251
    %v1038 = vunpack.c.l.b16 %v252
    %v1039 = vunpack.c.h.b16 %v252
    %v1040 = vunpack.c.l.b16 %v253
    %v1041 = vunpack.c.h.b16 %v253
    %v1042 = vunpack.c.l.b16 %v254
    %v1043 = vunpack.c.h.b16 %v254
    %v1044 = vunpack.c.l.b16 %v255
    %v1045 = vunpack.c.h.b16 %v255
    %v1046 = vunpack.c.l.b16 %v256
    %v1047 = vunpack.c.h.b16 %v256
    %v1048 = vunpack.c.l.b16 %v257
    %v1049 = vunpack.c.h.b16 %v257
    %v1050 = vunpack.c.l.b16 %v258
    %v1051 = vunpack.c.h.b16 %v258
    %v1052 = vunpack.c.l.b16 %v259
    %v1053 = vunpack.c.h.b16 %v259
    %v1054 = vunpack.c.l.b16 %v260
    %v1055 = vunpack.c.h.b16 %v260
    %v1056 = vunpack.c.l.b16 %v261
    %v1057 = vunpack.c.h.b16 %v261
    %v1058 = vunpack.c.l.b16 %v262
    %v1059 = vunpack.c.h.b16 %v262
    %v1060 = vunpack.c.l.b16 %v263
    %v1061 = vunpack.c.h.b16 %v263
    %v1062 = vunpack.c.l.b16 %v264
    %v1063 = vunpack.c.h.b16 %v264
    %v1064 = vunpack.c.l.b16 %v265
    %v1065 = vunpack.c.h.b16 %v265
    %v1066 = vunpack.c.l.b16 %v266
    %v1067 = vunpack.c.h.b16 %v266
    %v1068 = vunpack.c.l.b16 %v267
    %v1069 = vunpack.c.h.b16 %v267
    %v1070 = vunpack.c.l.b16 %v268
    %v1071 = vunpack.c.h.b16 %v268
    %v1072 = vunpack.c.l.b16 %v269
    %v1073 = vunpack.c.h.b16 %v269
    %v1074 = vunpack.c.l.b16 %v270
    %v1075 = vunpack.c.h.b16 %v270
    %v1076 = vunpack.c.l.b16 %v271
    %v1077 = vunpack.c.h.b16 %v271
    %v1078 = vunpack.c.l.b16 %v272
    %v1079 = vunpack.c.h.b16 %v272
    %v1080 = vunpack.c.l.b16 %v273
    %v1081 = vunpack.c.h.b16 %v273
    %v1082 = vunpack.c.l.b16 %v274
    %v1083 = vunpack.c.h.b16 %v274
    %v1084 = vunpack.c.l.b16 %v275
    %v1085 = vunpack.c.h.b16 %v275
    %v1086 = vunpack.c.l.b16 %v276
    %v1087 = vunpack.c.h.b16 %v276
    %v1088 = vunpack.c.l.b16 %v277
    %v1089 = vunpack.c.h.b16 %v277
    %v1090 = vunpack.c.l.b16 %v278
    %v1091 = vunpack.c.h.b16 %v278
    %v1092 = vunpack.c.l.b16 %v279
    %v1093 = vunpack.c.h.b16 %v279
    %v1094 = vunpack.c.l.b16 %v280
    %v1095 = vunpack.c.h.b16 %v280
    %v1096 = vunpack.c.l.b16 %v281
    %v1097 = vunpack.c.h.b16 %v281
    %v1098 = vunpack.c.l.b16 %v282
    %v1099 = vunpack.c.h.b16 %v282
    %v1100 = vunpack.c.l.b16 %v283
    %v1101 = vunpack.c.h.b16 %v283
    %v1102 = vunpack.c.l.b16 %v284
    %v1103 = vunpack.c.h.b16 %v284
    %v1104 = vunpack.c.l.b16 %v285
    %v1105 = vunpack.c.h.b16 %v285
    %v1106 = vunpack.c.l.b16 %v286
    %v1107 = vunpack.c.h.b16 %v286
    %v1108 = vunpack.c.l.b16 %v287
    %v1109 = vunpack.c.h.b16 %v287
    %v1110 = vunpack.c.l.b16 %v288
    %v1111 = vunpack.c.h.b16 %v288
    %v1112 = vunpack.c.l.b16 %v289
    %v1113 = vunpack.c.h.b16 %v289
    %v1114 = vunpack.c.l.b16 %v290
    %v1115 = vunpack.c.h.b16 %v290
    %v1116 = vunpack.c.l.b16 %v291
    %v1117 = vunpack.c.h.b16 %v291
    %v1118 = vunpack.c.l.b16 %v292
    %v1119 = vunpack.c.h.b16 %v292
    %v1120 = vunpack.c.l.b16 %v293
    %v1121 = vunpack.c.h.b16 %v293
    %v1122 = vunpack.c.l.b16 %v294
    %v1123 = vunpack.c.h.b16 %v294
    %v1124 = vunpack.c.l.b16 %v295
    %v1125 = vunpack.c.h.b16 %v295
    %v1126 = vunpack.c.l.b16 %v296
    %v1127 = vunpack.c.h.b16 %v296
    %v1128 = vunpack.c.l.b16 %v297
    %v1129 = vunpack.c.h.b16 %v297
    %v1130 = vunpack.c.l.b16 %v298
    %v1131 = vunpack.c.h.b16 %v298
    %v1132 = vunpack.c.l.b16 %v299
    %v1133 = vunpack.c.h.b16 %v299
    %v1134 = vunpack.c.l.b16 %v300
    %v1135 = vunpack.c.h.b16 %v300
    %v1136 = vunpack.c.l.b16 %v301
    %v1137 = vunpack.c.h.b16 %v301
    %v1138 = vunpack.c.l.b16 %v302
    %v1139 = vunpack.c.h.b16 %v302
    %v1140 = vunpack.c.l.b16 %v303
    %v1141 = vunpack.c.h.b16 %v303
    %v1142 = vunpack.c.l.b16 %v304
    %v1143 = vunpack.c.h.b16 %v304
    %v1144 = vunpack.c.l.b16 %v305
    %v1145 = vunpack.c.h.b16 %v305
    %v1146 = vunpack.c.l.b16 %v306
    %v1147 = vunpack.c.h.b16 %v306
    %v1148 = vunpack.c.l.b16 %v307
    %v1149 = vunpack.c.h.b16 %v307
    %v1150 = vunpack.c.l.b16 %v308
    %v1151 = vunpack.c.h.b16 %v308
    %v1152 = vunpack.c.l.b16 %v309
    %v1153 = vunpack.c.h.b16 %v309
    %v1154 = vunpack.c.l.b16 %v310
    %v1155 = vunpack.c.h.b16 %v310
    %v1156 = vunpack.c.l.b16 %v311
    %v1157 = vunpack.c.h.b16 %v311
    %v1158 = vunpack.c.l.b16 %v312
    %v1159 = vunpack.c.h.b16 %v312
    %v1160 = vunpack.c.l.b16 %v313
    %v1161 = vunpack.c.h.b16 %v313
    %v1162 = vunpack.c.l.b16 %v314
    %v1163 = vunpack.c.h.b16 %v314
    %v1164 = vunpack.c.l.b16 %v315
    %v1165 = vunpack.c.h.b16 %v315
    %v1166 = vunpack.c.l.b16 %v316
    %v1167 = vunpack.c.h.b16 %v316
    %v1168 = vunpack.c.l.b16 %v317
    %v1169 = vunpack.c.h.b16 %v317
    %v1170 = vunpack.c.l.b16 %v318
    %v1171 = vunpack.c.h.b16 %v318
    %v1172 = vunpack.c.l.b16 %v319
    %v1173 = vunpack.c.h.b16 %v319
    %v1174 = vunpack.c.l.b16 %v320
    %v1175 = vunpack.c.h.b16 %v320
    %v1176 = vunpack.c.l.b16 %v321
    %v1177 = vunpack.c.h.b16 %v321
    %v1178 = vunpack.c.l.b16 %v322
    %v1179 = vunpack.c.h.b16 %v322
    %v1180 = vunpack.c.l.b16 %v323
    %v1181 = vunpack.c.h.b16 %v323
    %v1182 = vunpack.c.l.b16 %v324
    %v1183 = vunpack.c.h.b16 %v324
    %v1184 = vunpack.c.l.b16 %v325
    %v1185 = vunpack.c.h.b16 %v325
    %v1186 = vunpack.c.l.b16 %v326
    %v1187 = vunpack.c.h.b16 %v326
    %v1188 = vunpack.c.l.b16 %v327
    %v1189 = vunpack.c.h.b16 %v327
    %v1190 = vunpack.c.l.b16 %v328
    %v1191 = vunpack.c.h.b16 %v328
    %v1192 = vunpack.c.l.b16 %v329
    %v1193 = vunpack.c.h.b16 %v329
    %v1194 = vunpack.c.l.b16 %v330
    %v1195 = vunpack.c.h.b16 %v330
    %v1196 = vunpack.c.l.b16 %v331
    %v1197 = vunpack.c.h.b16 %v331
    %v1198 = vunpack.c.l.b16 %v332
    %v1199 = vunpack.c.h.b16 %v332
    %v1200 = vunpack.c.l.b16 %v333
    %v1201 = vunpack.c.h.b16 %v333
    %v1202 = vpack.c.b16 %v814, %v810
    %v1203 = vpack.c.b16 %v815, %v811
    %v1204 = vpack.c.b16 %v816, %v812
    %v1205 = vpack.c.b16 %v817, %v813
    %v1206 = vpack.c.b16 %v822, %v818
    %v1207 = vpack.c.b16 %v823, %v819
    %v1208 = vpack.c.b16 %v824, %v820
    %v1209 = vpack.c.b16 %v825, %v821
    %v1210 = vpack.c.b16 %v830, %v826
    %v1211 = vpack.c.b16 %v831, %v827
    %v1212 = vpack.c.b16 %v832, %v828
    %v1213 = vpack.c.b16 %v833, %v829
    %v1214 = vpack.c.b16 %v838, %v834
    %v1215 = vpack.c.b16 %v839, %v835
    %v1216 = vpack.c.b16 %v840, %v836
    %v1217 = vpack.c.b16 %v841, %v837
    %v1218 = vpack.c.b16 %v846, %v842
    %v1219 = vpack.c.b16 %v847, %v843
    %v1220 = vpack.c.b16 %v848, %v844
    %v1221 = vpack.c.b16 %v849, %v845
    %v1222 = vpack.c.b16 %v854, %v850
    %v1223 = vpack.c.b16 %v855, %v851
    %v1224 = vpack.c.b16 %v856, %v852
    %v1225 = vpack.c.b16 %v857, %v853
    %v1226 = vpack.c.b16 %v862, %v858
    %v1227 = vpack.c.b16 %v863, %v859
    %v1228 = vpack.c.b16 %v864, %v860
    %v1229 = vpack.c.b16 %v865, %v861
    %v1230 = vpack.c.b16 %v870, %v866
    %v1231 = vpack.c.b16 %v871, %v867
    %v1232 = vpack.c.b16 %v872, %v868
    %v1233 = vpack.c.b16 %v873, %v869
    %v1234 = vpack.c.b16 %v878, %v874
    %v1235 = vpack.c.b16 %v879, %v875
    %v1236 = vpack.c.b16 %v880, %v876
    %v1237 = vpack.c.b16 %v881, %v877
    %v1238 = vpack.c.b16 %v886, %v882
    %v1239 = vpack.c.b16 %v887, %v883
    %v1240 = vpack.c.b16 %v888, %v884
    %v1241 = vpack.c.b16 %v889, %v885
    %v1242 = vpack.c.b16 %v894, %v890
    %v1243 = vpack.c.b16 %v895, %v891
    %v1244 = vpack.c.b16 %v896, %v892
    %v1245 = vpack.c.b16 %v897, %v893
    %v1246 = vpack.c.b16 %v902, %v898
    %v1247 = vpack.c.b16 %v903, %v899
    %v1248 = vpack.c.b16 %v904, %v900
    %v1249 = vpack.c.b16 %v905, %v901
    %v1250 = vpack.c.b16 %v910, %v906
    %v1251 = vpack.c.b16 %v911, %v907
    %v1252 = vpack.c.b16 %v912, %v908
    %v1253 = vpack.c.b16 %v913, %v909
    %v1254 = vpack.c.b16 %v918, %v914
    %v1255 = vpack.c.b16 %v919, %v915
    %v1256 = vpack.c.b16 %v920, %v916
    %v1257 = vpack.c.b16 %v921, %v917
    %v1258 = vpack.c.b16 %v926, %v922
    %v1259 = vpack.c.b16 %v927, %v923
    %v1260 = vpack.c.b16 %v928, %v924
    %v1261 = vpack.c.b16 %v929, %v925
    %v1262 = vpack.c.b16 %v934, %v930
    %v1263 = vpack.c.b16 %v935, %v931
    %v1264 = vpack.c.b16 %v936, %v932
    %v1265 = vpack.c.b16 %v937, %v933
    %v1266 = vpack.c.b16 %v942, %v938
    %v1267 = vpack.c.b16 %v943, %v939
    %v1268 = vpack.c.b16 %v944, %v940
    %v1269 = vpack.c.b16 %v945, %v941
    %v1270 = vpack.c.b16 %v950, %v946
    %v1271 = vpack.c.b16 %v951, %v947
    %v1272 = vpack.c.b16 %v952, %v948
    %v1273 = vpack.c.b16 %v953, %v949
    %v1274 = vpack.c.b16 %v958, %v954
    %v1275 = vpack.c.b16 %v959, %v955
    %v1276 = vpack.c.b16 %v960, %v956
    %v1277 = vpack.c.b16 %v961, %v957
    %v1278 = vpack.c.b16 %v966, %v962
    %v1279 = vpack.c.b16 %v967, %v963
    %v1280 = vpack.c.b16 %v968, %v964
    %v1281 = vpack.c.b16 %v969, %v965
    %v1282 = vpack.c.b16 %v974, %v970
    %v1283 = vpack.c.b16 %v975, %v971
    %v1284 = vpack.c.b16 %v976, %v972
    %v1285 = vpack.c.b16 %v977, %v973
    %v1286 = vpack.c.b16 %v982, %v978
    %v1287 = vpack.c.b16 %v983, %v979
    %v1288 = vpack.c.b16 %v984, %v980
    %v1289 = vpack.c.b16 %v985, %v981
    %v1290 = vpack.c.b16 %v990, %v986
    %v1291 = vpack.c.b16 %v991, %v987
    %v1292 = vpack.c.b16 %v992, %v988
    %v1293 = vpack.c.b16 %v993, %v989
    %v1294 = vpack.c.b16 %v998, %v994
    %v1295 = vpack.c.b16 %v999, %v995
    %v1296 = vpack.c.b16 %v1000, %v996
    %v1297 = vpack.c.b16 %v1001, %v997
    %v1298 = vpack.c.b16 %v1006, %v1002
    %v1299 = vpack.c.b16 %v1007, %v1003
    %v1300 = vpack.c.b16 %v1008, %v1004
    %v1301 = vpack.c.b16 %v1009, %v1005
    %v1302 = vpack.c.b16 %v1014, %v1010
    %v1303 = vpack.c.b16 %v1015, %v1011
    %v1304 = vpack.c.b16 %v1016, %v1012
    %v1305 = vpack.c.b16 %v1017, %v1013
    %v1306 = vpack.c.b16 %v1022, %v1018
    %v1307 = vpack.c.b16 %v1023, %v1019
    %v1308 = vpack.c.b16 %v1024, %v1020
    %v1309 = vpack.c.b16 %v1025, %v1021
    %v1310 = vpack.c.b16 %v1030, %v1026
    %v1311 = vpack.c.b16 %v1031, %v1027
    %v1312 = vpack.c.b16 %v1032, %v1028
    %v1313 = vpack.c.b16 %v1033, %v1029
    %v1314 = vpack.c.b16 %v1038, %v1034
    %v1315 = vpack.c.b16 %v1039, %v1035
    %v1316 = vpack.c.b16 %v1040, %v1036
    %v1317 = vpack.c.b16 %v1041, %v1037
    %v1318 = vpack.c.b16 %v1046, %v1042
    %v1319 = vpack.c.b16 %v1047, %v1043
    %v1320 = vpack.c.b16 %v1048, %v1044
    %v1321 = vpack.c.b16 %v1049, %v1045
    %v1322 = vpack.c.b16 %v1054, %v1050
    %v1323 = vpack.c.b16 %v1055, %v1051
    %v1324 = vpack.c.b16 %v1056, %v1052
    %v1325 = vpack.c.b16 %v1057, %v1053
    %v1326 = vpack.c.b16 %v1062, %v1058
    %v1327 = vpack.c.b16 %v1063, %v1059
    %v1328 = vpack.c.b16 %v1064, %v1060
    %v1329 = vpack.c.b16 %v1065, %v1061
    %v1330 = vpack.c.b16 %v1070, %v1066
    %v1331 = vpack.c.b16 %v1071, %v1067
    %v1332 = vpack.c.b16 %v1072, %v1068
    %v1333 = vpack.c.b16 %v1073, %v1069
    %v1334 = vpack.c.b16 %v1078, %v1074
    %v1335 = vpack.c.b16 %v1079, %v1075
    %v1336 = vpack.c.b16 %v1080, %v1076
    %v1337 = vpack.c.b16 %v1081, %v1077
    %v1338 = vpack.c.b16 %v1086, %v1082
    %v1339 = vpack.c.b16 %v1087, %v1083
    %v1340 = vpack.c.b16 %v1088, %v1084
    %v1341 = vpack.c.b16 %v1089, %v1085
    %v1342 = vpack.c.b16 %v1094, %v1090
    %v1343 = vpack.c.b16 %v1095, %v1091
    %v1344 = vpack.c.b16 %v1096, %v1092
    %v1345 = vpack.c.b16 %v1097, %v1093
    %v1346 = vpack.c.b16 %v1102, %v1098
    %v1347 = vpack.c.b16 %v1103, %v1099
    %v1348 = vpack.c.b16 %v1104, %v1100
    %v1349 = vpack.c.b16 %v1105, %v1101
    %v1350 = vpack.c.b16 %v1110, %v1106
    %v1351 = vpack.c.b16 %v1111, %v1107
    %v1352 = vpack.c.b16 %v1112, %v1108
    %v1353 = vpack.c.b16 %v1113, %v1109
    %v1354 = vpack.c.b16 %v1118, %v1114
    %v1355 = vpack.c.b16 %v1119, %v1115
    %v1356 = vpack.c.b16 %v1120, %v1116
    %v1357 = vpack.c.b16 %v1121, %v1117
    %v1358 = vpack.c.b16 %v1126, %v1122
    %v1359 = vpack.c.b16 %v1127, %v1123
    %v1360 = vpack.c.b16 %v1128, %v1124
    %v1361 = vpack.c.b16 %v1129, %v1125
    %v1362 = vpack.c.b16 %v1134, %v1130
    %v1363 = vpack.c.b16 %v1135, %v1131
    %v1364 = vpack.c.b16 %v1136, %v1132
    %v1365 = vpack.c.b16 %v1137, %v1133
    %v1366 = vpack.c.b16 %v1142, %v1138
    %v1367 = vpack.c.b16 %v1143, %v1139
    %v1368 = vpack.c.b16 %v1144, %v1140
    %v1369 = vpack.c.b16 %v1145, %v1141
    %v1370 = vpack.c.b16 %v1150, %v1146
    %v1371 = vpack.c.b16 %v1151, %v1147
    %v1372 = vpack.c.b16 %v1152, %v1148
    %v1373 = vpack.c.b16 %v1153, %v1149
    %v1374 = vpack.c.b16 %v1158, %v1154
    %v1375 = vpack.c.b16 %v1159, %v1155
    %v1376 = vpack.c.b16 %v1160, %v1156
    %v1377 = vpack.c.b16 %v1161, %v1157
    %v1378 = vpack.c.b16 %v1166, %v1162
    %v1379 = vpack.c.b16 %v1167, %v1163
    %v1380 = vpack.c.b16 %v1168, %v1164
    %v1381 = vpack.c.b16 %v1169, %v1165
    %v1382 = vpack.c.b16 %v1174, %v1170
    %v1383 = vpack.c.b16 %v1175, %v1171
    %v1384 = vpack.c.b16 %v1176, %v1172
    %v1385 = vpack.c.b16 %v1177, %v1173
    %v1386 = vpack.c.b16 %v1182, %v1178
    %v1387 = vpack.c.b16 %v1183, %v1179
    %v1388 = vpack.c.b16 %v1184, %v1180
    %v1389 = vpack.c.b16 %v1185, %v1181
    %v1390 = vpack.c.b16 %v1190, %v1186
    %v1391 = vpack.c.b16 %v1191, %v1187
    %v1392 = vpack.c.b16 %v1192, %v1188
    %v1393 = vpack.c.b16 %v1193, %v1189
    %v1394 = vpack.c.b16 %v1198, %v1194
    %v1395 = vpack.c.b16 %v1199, %v1195
    %v1396 = vpack.c.b16 %v1200, %v1196
    %v1397 = vpack.c.b16 %v1201, %v1197
    %vm1594 = vcmask 130048
    %v1596 = vsel %vm1594, %v516, 0
    %v1599 = vsel %vm1594, %v523, 0
    %v1602 = vsel %vm1594, %v530, 0
    %v1605 = vsel %vm1594, %v537, 0
    %v1608 = vsel %vm1594, %v544, 0
    %v1611 = vsel %vm1594, %v551, 0
    %v1614 = vsel %vm1594, %v558, 0
    %v1617 = vsel %vm1594, %v565, 0
    %1619 = vmatprep.subr.bf16.mxu0 %v1203
    %1620 = vmatpush1.bf16.msra.mxu0 %v1202
    %1621 = vmatprep.subr.bf16.mxu0 %v1207
    %1622 = vmatpush1.bf16.msra.mxu0 %v1206
    %1623 = vmatprep.subr.bf16.mxu0 %v1211
    %1624 = vmatpush1.bf16.msra.mxu0 %v1210
    %1625 = vmatprep.subr.bf16.mxu0 %v1215
    %1626 = vmatpush1.bf16.msra.mxu0 %v1214
    %1627 = vmatprep.subr.bf16.mxu0 %v1219
    %1628 = vmatpush1.bf16.msra.mxu0 %v1218
    %1629 = vmatprep.subr.bf16.mxu0 %v1223
    %1630 = vmatpush1.bf16.msra.mxu0 %v1222
    %1631 = vmatprep.subr.bf16.mxu0 %v1227
    %1632 = vmatpush1.bf16.msra.mxu0 %v1226
    %1633 = vmatprep.subr.bf16.mxu0 %v1231
    %1634 = vmatpush1.bf16.msra.mxu0 %v1230
    %1635 = vmatprep.subr.bf16.mxu0 %v1235
    %1636 = vmatpush1.bf16.msra.mxu0 %v1234
    %1637 = vmatprep.subr.bf16.mxu0 %v1239
    %1638 = vmatpush1.bf16.msra.mxu0 %v1238
    %1639 = vmatprep.subr.bf16.mxu0 %v1243
    %1640 = vmatpush1.bf16.msra.mxu0 %v1242
    %1641 = vmatprep.subr.bf16.mxu0 %v1247
    %1642 = vmatpush1.bf16.msra.mxu0 %v1246
    %1643 = vmatprep.subr.bf16.mxu0 %v1251
    %1644 = vmatpush1.bf16.msra.mxu0 %v1250
    %1645 = vmatprep.subr.bf16.mxu0 %v1255
    %1646 = vmatpush1.bf16.msra.mxu0 %v1254
    %1647 = vmatprep.subr.bf16.mxu0 %v1259
    %1648 = vmatpush1.bf16.msra.mxu0 %v1258
    %1649 = vmatprep.subr.bf16.mxu0 %v1263
    %1650 = vmatpush1.bf16.msra.mxu0 %v1262
    %1651 = vmatprep.mubr.bf16.mxu0 %v511
    %1652 = vmatmul.mubr.bf16.gmra.mrb[0].mxu0 %v510
    %v1653 = vpop.f32.mrb[0].mxu0
    %v1654 = vadd.f32 0.0, %v1653
    %v1655 = vpop.f32.mrb[0].mxu0
    %v1656 = vadd.f32 0.0, %v1655
    %v1657 = vpop.f32.mrb[0].mxu0
    %v1658 = vadd.f32 0.0, %v1657
    %v1659 = vpop.f32.mrb[0].mxu0
    %v1660 = vadd.f32 0.0, %v1659
    %1661 = vmatprep.mubr.bf16.mxu0 %v518
    %1662 = vmatmul.mubr.bf16.gmra.mrb[0].mxu0 %v517
    %v1663 = vpop.f32.mrb[0].mxu0
    %v1664 = vadd.f32 0.0, %v1663
    %v1665 = vpop.f32.mrb[0].mxu0
    %v1666 = vadd.f32 0.0, %v1665
    %v1667 = vpop.f32.mrb[0].mxu0
    %v1668 = vadd.f32 0.0, %v1667
    %v1669 = vpop.f32.mrb[0].mxu0
    %v1670 = vadd.f32 0.0, %v1669
    %1671 = vmatprep.mubr.bf16.mxu0 %v525
    %1672 = vmatmul.mubr.bf16.gmra.mrb[0].mxu0 %v524
    %v1673 = vpop.f32.mrb[0].mxu0
    %v1674 = vadd.f32 0.0, %v1673
    %v1675 = vpop.f32.mrb[0].mxu0
    %v1676 = vadd.f32 0.0, %v1675
    %v1677 = vpop.f32.mrb[0].mxu0
    %v1678 = vadd.f32 0.0, %v1677
    %v1679 = vpop.f32.mrb[0].mxu0
    %v1680 = vadd.f32 0.0, %v1679
    %1681 = vmatprep.mubr.bf16.mxu0 %v532
    %1682 = vmatmul.mubr.bf16.gmra.mrb[0].mxu0 %v531
    %v1683 = vpop.f32.mrb[0].mxu0
    %v1684 = vadd.f32 0.0, %v1683
    %v1685 = vpop.f32.mrb[0].mxu0
    %v1686 = vadd.f32 0.0, %v1685
    %v1687 = vpop.f32.mrb[0].mxu0
    %v1688 = vadd.f32 0.0, %v1687
    %v1689 = vpop.f32.mrb[0].mxu0
    %v1690 = vadd.f32 0.0, %v1689
    %1691 = vmatprep.mubr.bf16.mxu0 %v539
    %1692 = vmatmul.mubr.bf16.gmra.mrb[0].mxu0 %v538
    %v1693 = vpop.f32.mrb[0].mxu0
    %v1694 = vadd.f32 0.0, %v1693
    %v1695 = vpop.f32.mrb[0].mxu0
    %v1696 = vadd.f32 0.0, %v1695
    %v1697 = vpop.f32.mrb[0].mxu0
    %v1698 = vadd.f32 0.0, %v1697
    %v1699 = vpop.f32.mrb[0].mxu0
    %v1700 = vadd.f32 0.0, %v1699
    %1701 = vmatprep.mubr.bf16.mxu0 %v546
    %1702 = vmatmul.mubr.bf16.gmra.mrb[0].mxu0 %v545
    %v1703 = vpop.f32.mrb[0].mxu0
    %v1704 = vadd.f32 0.0, %v1703
    %v1705 = vpop.f32.mrb[0].mxu0
    %v1706 = vadd.f32 0.0, %v1705
    %v1707 = vpop.f32.mrb[0].mxu0
    %v1708 = vadd.f32 0.0, %v1707
    %v1709 = vpop.f32.mrb[0].mxu0
    %v1710 = vadd.f32 0.0, %v1709
    %1711 = vmatprep.mubr.bf16.mxu0 %v553
    %1712 = vmatmul.mubr.bf16.gmra.mrb[0].mxu0 %v552
    %v1713 = vpop.f32.mrb[0].mxu0
    %v1714 = vadd.f32 0.0, %v1713
    %v1715 = vpop.f32.mrb[0].mxu0
    %v1716 = vadd.f32 0.0, %v1715
    %v1717 = vpop.f32.mrb[0].mxu0
    %v1718 = vadd.f32 0.0, %v1717
    %v1719 = vpop.f32.mrb[0].mxu0
    %v1720 = vadd.f32 0.0, %v1719
    %1721 = vmatprep.mubr.bf16.mxu0 %v560
    %1722 = vmatmul.mubr.bf16.gmra.mrb[0].mxu0 %v559
    %v1723 = vpop.f32.mrb[0].mxu0
    %v1724 = vadd.f32 0.0, %v1723
    %v1725 = vpop.f32.mrb[0].mxu0
    %v1726 = vadd.f32 0.0, %v1725
    %v1727 = vpop.f32.mrb[0].mxu0
    %v1728 = vadd.f32 0.0, %v1727
    %v1729 = vpop.f32.mrb[0].mxu0
    %v1730 = vadd.f32 0.0, %v1729
    %1731 = vdwg.mxu0
    %1732 = vmatprep.subr.bf16.mxu0 %v1267
    %1733 = vmatpush1.bf16.msra.mxu0 %v1266
    %1734 = vmatprep.subr.bf16.mxu0 %v1271
    %1735 = vmatpush1.bf16.msra.mxu0 %v1270
    %1736 = vmatprep.subr.bf16.mxu0 %v1275
    %1737 = vmatpush1.bf16.msra.mxu0 %v1274
    %1738 = vmatprep.subr.bf16.mxu0 %v1279
    %1739 = vmatpush1.bf16.msra.mxu0 %v1278
    %1740 = vmatprep.subr.bf16.mxu0 %v1283
    %1741 = vmatpush1.bf16.msra.mxu0 %v1282
    %1742 = vmatprep.subr.bf16.mxu0 %v1287
    %1743 = vmatpush1.bf16.msra.mxu0 %v1286
    %1744 = vmatprep.subr.bf16.mxu0 %v1291
    %1745 = vmatpush1.bf16.msra.mxu0 %v1290
    %1746 = vmatprep.subr.bf16.mxu0 %v1295
    %1747 = vmatpush1.bf16.msra.mxu0 %v1294
    %1748 = vmatprep.subr.bf16.mxu0 %v1299
    %1749 = vmatpush1.bf16.msra.mxu0 %v1298
    %1750 = vmatprep.subr.bf16.mxu0 %v1303
    %1751 = vmatpush1.bf16.msra.mxu0 %v1302
    %1752 = vmatprep.subr.bf16.mxu0 %v1307
    %1753 = vmatpush1.bf16.msra.mxu0 %v1306
    %1754 = vmatprep.subr.bf16.mxu0 %v1311
    %1755 = vmatpush1.bf16.msra.mxu0 %v1310
    %1756 = vmatprep.subr.bf16.mxu0 %v1315
    %1757 = vmatpush1.bf16.msra.mxu0 %v1314
    %1758 = vmatprep.subr.bf16.mxu0 %v1319
    %1759 = vmatpush1.bf16.msra.mxu0 %v1318
    %1760 = vmatprep.subr.bf16.mxu0 %v1323
    %1761 = vmatpush1.bf16.msra.mxu0 %v1322
    %1762 = vmatprep.subr.bf16.mxu0 %v1327
    %1763 = vmatpush1.bf16.msra.mxu0 %v1326
    %1764 = vmatprep.mubr.bf16.mxu0 %v513
    %1765 = vmatmul.mubr.bf16.gmra.mrb[0].mxu0 %v512
    %v1766 = vpop.f32.mrb[0].mxu0
    %v1767 = vadd.f32 %v1654, %v1766
    %v1768 = vpop.f32.mrb[0].mxu0
    %v1769 = vadd.f32 %v1656, %v1768
    %v1770 = vpop.f32.mrb[0].mxu0
    %v1771 = vadd.f32 %v1658, %v1770
    %v1772 = vpop.f32.mrb[0].mxu0
    %v1773 = vadd.f32 %v1660, %v1772
    %1774 = vmatprep.mubr.bf16.mxu0 %v520
    %1775 = vmatmul.mubr.bf16.gmra.mrb[0].mxu0 %v519
    %v1776 = vpop.f32.mrb[0].mxu0
    %v1777 = vadd.f32 %v1664, %v1776
    %v1778 = vpop.f32.mrb[0].mxu0
    %v1779 = vadd.f32 %v1666, %v1778
    %v1780 = vpop.f32.mrb[0].mxu0
    %v1781 = vadd.f32 %v1668, %v1780
    %v1782 = vpop.f32.mrb[0].mxu0
    %v1783 = vadd.f32 %v1670, %v1782
    %1784 = vmatprep.mubr.bf16.mxu0 %v527
    %1785 = vmatmul.mubr.bf16.gmra.mrb[0].mxu0 %v526
    %v1786 = vpop.f32.mrb[0].mxu0
    %v1787 = vadd.f32 %v1674, %v1786
    %v1788 = vpop.f32.mrb[0].mxu0
    %v1789 = vadd.f32 %v1676, %v1788
    %v1790 = vpop.f32.mrb[0].mxu0
    %v1791 = vadd.f32 %v1678, %v1790
    %v1792 = vpop.f32.mrb[0].mxu0
    %v1793 = vadd.f32 %v1680, %v1792
    %1794 = vmatprep.mubr.bf16.mxu0 %v534
    %1795 = vmatmul.mubr.bf16.gmra.mrb[0].mxu0 %v533
    %v1796 = vpop.f32.mrb[0].mxu0
    %v1797 = vadd.f32 %v1684, %v1796
    %v1798 = vpop.f32.mrb[0].mxu0
    %v1799 = vadd.f32 %v1686, %v1798
    %v1800 = vpop.f32.mrb[0].mxu0
    %v1801 = vadd.f32 %v1688, %v1800
    %v1802 = vpop.f32.mrb[0].mxu0
    %v1803 = vadd.f32 %v1690, %v1802
    %1804 = vmatprep.mubr.bf16.mxu0 %v541
    %1805 = vmatmul.mubr.bf16.gmra.mrb[0].mxu0 %v540
    %v1806 = vpop.f32.mrb[0].mxu0
    %v1807 = vadd.f32 %v1694, %v1806
    %v1808 = vpop.f32.mrb[0].mxu0
    %v1809 = vadd.f32 %v1696, %v1808
    %v1810 = vpop.f32.mrb[0].mxu0
    %v1811 = vadd.f32 %v1698, %v1810
    %v1812 = vpop.f32.mrb[0].mxu0
    %v1813 = vadd.f32 %v1700, %v1812
    %1814 = vmatprep.mubr.bf16.mxu0 %v548
    %1815 = vmatmul.mubr.bf16.gmra.mrb[0].mxu0 %v547
    %v1816 = vpop.f32.mrb[0].mxu0
    %v1817 = vadd.f32 %v1704, %v1816
    %v1818 = vpop.f32.mrb[0].mxu0
    %v1819 = vadd.f32 %v1706, %v1818
    %v1820 = vpop.f32.mrb[0].mxu0
    %v1821 = vadd.f32 %v1708, %v1820
    %v1822 = vpop.f32.mrb[0].mxu0
    %v1823 = vadd.f32 %v1710, %v1822
    %1824 = vmatprep.mubr.bf16.mxu0 %v555
    %1825 = vmatmul.mubr.bf16.gmra.mrb[0].mxu0 %v554
    %v1826 = vpop.f32.mrb[0].mxu0
    %v1827 = vadd.f32 %v1714, %v1826
    %v1828 = vpop.f32.mrb[0].mxu0
    %v1829 = vadd.f32 %v1716, %v1828
    %v1830 = vpop.f32.mrb[0].mxu0
    %v1831 = vadd.f32 %v1718, %v1830
    %v1832 = vpop.f32.mrb[0].mxu0
    %v1833 = vadd.f32 %v1720, %v1832
    %1834 = vmatprep.mubr.bf16.mxu0 %v562
    %1835 = vmatmul.mubr.bf16.gmra.mrb[0].mxu0 %v561
    %v1836 = vpop.f32.mrb[0].mxu0
    %v1837 = vadd.f32 %v1724, %v1836
    %v1838 = vpop.f32.mrb[0].mxu0
    %v1839 = vadd.f32 %v1726, %v1838
    %v1840 = vpop.f32.mrb[0].mxu0
    %v1841 = vadd.f32 %v1728, %v1840
    %v1842 = vpop.f32.mrb[0].mxu0
    %v1843 = vadd.f32 %v1730, %v1842
    %1844 = vdwg.mxu0
    %1845 = vmatprep.subr.bf16.mxu0 %v1331
    %1846 = vmatpush1.bf16.msra.mxu0 %v1330
    %1847 = vmatprep.subr.bf16.mxu0 %v1335
    %1848 = vmatpush1.bf16.msra.mxu0 %v1334
    %1849 = vmatprep.subr.bf16.mxu0 %v1339
    %1850 = vmatpush1.bf16.msra.mxu0 %v1338
    %1851 = vmatprep.subr.bf16.mxu0 %v1343
    %1852 = vmatpush1.bf16.msra.mxu0 %v1342
    %1853 = vmatprep.subr.bf16.mxu0 %v1347
    %1854 = vmatpush1.bf16.msra.mxu0 %v1346
    %1855 = vmatprep.subr.bf16.mxu0 %v1351
    %1856 = vmatpush1.bf16.msra.mxu0 %v1350
    %1857 = vmatprep.subr.bf16.mxu0 %v1355
    %1858 = vmatpush1.bf16.msra.mxu0 %v1354
    %1859 = vmatprep.subr.bf16.mxu0 %v1359
    %1860 = vmatpush1.bf16.msra.mxu0 %v1358
    %1861 = vmatprep.subr.bf16.mxu0 %v1363
    %1862 = vmatpush1.bf16.msra.mxu0 %v1362
    %1863 = vmatprep.subr.bf16.mxu0 %v1367
    %1864 = vmatpush1.bf16.msra.mxu0 %v1366
    %1865 = vmatprep.subr.bf16.mxu0 %v1371
    %1866 = vmatpush1.bf16.msra.mxu0 %v1370
    %1867 = vmatprep.subr.bf16.mxu0 %v1375
    %1868 = vmatpush1.bf16.msra.mxu0 %v1374
    %1869 = vmatprep.subr.bf16.mxu0 %v1379
    %1870 = vmatpush1.bf16.msra.mxu0 %v1378
    %1871 = vmatprep.subr.bf16.mxu0 %v1383
    %1872 = vmatpush1.bf16.msra.mxu0 %v1382
    %1873 = vmatprep.subr.bf16.mxu0 %v1387
    %1874 = vmatpush1.bf16.msra.mxu0 %v1386
    %1875 = vmatprep.subr.bf16.mxu0 %v1391
    %1876 = vmatpush1.bf16.msra.mxu0 %v1390
    %1877 = vmatprep.mubr.bf16.mxu0 %v515
    %1878 = vmatmul.mubr.bf16.gmra.mrb[0].mxu0 %v514
    %v1879 = vpop.f32.mrb[0].mxu0
    %v1880 = vadd.f32 %v1767, %v1879
    %v1881 = vpop.f32.mrb[0].mxu0
    %v1882 = vadd.f32 %v1769, %v1881
    %v1883 = vpop.f32.mrb[0].mxu0
    %v1884 = vadd.f32 %v1771, %v1883
    %v1885 = vpop.f32.mrb[0].mxu0
    %v1886 = vadd.f32 %v1773, %v1885
    %1887 = vmatprep.mubr.bf16.mxu0 %v522
    %1888 = vmatmul.mubr.bf16.gmra.mrb[0].mxu0 %v521
    %v1889 = vpop.f32.mrb[0].mxu0
    %v1890 = vadd.f32 %v1777, %v1889
    %v1891 = vpop.f32.mrb[0].mxu0
    %v1892 = vadd.f32 %v1779, %v1891
    %v1893 = vpop.f32.mrb[0].mxu0
    %v1894 = vadd.f32 %v1781, %v1893
    %v1895 = vpop.f32.mrb[0].mxu0
    %v1896 = vadd.f32 %v1783, %v1895
    %1897 = vmatprep.mubr.bf16.mxu0 %v529
    %1898 = vmatmul.mubr.bf16.gmra.mrb[0].mxu0 %v528
    %v1899 = vpop.f32.mrb[0].mxu0
    %v1900 = vadd.f32 %v1787, %v1899
    %v1901 = vpop.f32.mrb[0].mxu0
    %v1902 = vadd.f32 %v1789, %v1901
    %v1903 = vpop.f32.mrb[0].mxu0
    %v1904 = vadd.f32 %v1791, %v1903
    %v1905 = vpop.f32.mrb[0].mxu0
    %v1906 = vadd.f32 %v1793, %v1905
    %1907 = vmatprep.mubr.bf16.mxu0 %v536
    %1908 = vmatmul.mubr.bf16.gmra.mrb[0].mxu0 %v535
    %v1909 = vpop.f32.mrb[0].mxu0
    %v1910 = vadd.f32 %v1797, %v1909
    %v1911 = vpop.f32.mrb[0].mxu0
    %v1912 = vadd.f32 %v1799, %v1911
    %v1913 = vpop.f32.mrb[0].mxu0
    %v1914 = vadd.f32 %v1801, %v1913
    %v1915 = vpop.f32.mrb[0].mxu0
    %v1916 = vadd.f32 %v1803, %v1915
    %1917 = vmatprep.mubr.bf16.mxu0 %v543
    %1918 = vmatmul.mubr.bf16.gmra.mrb[0].mxu0 %v542
    %v1919 = vpop.f32.mrb[0].mxu0
    %v1920 = vadd.f32 %v1807, %v1919
    %v1921 = vpop.f32.mrb[0].mxu0
    %v1922 = vadd.f32 %v1809, %v1921
    %v1923 = vpop.f32.mrb[0].mxu0
    %v1924 = vadd.f32 %v1811, %v1923
    %v1925 = vpop.f32.mrb[0].mxu0
    %v1926 = vadd.f32 %v1813, %v1925
    %1927 = vmatprep.mubr.bf16.mxu0 %v550
    %1928 = vmatmul.mubr.bf16.gmra.mrb[0].mxu0 %v549
    %v1929 = vpop.f32.mrb[0].mxu0
    %v1930 = vadd.f32 %v1817, %v1929
    %v1931 = vpop.f32.mrb[0].mxu0
    %v1932 = vadd.f32 %v1819, %v1931
    %v1933 = vpop.f32.mrb[0].mxu0
    %v1934 = vadd.f32 %v1821, %v1933
    %v1935 = vpop.f32.mrb[0].mxu0
    %v1936 = vadd.f32 %v1823, %v1935
    %1937 = vmatprep.mubr.bf16.mxu0 %v557
    %1938 = vmatmul.mubr.bf16.gmra.mrb[0].mxu0 %v556
    %v1939 = vpop.f32.mrb[0].mxu0
    %v1940 = vadd.f32 %v1827, %v1939
    %v1941 = vpop.f32.mrb[0].mxu0
    %v1942 = vadd.f32 %v1829, %v1941
    %v1943 = vpop.f32.mrb[0].mxu0
    %v1944 = vadd.f32 %v1831, %v1943
    %v1945 = vpop.f32.mrb[0].mxu0
    %v1946 = vadd.f32 %v1833, %v1945
    %1947 = vmatprep.mubr.bf16.mxu0 %v564
    %1948 = vmatmul.mubr.bf16.gmra.mrb[0].mxu0 %v563
    %v1949 = vpop.f32.mrb[0].mxu0
    %v1950 = vadd.f32 %v1837, %v1949
    %v1951 = vpop.f32.mrb[0].mxu0
    %v1952 = vadd.f32 %v1839, %v1951
    %v1953 = vpop.f32.mrb[0].mxu0
    %v1954 = vadd.f32 %v1841, %v1953
    %v1955 = vpop.f32.mrb[0].mxu0
    %v1956 = vadd.f32 %v1843, %v1955
    %1957 = vdwg.mxu0
    %1958 = vmatprep.subr.bf16.mxu0 %v1395
    %1959 = vmatpush1.bf16.msra.mxu0 %v1394
    %1960 = vmatprep.subr.bf16.mxu0 0
    %1961 = vmatpush1.bf16.msra.mxu0 0
    %1962 = vmatprep.subr.bf16.mxu0 0
    %1963 = vmatpush1.bf16.msra.mxu0 0
    %1964 = vmatprep.subr.bf16.mxu0 0
    %1965 = vmatpush1.bf16.msra.mxu0 0
    %1966 = vmatprep.subr.bf16.mxu0 0
    %1967 = vmatpush1.bf16.msra.mxu0 0
    %1968 = vmatprep.subr.bf16.mxu0 0
    %1969 = vmatpush1.bf16.msra.mxu0 0
    %1970 = vmatprep.subr.bf16.mxu0 0
    %1971 = vmatpush1.bf16.msra.mxu0 0
    %1972 = vmatprep.subr.bf16.mxu0 0
    %1973 = vmatpush1.bf16.msra.mxu0 0
    %1974 = vmatprep.subr.bf16.mxu0 0
    %1975 = vmatpush1.bf16.msra.mxu0 0
    %1976 = vmatprep.subr.bf16.mxu0 0
    %1977 = vmatpush1.bf16.msra.mxu0 0
    %1978 = vmatprep.subr.bf16.mxu0 0
    %1979 = vmatpush1.bf16.msra.mxu0 0
    %1980 = vmatprep.subr.bf16.mxu0 0
    %1981 = vmatpush1.bf16.msra.mxu0 0
    %1982 = vmatprep.subr.bf16.mxu0 0
    %1983 = vmatpush1.bf16.msra.mxu0 0
    %1984 = vmatprep.subr.bf16.mxu0 0
    %1985 = vmatpush1.bf16.msra.mxu0 0
    %1986 = vmatprep.subr.bf16.mxu0 0
    %1987 = vmatpush1.bf16.msra.mxu0 0
    %1988 = vmatprep.subr.bf16.mxu0 0
    %1989 = vmatpush1.bf16.msra.mxu0 0
    %1990 = vmatprep.mubr.bf16.mxu0 0
    %1991 = vmatmul.mubr.bf16.gmra.mrb[0].mxu0 %v1596
    %v1992 = vpop.f32.mrb[0].mxu0
    %v1993 = vadd.f32 %v1880, %v1992
    %v1994 = vpop.f32.mrb[0].mxu0
    %v1995 = vadd.f32 %v1882, %v1994
    %v1996 = vpop.f32.mrb[0].mxu0
    %v1997 = vadd.f32 %v1884, %v1996
    %v1998 = vpop.f32.mrb[0].mxu0
    %v1999 = vadd.f32 %v1886, %v1998
    %2000 = vmatprep.mubr.bf16.mxu0 0
    %2001 = vmatmul.mubr.bf16.gmra.mrb[0].mxu0 %v1599
    %v2002 = vpop.f32.mrb[0].mxu0
    %v2003 = vadd.f32 %v1890, %v2002
    %v2004 = vpop.f32.mrb[0].mxu0
    %v2005 = vadd.f32 %v1892, %v2004
    %v2006 = vpop.f32.mrb[0].mxu0
    %v2007 = vadd.f32 %v1894, %v2006
    %v2008 = vpop.f32.mrb[0].mxu0
    %v2009 = vadd.f32 %v1896, %v2008
    %2010 = vmatprep.mubr.bf16.mxu0 0
    %2011 = vmatmul.mubr.bf16.gmra.mrb[0].mxu0 %v1602
    %v2012 = vpop.f32.mrb[0].mxu0
    %v2013 = vadd.f32 %v1900, %v2012
    %v2014 = vpop.f32.mrb[0].mxu0
    %v2015 = vadd.f32 %v1902, %v2014
    %v2016 = vpop.f32.mrb[0].mxu0
    %v2017 = vadd.f32 %v1904, %v2016
    %v2018 = vpop.f32.mrb[0].mxu0
    %v2019 = vadd.f32 %v1906, %v2018
    %2020 = vmatprep.mubr.bf16.mxu0 0
    %2021 = vmatmul.mubr.bf16.gmra.mrb[0].mxu0 %v1605
    %v2022 = vpop.f32.mrb[0].mxu0
    %v2023 = vadd.f32 %v1910, %v2022
    %v2024 = vpop.f32.mrb[0].mxu0
    %v2025 = vadd.f32 %v1912, %v2024
    %v2026 = vpop.f32.mrb[0].mxu0
    %v2027 = vadd.f32 %v1914, %v2026
    %v2028 = vpop.f32.mrb[0].mxu0
    %v2029 = vadd.f32 %v1916, %v2028
    %2030 = vmatprep.mubr.bf16.mxu0 0
    %2031 = vmatmul.mubr.bf16.gmra.mrb[0].mxu0 %v1608
    %v2032 = vpop.f32.mrb[0].mxu0
    %v2033 = vadd.f32 %v1920, %v2032
    %v2034 = vpop.f32.mrb[0].mxu0
    %v2035 = vadd.f32 %v1922, %v2034
    %v2036 = vpop.f32.mrb[0].mxu0
    %v2037 = vadd.f32 %v1924, %v2036
    %v2038 = vpop.f32.mrb[0].mxu0
    %v2039 = vadd.f32 %v1926, %v2038
    %2040 = vmatprep.mubr.bf16.mxu0 0
    %2041 = vmatmul.mubr.bf16.gmra.mrb[0].mxu0 %v1611
    %v2042 = vpop.f32.mrb[0].mxu0
    %v2043 = vadd.f32 %v1930, %v2042
    %v2044 = vpop.f32.mrb[0].mxu0
    %v2045 = vadd.f32 %v1932, %v2044
    %v2046 = vpop.f32.mrb[0].mxu0
    %v2047 = vadd.f32 %v1934, %v2046
    %v2048 = vpop.f32.mrb[0].mxu0
    %v2049 = vadd.f32 %v1936, %v2048
    %2050 = vmatprep.mubr.bf16.mxu0 0
    %2051 = vmatmul.mubr.bf16.gmra.mrb[0].mxu0 %v1614
    %v2052 = vpop.f32.mrb[0].mxu0
    %v2053 = vadd.f32 %v1940, %v2052
    %v2054 = vpop.f32.mrb[0].mxu0
    %v2055 = vadd.f32 %v1942, %v2054
    %v2056 = vpop.f32.mrb[0].mxu0
    %v2057 = vadd.f32 %v1944, %v2056
    %v2058 = vpop.f32.mrb[0].mxu0
    %v2059 = vadd.f32 %v1946, %v2058
    %2060 = vmatprep.mubr.bf16.mxu0 0
    %2061 = vmatmul.mubr.bf16.gmra.mrb[0].mxu0 %v1617
    %v2062 = vpop.f32.mrb[0].mxu0
    %v2063 = vadd.f32 %v1950, %v2062
    %v2064 = vpop.f32.mrb[0].mxu0
    %v2065 = vadd.f32 %v1952, %v2064
    %v2066 = vpop.f32.mrb[0].mxu0
    %v2067 = vadd.f32 %v1954, %v2066
    %v2068 = vpop.f32.mrb[0].mxu0
    %v2069 = vadd.f32 %v1956, %v2068
    %2070 = vdwg.mxu0
    %2071 = vmatprep.subr.bf16.mxu0 %v1205
    %2072 = vmatpush1.bf16.msra.mxu0 %v1204
    %2073 = vmatprep.subr.bf16.mxu0 %v1209
    %2074 = vmatpush1.bf16.msra.mxu0 %v1208
    %2075 = vmatprep.subr.bf16.mxu0 %v1213
    %2076 = vmatpush1.bf16.msra.mxu0 %v1212
    %2077 = vmatprep.subr.bf16.mxu0 %v1217
    %2078 = vmatpush1.bf16.msra.mxu0 %v1216
    %2079 = vmatprep.subr.bf16.mxu0 %v1221
    %2080 = vmatpush1.bf16.msra.mxu0 %v1220
    %2081 = vmatprep.subr.bf16.mxu0 %v1225
    %2082 = vmatpush1.bf16.msra.mxu0 %v1224
    %2083 = vmatprep.subr.bf16.mxu0 %v1229
    %2084 = vmatpush1.bf16.msra.mxu0 %v1228
    %2085 = vmatprep.subr.bf16.mxu0 %v1233
    %2086 = vmatpush1.bf16.msra.mxu0 %v1232
    %2087 = vmatprep.subr.bf16.mxu0 %v1237
    %2088 = vmatpush1.bf16.msra.mxu0 %v1236
    %2089 = vmatprep.subr.bf16.mxu0 %v1241
    %2090 = vmatpush1.bf16.msra.mxu0 %v1240
    %2091 = vmatprep.subr.bf16.mxu0 %v1245
    %2092 = vmatpush1.bf16.msra.mxu0 %v1244
    %2093 = vmatprep.subr.bf16.mxu0 %v1249
    %2094 = vmatpush1.bf16.msra.mxu0 %v1248
    %2095 = vmatprep.subr.bf16.mxu0 %v1253
    %2096 = vmatpush1.bf16.msra.mxu0 %v1252
    %2097 = vmatprep.subr.bf16.mxu0 %v1257
    %2098 = vmatpush1.bf16.msra.mxu0 %v1256
    %2099 = vmatprep.subr.bf16.mxu0 %v1261
    %2100 = vmatpush1.bf16.msra.mxu0 %v1260
    %2101 = vmatprep.subr.bf16.mxu0 %v1265
    %2102 = vmatpush1.bf16.msra.mxu0 %v1264
    %2103 = vmatprep.mubr.bf16.mxu0 %v511
    %2104 = vmatmul.mubr.bf16.gmra.mrb[0].mxu0 %v510
    %v2105 = vpop.f32.mrb[0].mxu0
    %v2106 = vadd.f32 0.0, %v2105
    %v2107 = vpop.f32.mrb[0].mxu0
    %v2108 = vadd.f32 0.0, %v2107
    %v2109 = vpop.f32.mrb[0].mxu0
    %v2110 = vadd.f32 0.0, %v2109
    %v2111 = vpop.f32.mrb[0].mxu0
    %v2112 = vadd.f32 0.0, %v2111
    %2113 = vmatprep.mubr.bf16.mxu0 %v518
    %2114 = vmatmul.mubr.bf16.gmra.mrb[0].mxu0 %v517
    %v2115 = vpop.f32.mrb[0].mxu0
    %v2116 = vadd.f32 0.0, %v2115
    %v2117 = vpop.f32.mrb[0].mxu0
    %v2118 = vadd.f32 0.0, %v2117
    %v2119 = vpop.f32.mrb[0].mxu0
    %v2120 = vadd.f32 0.0, %v2119
    %v2121 = vpop.f32.mrb[0].mxu0
    %v2122 = vadd.f32 0.0, %v2121
    %2123 = vmatprep.mubr.bf16.mxu0 %v525
    %2124 = vmatmul.mubr.bf16.gmra.mrb[0].mxu0 %v524
    %v2125 = vpop.f32.mrb[0].mxu0
    %v2126 = vadd.f32 0.0, %v2125
    %v2127 = vpop.f32.mrb[0].mxu0
    %v2128 = vadd.f32 0.0, %v2127
    %v2129 = vpop.f32.mrb[0].mxu0
    %v2130 = vadd.f32 0.0, %v2129
    %v2131 = vpop.f32.mrb[0].mxu0
    %v2132 = vadd.f32 0.0, %v2131
    %2133 = vmatprep.mubr.bf16.mxu0 %v532
    %2134 = vmatmul.mubr.bf16.gmra.mrb[0].mxu0 %v531
    %v2135 = vpop.f32.mrb[0].mxu0
    %v2136 = vadd.f32 0.0, %v2135
    %v2137 = vpop.f32.mrb[0].mxu0
    %v2138 = vadd.f32 0.0, %v2137
    %v2139 = vpop.f32.mrb[0].mxu0
    %v2140 = vadd.f32 0.0, %v2139
    %v2141 = vpop.f32.mrb[0].mxu0
    %v2142 = vadd.f32 0.0, %v2141
    %2143 = vmatprep.mubr.bf16.mxu0 %v539
    %2144 = vmatmul.mubr.bf16.gmra.mrb[0].mxu0 %v538
    %v2145 = vpop.f32.mrb[0].mxu0
    %v2146 = vadd.f32 0.0, %v2145
    %v2147 = vpop.f32.mrb[0].mxu0
    %v2148 = vadd.f32 0.0, %v2147
    %v2149 = vpop.f32.mrb[0].mxu0
    %v2150 = vadd.f32 0.0, %v2149
    %v2151 = vpop.f32.mrb[0].mxu0
    %v2152 = vadd.f32 0.0, %v2151
    %2153 = vmatprep.mubr.bf16.mxu0 %v546
    %2154 = vmatmul.mubr.bf16.gmra.mrb[0].mxu0 %v545
    %v2155 = vpop.f32.mrb[0].mxu0
    %v2156 = vadd.f32 0.0, %v2155
    %v2157 = vpop.f32.mrb[0].mxu0
    %v2158 = vadd.f32 0.0, %v2157
    %v2159 = vpop.f32.mrb[0].mxu0
    %v2160 = vadd.f32 0.0, %v2159
    %v2161 = vpop.f32.mrb[0].mxu0
    %v2162 = vadd.f32 0.0, %v2161
    %2163 = vmatprep.mubr.bf16.mxu0 %v553
    %2164 = vmatmul.mubr.bf16.gmra.mrb[0].mxu0 %v552
    %v2165 = vpop.f32.mrb[0].mxu0
    %v2166 = vadd.f32 0.0, %v2165
    %v2167 = vpop.f32.mrb[0].mxu0
    %v2168 = vadd.f32 0.0, %v2167
    %v2169 = vpop.f32.mrb[0].mxu0
    %v2170 = vadd.f32 0.0, %v2169
    %v2171 = vpop.f32.mrb[0].mxu0
    %v2172 = vadd.f32 0.0, %v2171
    %2173 = vmatprep.mubr.bf16.mxu0 %v560
    %2174 = vmatmul.mubr.bf16.gmra.mrb[0].mxu0 %v559
    %v2175 = vpop.f32.mrb[0].mxu0
    %v2176 = vadd.f32 0.0, %v2175
    %v2177 = vpop.f32.mrb[0].mxu0
    %v2178 = vadd.f32 0.0, %v2177
    %v2179 = vpop.f32.mrb[0].mxu0
    %v2180 = vadd.f32 0.0, %v2179
    %v2181 = vpop.f32.mrb[0].mxu0
    %v2182 = vadd.f32 0.0, %v2181
    %2183 = vdwg.mxu0
    %2184 = vmatprep.subr.bf16.mxu0 %v1269
    %2185 = vmatpush1.bf16.msra.mxu0 %v1268
    %2186 = vmatprep.subr.bf16.mxu0 %v1273
    %2187 = vmatpush1.bf16.msra.mxu0 %v1272
    %2188 = vmatprep.subr.bf16.mxu0 %v1277
    %2189 = vmatpush1.bf16.msra.mxu0 %v1276
    %2190 = vmatprep.subr.bf16.mxu0 %v1281
    %2191 = vmatpush1.bf16.msra.mxu0 %v1280
    %2192 = vmatprep.subr.bf16.mxu0 %v1285
    %2193 = vmatpush1.bf16.msra.mxu0 %v1284
    %2194 = vmatprep.subr.bf16.mxu0 %v1289
    %2195 = vmatpush1.bf16.msra.mxu0 %v1288
    %2196 = vmatprep.subr.bf16.mxu0 %v1293
    %2197 = vmatpush1.bf16.msra.mxu0 %v1292
    %2198 = vmatprep.subr.bf16.mxu0 %v1297
    %2199 = vmatpush1.bf16.msra.mxu0 %v1296
    %2200 = vmatprep.subr.bf16.mxu0 %v1301
    %2201 = vmatpush1.bf16.msra.mxu0 %v1300
    %2202 = vmatprep.subr.bf16.mxu0 %v1305
    %2203 = vmatpush1.bf16.msra.mxu0 %v1304
    %2204 = vmatprep.subr.bf16.mxu0 %v1309
    %2205 = vmatpush1.bf16.msra.mxu0 %v1308
    %2206 = vmatprep.subr.bf16.mxu0 %v1313
    %2207 = vmatpush1.bf16.msra.mxu0 %v1312
    %2208 = vmatprep.subr.bf16.mxu0 %v1317
    %2209 = vmatpush1.bf16.msra.mxu0 %v1316
    %2210 = vmatprep.subr.bf16.mxu0 %v1321
    %2211 = vmatpush1.bf16.msra.mxu0 %v1320
    %2212 = vmatprep.subr.bf16.mxu0 %v1325
    %2213 = vmatpush1.bf16.msra.mxu0 %v1324
    %2214 = vmatprep.subr.bf16.mxu0 %v1329
    %2215 = vmatpush1.bf16.msra.mxu0 %v1328
    %2216 = vmatprep.mubr.bf16.mxu0 %v513
    %2217 = vmatmul.mubr.bf16.gmra.mrb[0].mxu0 %v512
    %v2218 = vpop.f32.mrb[0].mxu0
    %v2219 = vadd.f32 %v2106, %v2218
    %v2220 = vpop.f32.mrb[0].mxu0
    %v2221 = vadd.f32 %v2108, %v2220
    %v2222 = vpop.f32.mrb[0].mxu0
    %v2223 = vadd.f32 %v2110, %v2222
    %v2224 = vpop.f32.mrb[0].mxu0
    %v2225 = vadd.f32 %v2112, %v2224
    %2226 = vmatprep.mubr.bf16.mxu0 %v520
    %2227 = vmatmul.mubr.bf16.gmra.mrb[0].mxu0 %v519
    %v2228 = vpop.f32.mrb[0].mxu0
    %v2229 = vadd.f32 %v2116, %v2228
    %v2230 = vpop.f32.mrb[0].mxu0
    %v2231 = vadd.f32 %v2118, %v2230
    %v2232 = vpop.f32.mrb[0].mxu0
    %v2233 = vadd.f32 %v2120, %v2232
    %v2234 = vpop.f32.mrb[0].mxu0
    %v2235 = vadd.f32 %v2122, %v2234
    %2236 = vmatprep.mubr.bf16.mxu0 %v527
    %2237 = vmatmul.mubr.bf16.gmra.mrb[0].mxu0 %v526
    %v2238 = vpop.f32.mrb[0].mxu0
    %v2239 = vadd.f32 %v2126, %v2238
    %v2240 = vpop.f32.mrb[0].mxu0
    %v2241 = vadd.f32 %v2128, %v2240
    %v2242 = vpop.f32.mrb[0].mxu0
    %v2243 = vadd.f32 %v2130, %v2242
    %v2244 = vpop.f32.mrb[0].mxu0
    %v2245 = vadd.f32 %v2132, %v2244
    %2246 = vmatprep.mubr.bf16.mxu0 %v534
    %2247 = vmatmul.mubr.bf16.gmra.mrb[0].mxu0 %v533
    %v2248 = vpop.f32.mrb[0].mxu0
    %v2249 = vadd.f32 %v2136, %v2248
    %v2250 = vpop.f32.mrb[0].mxu0
    %v2251 = vadd.f32 %v2138, %v2250
    %v2252 = vpop.f32.mrb[0].mxu0
    %v2253 = vadd.f32 %v2140, %v2252
    %v2254 = vpop.f32.mrb[0].mxu0
    %v2255 = vadd.f32 %v2142, %v2254
    %2256 = vmatprep.mubr.bf16.mxu0 %v541
    %2257 = vmatmul.mubr.bf16.gmra.mrb[0].mxu0 %v540
    %v2258 = vpop.f32.mrb[0].mxu0
    %v2259 = vadd.f32 %v2146, %v2258
    %v2260 = vpop.f32.mrb[0].mxu0
    %v2261 = vadd.f32 %v2148, %v2260
    %v2262 = vpop.f32.mrb[0].mxu0
    %v2263 = vadd.f32 %v2150, %v2262
    %v2264 = vpop.f32.mrb[0].mxu0
    %v2265 = vadd.f32 %v2152, %v2264
    %2266 = vmatprep.mubr.bf16.mxu0 %v548
    %2267 = vmatmul.mubr.bf16.gmra.mrb[0].mxu0 %v547
    %v2268 = vpop.f32.mrb[0].mxu0
    %v2269 = vadd.f32 %v2156, %v2268
    %v2270 = vpop.f32.mrb[0].mxu0
    %v2271 = vadd.f32 %v2158, %v2270
    %v2272 = vpop.f32.mrb[0].mxu0
    %v2273 = vadd.f32 %v2160, %v2272
    %v2274 = vpop.f32.mrb[0].mxu0
    %v2275 = vadd.f32 %v2162, %v2274
    %2276 = vmatprep.mubr.bf16.mxu0 %v555
    %2277 = vmatmul.mubr.bf16.gmra.mrb[0].mxu0 %v554
    %v2278 = vpop.f32.mrb[0].mxu0
    %v2279 = vadd.f32 %v2166, %v2278
    %v2280 = vpop.f32.mrb[0].mxu0
    %v2281 = vadd.f32 %v2168, %v2280
    %v2282 = vpop.f32.mrb[0].mxu0
    %v2283 = vadd.f32 %v2170, %v2282
    %v2284 = vpop.f32.mrb[0].mxu0
    %v2285 = vadd.f32 %v2172, %v2284
    %2286 = vmatprep.mubr.bf16.mxu0 %v562
    %2287 = vmatmul.mubr.bf16.gmra.mrb[0].mxu0 %v561
    %v2288 = vpop.f32.mrb[0].mxu0
    %v2289 = vadd.f32 %v2176, %v2288
    %v2290 = vpop.f32.mrb[0].mxu0
    %v2291 = vadd.f32 %v2178, %v2290
    %v2292 = vpop.f32.mrb[0].mxu0
    %v2293 = vadd.f32 %v2180, %v2292
    %v2294 = vpop.f32.mrb[0].mxu0
    %v2295 = vadd.f32 %v2182, %v2294
    %2296 = vdwg.mxu0
    %2297 = vmatprep.subr.bf16.mxu0 %v1333
    %2298 = vmatpush1.bf16.msra.mxu0 %v1332
    %2299 = vmatprep.subr.bf16.mxu0 %v1337
    %2300 = vmatpush1.bf16.msra.mxu0 %v1336
    %2301 = vmatprep.subr.bf16.mxu0 %v1341
    %2302 = vmatpush1.bf16.msra.mxu0 %v1340
    %2303 = vmatprep.subr.bf16.mxu0 %v1345
    %2304 = vmatpush1.bf16.msra.mxu0 %v1344
    %2305 = vmatprep.subr.bf16.mxu0 %v1349
    %2306 = vmatpush1.bf16.msra.mxu0 %v1348
    %2307 = vmatprep.subr.bf16.mxu0 %v1353
    %2308 = vmatpush1.bf16.msra.mxu0 %v1352
    %2309 = vmatprep.subr.bf16.mxu0 %v1357
    %2310 = vmatpush1.bf16.msra.mxu0 %v1356
    %2311 = vmatprep.subr.bf16.mxu0 %v1361
    %2312 = vmatpush1.bf16.msra.mxu0 %v1360
    %2313 = vmatprep.subr.bf16.mxu0 %v1365
    %2314 = vmatpush1.bf16.msra.mxu0 %v1364
    %2315 = vmatprep.subr.bf16.mxu0 %v1369
    %2316 = vmatpush1.bf16.msra.mxu0 %v1368
    %2317 = vmatprep.subr.bf16.mxu0 %v1373
    %2318 = vmatpush1.bf16.msra.mxu0 %v1372
    %2319 = vmatprep.subr.bf16.mxu0 %v1377
    %2320 = vmatpush1.bf16.msra.mxu0 %v1376
    %2321 = vmatprep.subr.bf16.mxu0 %v1381
    %2322 = vmatpush1.bf16.msra.mxu0 %v1380
    %2323 = vmatprep.subr.bf16.mxu0 %v1385
    %2324 = vmatpush1.bf16.msra.mxu0 %v1384
    %2325 = vmatprep.subr.bf16.mxu0 %v1389
    %2326 = vmatpush1.bf16.msra.mxu0 %v1388
    %2327 = vmatprep.subr.bf16.mxu0 %v1393
    %2328 = vmatpush1.bf16.msra.mxu0 %v1392
    %2329 = vmatprep.mubr.bf16.mxu0 %v515
    %2330 = vmatmul.mubr.bf16.gmra.mrb[0].mxu0 %v514
    %v2331 = vpop.f32.mrb[0].mxu0
    %v2332 = vadd.f32 %v2219, %v2331
    %v2333 = vpop.f32.mrb[0].mxu0
    %v2334 = vadd.f32 %v2221, %v2333
    %v2335 = vpop.f32.mrb[0].mxu0
    %v2336 = vadd.f32 %v2223, %v2335
    %v2337 = vpop.f32.mrb[0].mxu0
    %v2338 = vadd.f32 %v2225, %v2337
    %2339 = vmatprep.mubr.bf16.mxu0 %v522
    %2340 = vmatmul.mubr.bf16.gmra.mrb[0].mxu0 %v521
    %v2341 = vpop.f32.mrb[0].mxu0
    %v2342 = vadd.f32 %v2229, %v2341
    %v2343 = vpop.f32.mrb[0].mxu0
    %v2344 = vadd.f32 %v2231, %v2343
    %v2345 = vpop.f32.mrb[0].mxu0
    %v2346 = vadd.f32 %v2233, %v2345
    %v2347 = vpop.f32.mrb[0].mxu0
    %v2348 = vadd.f32 %v2235, %v2347
    %2349 = vmatprep.mubr.bf16.mxu0 %v529
    %2350 = vmatmul.mubr.bf16.gmra.mrb[0].mxu0 %v528
    %v2351 = vpop.f32.mrb[0].mxu0
    %v2352 = vadd.f32 %v2239, %v2351
    %v2353 = vpop.f32.mrb[0].mxu0
    %v2354 = vadd.f32 %v2241, %v2353
    %v2355 = vpop.f32.mrb[0].mxu0
    %v2356 = vadd.f32 %v2243, %v2355
    %v2357 = vpop.f32.mrb[0].mxu0
    %v2358 = vadd.f32 %v2245, %v2357
    %2359 = vmatprep.mubr.bf16.mxu0 %v536
    %2360 = vmatmul.mubr.bf16.gmra.mrb[0].mxu0 %v535
    %v2361 = vpop.f32.mrb[0].mxu0
    %v2362 = vadd.f32 %v2249, %v2361
    %v2363 = vpop.f32.mrb[0].mxu0
    %v2364 = vadd.f32 %v2251, %v2363
    %v2365 = vpop.f32.mrb[0].mxu0
    %v2366 = vadd.f32 %v2253, %v2365
    %v2367 = vpop.f32.mrb[0].mxu0
    %v2368 = vadd.f32 %v2255, %v2367
    %2369 = vmatprep.mubr.bf16.mxu0 %v543
    %2370 = vmatmul.mubr.bf16.gmra.mrb[0].mxu0 %v542
    %v2371 = vpop.f32.mrb[0].mxu0
    %v2372 = vadd.f32 %v2259, %v2371
    %v2373 = vpop.f32.mrb[0].mxu0
    %v2374 = vadd.f32 %v2261, %v2373
    %v2375 = vpop.f32.mrb[0].mxu0
    %v2376 = vadd.f32 %v2263, %v2375
    %v2377 = vpop.f32.mrb[0].mxu0
    %v2378 = vadd.f32 %v2265, %v2377
    %2379 = vmatprep.mubr.bf16.mxu0 %v550
    %2380 = vmatmul.mubr.bf16.gmra.mrb[0].mxu0 %v549
    %v2381 = vpop.f32.mrb[0].mxu0
    %v2382 = vadd.f32 %v2269, %v2381
    %v2383 = vpop.f32.mrb[0].mxu0
    %v2384 = vadd.f32 %v2271, %v2383
    %v2385 = vpop.f32.mrb[0].mxu0
    %v2386 = vadd.f32 %v2273, %v2385
    %v2387 = vpop.f32.mrb[0].mxu0
    %v2388 = vadd.f32 %v2275, %v2387
    %2389 = vmatprep.mubr.bf16.mxu0 %v557
    %2390 = vmatmul.mubr.bf16.gmra.mrb[0].mxu0 %v556
    %v2391 = vpop.f32.mrb[0].mxu0
    %v2392 = vadd.f32 %v2279, %v2391
    %v2393 = vpop.f32.mrb[0].mxu0
    %v2394 = vadd.f32 %v2281, %v2393
    %v2395 = vpop.f32.mrb[0].mxu0
    %v2396 = vadd.f32 %v2283, %v2395
    %v2397 = vpop.f32.mrb[0].mxu0
    %v2398 = vadd.f32 %v2285, %v2397
    %2399 = vmatprep.mubr.bf16.mxu0 %v564
    %2400 = vmatmul.mubr.bf16.gmra.mrb[0].mxu0 %v563
    %v2401 = vpop.f32.mrb[0].mxu0
    %v2402 = vadd.f32 %v2289, %v2401
    %v2403 = vpop.f32.mrb[0].mxu0
    %v2404 = vadd.f32 %v2291, %v2403
    %v2405 = vpop.f32.mrb[0].mxu0
    %v2406 = vadd.f32 %v2293, %v2405
    %v2407 = vpop.f32.mrb[0].mxu0
    %v2408 = vadd.f32 %v2295, %v2407
    %2409 = vdwg.mxu0
    %2410 = vmatprep.subr.bf16.mxu0 %v1397
    %2411 = vmatpush1.bf16.msra.mxu0 %v1396
    %2412 = vmatprep.subr.bf16.mxu0 0
    %2413 = vmatpush1.bf16.msra.mxu0 0
    %2414 = vmatprep.subr.bf16.mxu0 0
    %2415 = vmatpush1.bf16.msra.mxu0 0
    %2416 = vmatprep.subr.bf16.mxu0 0
    %2417 = vmatpush1.bf16.msra.mxu0 0
    %2418 = vmatprep.subr.bf16.mxu0 0
    %2419 = vmatpush1.bf16.msra.mxu0 0
    %2420 = vmatprep.subr.bf16.mxu0 0
    %2421 = vmatpush1.bf16.msra.mxu0 0
    %2422 = vmatprep.subr.bf16.mxu0 0
    %2423 = vmatpush1.bf16.msra.mxu0 0
    %2424 = vmatprep.subr.bf16.mxu0 0
    %2425 = vmatpush1.bf16.msra.mxu0 0
    %2426 = vmatprep.subr.bf16.mxu0 0
    %2427 = vmatpush1.bf16.msra.mxu0 0
    %2428 = vmatprep.subr.bf16.mxu0 0
    %2429 = vmatpush1.bf16.msra.mxu0 0
    %2430 = vmatprep.subr.bf16.mxu0 0
    %2431 = vmatpush1.bf16.msra.mxu0 0
    %2432 = vmatprep.subr.bf16.mxu0 0
    %2433 = vmatpush1.bf16.msra.mxu0 0
    %2434 = vmatprep.subr.bf16.mxu0 0
    %2435 = vmatpush1.bf16.msra.mxu0 0
    %2436 = vmatprep.subr.bf16.mxu0 0
    %2437 = vmatpush1.bf16.msra.mxu0 0
    %2438 = vmatprep.subr.bf16.mxu0 0
    %2439 = vmatpush1.bf16.msra.mxu0 0
    %2440 = vmatprep.subr.bf16.mxu0 0
    %2441 = vmatpush1.bf16.msra.mxu0 0
    %2442 = vmatprep.mubr.bf16.mxu0 0
    %2443 = vmatmul.mubr.bf16.gmra.mrb[0].mxu0 %v1596
    %v2444 = vpop.f32.mrb[0].mxu0
    %v2445 = vadd.f32 %v2332, %v2444
    %v2446 = vpop.f32.mrb[0].mxu0
    %v2447 = vadd.f32 %v2334, %v2446
    %v2448 = vpop.f32.mrb[0].mxu0
    %v2449 = vadd.f32 %v2336, %v2448
    %v2450 = vpop.f32.mrb[0].mxu0
    %v2451 = vadd.f32 %v2338, %v2450
    %2452 = vmatprep.mubr.bf16.mxu0 0
    %2453 = vmatmul.mubr.bf16.gmra.mrb[0].mxu0 %v1599
    %v2454 = vpop.f32.mrb[0].mxu0
    %v2455 = vadd.f32 %v2342, %v2454
    %v2456 = vpop.f32.mrb[0].mxu0
    %v2457 = vadd.f32 %v2344, %v2456
    %v2458 = vpop.f32.mrb[0].mxu0
    %v2459 = vadd.f32 %v2346, %v2458
    %v2460 = vpop.f32.mrb[0].mxu0
    %v2461 = vadd.f32 %v2348, %v2460
    %2462 = vmatprep.mubr.bf16.mxu0 0
    %2463 = vmatmul.mubr.bf16.gmra.mrb[0].mxu0 %v1602
    %v2464 = vpop.f32.mrb[0].mxu0
    %v2465 = vadd.f32 %v2352, %v2464
    %v2466 = vpop.f32.mrb[0].mxu0
    %v2467 = vadd.f32 %v2354, %v2466
    %v2468 = vpop.f32.mrb[0].mxu0
    %v2469 = vadd.f32 %v2356, %v2468
    %v2470 = vpop.f32.mrb[0].mxu0
    %v2471 = vadd.f32 %v2358, %v2470
    %2472 = vmatprep.mubr.bf16.mxu0 0
    %2473 = vmatmul.mubr.bf16.gmra.mrb[0].mxu0 %v1605
    %v2474 = vpop.f32.mrb[0].mxu0
    %v2475 = vadd.f32 %v2362, %v2474
    %v2476 = vpop.f32.mrb[0].mxu0
    %v2477 = vadd.f32 %v2364, %v2476
    %v2478 = vpop.f32.mrb[0].mxu0
    %v2479 = vadd.f32 %v2366, %v2478
    %v2480 = vpop.f32.mrb[0].mxu0
    %v2481 = vadd.f32 %v2368, %v2480
    %2482 = vmatprep.mubr.bf16.mxu0 0
    %2483 = vmatmul.mubr.bf16.gmra.mrb[0].mxu0 %v1608
    %v2484 = vpop.f32.mrb[0].mxu0
    %v2485 = vadd.f32 %v2372, %v2484
    %v2486 = vpop.f32.mrb[0].mxu0
    %v2487 = vadd.f32 %v2374, %v2486
    %v2488 = vpop.f32.mrb[0].mxu0
    %v2489 = vadd.f32 %v2376, %v2488
    %v2490 = vpop.f32.mrb[0].mxu0
    %v2491 = vadd.f32 %v2378, %v2490
    %2492 = vmatprep.mubr.bf16.mxu0 0
    %2493 = vmatmul.mubr.bf16.gmra.mrb[0].mxu0 %v1611
    %v2494 = vpop.f32.mrb[0].mxu0
    %v2495 = vadd.f32 %v2382, %v2494
    %v2496 = vpop.f32.mrb[0].mxu0
    %v2497 = vadd.f32 %v2384, %v2496
    %v2498 = vpop.f32.mrb[0].mxu0
    %v2499 = vadd.f32 %v2386, %v2498
    %v2500 = vpop.f32.mrb[0].mxu0
    %v2501 = vadd.f32 %v2388, %v2500
    %2502 = vmatprep.mubr.bf16.mxu0 0
    %2503 = vmatmul.mubr.bf16.gmra.mrb[0].mxu0 %v1614
    %v2504 = vpop.f32.mrb[0].mxu0
    %v2505 = vadd.f32 %v2392, %v2504
    %v2506 = vpop.f32.mrb[0].mxu0
    %v2507 = vadd.f32 %v2394, %v2506
    %v2508 = vpop.f32.mrb[0].mxu0
    %v2509 = vadd.f32 %v2396, %v2508
    %v2510 = vpop.f32.mrb[0].mxu0
    %v2511 = vadd.f32 %v2398, %v2510
    %2512 = vmatprep.mubr.bf16.mxu0 0
    %2513 = vmatmul.mubr.bf16.gmra.mrb[0].mxu0 %v1617
    %v2514 = vpop.f32.mrb[0].mxu0
    %v2515 = vadd.f32 %v2402, %v2514
    %v2516 = vpop.f32.mrb[0].mxu0
    %v2517 = vadd.f32 %v2404, %v2516
    %v2518 = vpop.f32.mrb[0].mxu0
    %v2519 = vadd.f32 %v2406, %v2518
    %v2520 = vpop.f32.mrb[0].mxu0
    %v2521 = vadd.f32 %v2408, %v2520
    %2522 = vdwg.mxu0
    %v2523 = vpack.c.bf16 %v1997, %v1993
    %v2524 = vpack.c.bf16 %v1999, %v1995
    %v2525 = vpack.c.bf16 %v2449, %v2445
    %v2526 = vpack.c.bf16 %v2451, %v2447
    %v2527 = vpack.c.bf16 %v2007, %v2003
    %v2528 = vpack.c.bf16 %v2009, %v2005
    %v2529 = vpack.c.bf16 %v2459, %v2455
    %v2530 = vpack.c.bf16 %v2461, %v2457
    %v2531 = vpack.c.bf16 %v2017, %v2013
    %v2532 = vpack.c.bf16 %v2019, %v2015
    %v2533 = vpack.c.bf16 %v2469, %v2465
    %v2534 = vpack.c.bf16 %v2471, %v2467
    %v2535 = vpack.c.bf16 %v2027, %v2023
    %v2536 = vpack.c.bf16 %v2029, %v2025
    %v2537 = vpack.c.bf16 %v2479, %v2475
    %v2538 = vpack.c.bf16 %v2481, %v2477
    %v2539 = vpack.c.bf16 %v2037, %v2033
    %v2540 = vpack.c.bf16 %v2039, %v2035
    %v2541 = vpack.c.bf16 %v2489, %v2485
    %v2542 = vpack.c.bf16 %v2491, %v2487
    %v2543 = vpack.c.bf16 %v2047, %v2043
    %v2544 = vpack.c.bf16 %v2049, %v2045
    %v2545 = vpack.c.bf16 %v2499, %v2495
    %v2546 = vpack.c.bf16 %v2501, %v2497
    %v2547 = vpack.c.bf16 %v2057, %v2053
    %v2548 = vpack.c.bf16 %v2059, %v2055
    %v2549 = vpack.c.bf16 %v2509, %v2505
    %v2550 = vpack.c.bf16 %v2511, %v2507
    %v2551 = vpack.c.bf16 %v2067, %v2063
    %v2552 = vpack.c.bf16 %v2069, %v2065
    %v2553 = vpack.c.bf16 %v2519, %v2515
    %v2554 = vpack.c.bf16 %v2521, %v2517
    %v2555 = vld [vmem:[%s2] sm:$0xf]
    %v2558 = vunpack.c.l.s4 1966171168
    %v2559 = vunpack.c.0.s8 %v2558
    %v2560 = vlaneseq
    %v2561 = vshrl.u32 %v2560, 7
    %v2562 = vsub.s32 %v2559, %v2561
    %v2563 = vrot.slane %v2555, %v2562
    %v2564 = vcombine.high %v2563, %v2563
    %v2566 = vunpack.c.l.s4 1966171168
    %v2567 = vunpack.c.0.s8 %v2566
    %v2568 = vlaneseq
    %v2569 = vshrl.u32 %v2568, 7
    %v2570 = vsub.s32 %v2567, %v2569
    %v2571 = vrot.slane %v2563, %v2570
    %v2573 = vunpack.c.l.s4 1966171168
    %v2574 = vunpack.c.0.s8 %v2573
    %v2575 = vlaneseq
    %v2576 = vshrl.u32 %v2575, 7
    %v2577 = vsub.s32 %v2574, %v2576
    %v2578 = vrot.slane %v2564, %v2577
    %v2579 = vcombine.high %v2571, %v2571
    %v2580 = vcombine.high %v2578, %v2578
    %v2582 = vpack.i.b16 %v2571, %v2571
    %v2584 = vlaneseq
    %v2585 = vshrl.u32 %v2584, 7
    %v2586 = vsub.s32 0, %v2585
    %v2587 = vrot.slane %v2582, %v2586
    %v2589 = vpack.i.b16 %v2578, %v2578
    %v2591 = vlaneseq
    %v2592 = vshrl.u32 %v2591, 7
    %v2593 = vsub.s32 0, %v2592
    %v2594 = vrot.slane %v2589, %v2593
    %v2596 = vpack.i.b16 %v2579, %v2579
    %v2598 = vlaneseq
    %v2599 = vshrl.u32 %v2598, 7
    %v2600 = vsub.s32 0, %v2599
    %v2601 = vrot.slane %v2596, %v2600
    %v2603 = vpack.i.b16 %v2580, %v2580
    %v2605 = vlaneseq
    %v2606 = vshrl.u32 %v2605, 7
    %v2607 = vsub.s32 0, %v2606
    %v2608 = vrot.slane %v2603, %v2607
    %v2609 = vadd.bf16 %v2523, %v2587
    %v2610 = vadd.bf16 %v2524, %v2594
    %v2611 = vadd.bf16 %v2525, %v2601
    %v2612 = vadd.bf16 %v2526, %v2608
    %v2613 = vadd.bf16 %v2527, %v2587
    %v2614 = vadd.bf16 %v2528, %v2594
    %v2615 = vadd.bf16 %v2529, %v2601
    %v2616 = vadd.bf16 %v2530, %v2608
    %v2617 = vadd.bf16 %v2531, %v2587
    %v2618 = vadd.bf16 %v2532, %v2594
    %v2619 = vadd.bf16 %v2533, %v2601
    %v2620 = vadd.bf16 %v2534, %v2608
    %v2621 = vadd.bf16 %v2535, %v2587
    %v2622 = vadd.bf16 %v2536, %v2594
    %v2623 = vadd.bf16 %v2537, %v2601
    %v2624 = vadd.bf16 %v2538, %v2608
    %v2625 = vadd.bf16 %v2539, %v2587
    %v2626 = vadd.bf16 %v2540, %v2594
    %v2627 = vadd.bf16 %v2541, %v2601
    %v2628 = vadd.bf16 %v2542, %v2608
    %v2629 = vadd.bf16 %v2543, %v2587
    %v2630 = vadd.bf16 %v2544, %v2594
    %v2631 = vadd.bf16 %v2545, %v2601
    %v2632 = vadd.bf16 %v2546, %v2608
    %v2633 = vadd.bf16 %v2547, %v2587
    %v2634 = vadd.bf16 %v2548, %v2594
    %v2635 = vadd.bf16 %v2549, %v2601
    %v2636 = vadd.bf16 %v2550, %v2608
    %v2637 = vadd.bf16 %v2551, %v2587
    %v2638 = vadd.bf16 %v2552, %v2594
    %v2639 = vadd.bf16 %v2553, %v2601
    %v2640 = vadd.bf16 %v2554, %v2608
    %v2641 = vmax.bf16 %v2609, 0
    %v2642 = vmax.bf16 %v2610, 0
    %v2643 = vmax.bf16 %v2611, 0
    %v2644 = vmax.bf16 %v2612, 0
    %v2645 = vmax.bf16 %v2613, 0
    %v2646 = vmax.bf16 %v2614, 0
    %v2647 = vmax.bf16 %v2615, 0
    %v2648 = vmax.bf16 %v2616, 0
    %v2649 = vmax.bf16 %v2617, 0
    %v2650 = vmax.bf16 %v2618, 0
    %v2651 = vmax.bf16 %v2619, 0
    %v2652 = vmax.bf16 %v2620, 0
    %v2653 = vmax.bf16 %v2621, 0
    %v2654 = vmax.bf16 %v2622, 0
    %v2655 = vmax.bf16 %v2623, 0
    %v2656 = vmax.bf16 %v2624, 0
    %v2657 = vmax.bf16 %v2625, 0
    %v2658 = vmax.bf16 %v2626, 0
    %v2659 = vmax.bf16 %v2627, 0
    %v2660 = vmax.bf16 %v2628, 0
    %v2661 = vmax.bf16 %v2629, 0
    %v2662 = vmax.bf16 %v2630, 0
    %v2663 = vmax.bf16 %v2631, 0
    %v2664 = vmax.bf16 %v2632, 0
    %v2665 = vmax.bf16 %v2633, 0
    %v2666 = vmax.bf16 %v2634, 0
    %v2667 = vmax.bf16 %v2635, 0
    %v2668 = vmax.bf16 %v2636, 0
    %v2669 = vmax.bf16 %v2637, 0
    %v2670 = vmax.bf16 %v2638, 0
    %v2671 = vmax.bf16 %v2639, 0
    %v2672 = vmax.bf16 %v2640, 0
    %v2673 = vld [vmem:[#allocation4] sm:$0xff]
    %v2674 = vld [vmem:[#allocation4 + $0x8] sm:$0xff]
    %v2675 = vld [vmem:[#allocation4 + $0x10] sm:$0xff]
    %v2676 = vld [vmem:[#allocation4 + $0x18] sm:$0xff]
    %v2677 = vld [vmem:[#allocation4 + $0x20] sm:$0xff]
    %v2678 = vld [vmem:[#allocation4 + $0x28] sm:$0xff]
    %v2679 = vld [vmem:[#allocation4 + $0x30] sm:$0xff]
    %v2680 = vld [vmem:[#allocation4 + $0x38] sm:$0xff]
    %v2681 = vld [vmem:[#allocation4 + $0x40] sm:$0xff]
    %v2682 = vld [vmem:[#allocation4 + $0x48] sm:$0xff]
    %v2683 = vld [vmem:[#allocation4 + $0x50] sm:$0xff]
    %v2684 = vld [vmem:[#allocation4 + $0x58] sm:$0xff]
    %v2685 = vld [vmem:[#allocation4 + $0x60] sm:$0xff]
    %v2686 = vld [vmem:[#allocation4 + $0x68] sm:$0xff]
    %v2687 = vld [vmem:[#allocation4 + $0x70] sm:$0xff]
    %v2688 = vld [vmem:[#allocation4 + $0x78] sm:$0xff]
    %v2689 = vld [vmem:[#allocation4 + $0x80] sm:$0xff]
    %v2690 = vld [vmem:[#allocation4 + $0x88] sm:$0xff]
    %v2691 = vld [vmem:[#allocation4 + $0x90] sm:$0xff]
    %v2692 = vld [vmem:[#allocation4 + $0x98] sm:$0xff]
    %v2693 = vld [vmem:[#allocation4 + $0xa0] sm:$0xff]
    %v2694 = vld [vmem:[#allocation4 + $0xa8] sm:$0xff]
    %v2695 = vld [vmem:[#allocation4 + $0xb0] sm:$0xff]
    %v2696 = vld [vmem:[#allocation4 + $0xb8] sm:$0xff]
    %v2697 = vld [vmem:[#allocation4 + $0xc0] sm:$0xff]
    %v2698 = vld [vmem:[#allocation4 + $0xc8] sm:$0xff]
    %v2699 = vld [vmem:[#allocation4 + $0xd0] sm:$0xff]
    %v2700 = vld [vmem:[#allocation4 + $0xd8] sm:$0xff]
    %v2701 = vld [vmem:[#allocation4 + $0xe0] sm:$0xff]
    %v2702 = vld [vmem:[#allocation4 + $0xe8] sm:$0xff]
    %v2703 = vld [vmem:[#allocation4 + $0xf0] sm:$0xff]
    %v2704 = vld [vmem:[#allocation4 + $0xf8] sm:$0xff]
    %v2705 = vld [vmem:[#allocation4 + $0x100] sm:$0xff]
    %v2706 = vld [vmem:[#allocation4 + $0x108] sm:$0xff]
    %v2707 = vld [vmem:[#allocation4 + $0x110] sm:$0xff]
    %v2708 = vld [vmem:[#allocation4 + $0x118] sm:$0xff]
    %v2709 = vld [vmem:[#allocation4 + $0x120] sm:$0xff]
    %v2710 = vld [vmem:[#allocation4 + $0x128] sm:$0xff]
    %v2711 = vld [vmem:[#allocation4 + $0x130] sm:$0xff]
    %v2712 = vld [vmem:[#allocation4 + $0x138] sm:$0xff]
    %v2713 = vld [vmem:[#allocation4 + $0x140] sm:$0xff]
    %v2714 = vld [vmem:[#allocation4 + $0x148] sm:$0xff]
    %v2715 = vld [vmem:[#allocation4 + $0x150] sm:$0xff]
    %v2716 = vld [vmem:[#allocation4 + $0x158] sm:$0xff]
    %v2717 = vld [vmem:[#allocation4 + $0x160] sm:$0xff]
    %v2718 = vld [vmem:[#allocation4 + $0x168] sm:$0xff]
    %v2719 = vld [vmem:[#allocation4 + $0x170] sm:$0xff]
    %v2720 = vld [vmem:[#allocation4 + $0x178] sm:$0xff]
    %v2721 = vld [vmem:[#allocation4 + $0x180] sm:$0xff]
    %v2722 = vld [vmem:[#allocation4 + $0x188] sm:$0xff]
    %v2723 = vld [vmem:[#allocation4 + $0x190] sm:$0xff]
    %v2724 = vld [vmem:[#allocation4 + $0x198] sm:$0xff]
    %v2725 = vld [vmem:[#allocation4 + $0x1a0] sm:$0xff]
    %v2726 = vld [vmem:[#allocation4 + $0x1a8] sm:$0xff]
    %v2727 = vld [vmem:[#allocation4 + $0x1b0] sm:$0xff]
    %v2728 = vld [vmem:[#allocation4 + $0x1b8] sm:$0xff]
    %v2729 = vld [vmem:[#allocation4 + $0x1c0] sm:$0xff]
    %v2730 = vld [vmem:[#allocation4 + $0x1c8] sm:$0xff]
    %v2731 = vld [vmem:[#allocation4 + $0x1d0] sm:$0xff]
    %v2732 = vld [vmem:[#allocation4 + $0x1d8] sm:$0xff]
    %v2733 = vld [vmem:[#allocation4 + $0x1e0] sm:$0xff]
    %v2734 = vld [vmem:[#allocation4 + $0x1e8] sm:$0xff]
    %v2735 = vld [vmem:[#allocation4 + $0x1f0] sm:$0xff]
    %v2736 = vld [vmem:[#allocation4 + $0x1f8] sm:$0xff]
    %v2737 = vld [vmem:[#allocation4 + $0x200] sm:$0xff]
    %v2738 = vld [vmem:[#allocation4 + $0x208] sm:$0xff]
    %v2739 = vld [vmem:[#allocation4 + $0x210] sm:$0xff]
    %v2740 = vld [vmem:[#allocation4 + $0x218] sm:$0xff]
    %v2741 = vld [vmem:[#allocation4 + $0x220] sm:$0xff]
    %v2742 = vld [vmem:[#allocation4 + $0x228] sm:$0xff]
    %v2743 = vld [vmem:[#allocation4 + $0x230] sm:$0xff]
    %v2744 = vld [vmem:[#allocation4 + $0x238] sm:$0xff]
    %v2745 = vld [vmem:[#allocation4 + $0x240] sm:$0xff]
    %v2746 = vld [vmem:[#allocation4 + $0x248] sm:$0xff]
    %v2747 = vld [vmem:[#allocation4 + $0x250] sm:$0xff]
    %v2748 = vld [vmem:[#allocation4 + $0x258] sm:$0xff]
    %v2749 = vld [vmem:[#allocation4 + $0x260] sm:$0xff]
    %v2750 = vld [vmem:[#allocation4 + $0x268] sm:$0xff]
    %v2751 = vld [vmem:[#allocation4 + $0x270] sm:$0xff]
    %v2752 = vld [vmem:[#allocation4 + $0x278] sm:$0xff]
    %v2753 = vld [vmem:[#allocation4 + $0x280] sm:$0xff]
    %v2754 = vld [vmem:[#allocation4 + $0x288] sm:$0xff]
    %v2755 = vld [vmem:[#allocation4 + $0x290] sm:$0xff]
    %v2756 = vld [vmem:[#allocation4 + $0x298] sm:$0xff]
    %v2757 = vld [vmem:[#allocation4 + $0x2a0] sm:$0xff]
    %v2758 = vld [vmem:[#allocation4 + $0x2a8] sm:$0xff]
    %v2759 = vld [vmem:[#allocation4 + $0x2b0] sm:$0xff]
    %v2760 = vld [vmem:[#allocation4 + $0x2b8] sm:$0xff]
    %v2761 = vld [vmem:[#allocation4 + $0x2c0] sm:$0xff]
    %v2762 = vld [vmem:[#allocation4 + $0x2c8] sm:$0xff]
    %v2763 = vld [vmem:[#allocation4 + $0x2d0] sm:$0xff]
    %v2764 = vld [vmem:[#allocation4 + $0x2d8] sm:$0xff]
    %v2765 = vld [vmem:[#allocation4 + $0x2e0] sm:$0xff]
    %v2766 = vld [vmem:[#allocation4 + $0x2e8] sm:$0xff]
    %v2767 = vld [vmem:[#allocation4 + $0x2f0] sm:$0xff]
    %v2768 = vld [vmem:[#allocation4 + $0x2f8] sm:$0xff]
    %v2769 = vld [vmem:[#allocation4 + $0x300] sm:$0xff]
    %v2770 = vld [vmem:[#allocation4 + $0x308] sm:$0xff]
    %v2771 = vld [vmem:[#allocation4 + $0x310] sm:$0xff]
    %v2772 = vld [vmem:[#allocation4 + $0x318] sm:$0xff]
    %v2773 = vld [vmem:[#allocation4 + $0x320] sm:$0xff]
    %v2774 = vld [vmem:[#allocation4 + $0x328] sm:$0xff]
    %v2775 = vld [vmem:[#allocation4 + $0x330] sm:$0xff]
    %v2776 = vld [vmem:[#allocation4 + $0x338] sm:$0xff]
    %v2777 = vld [vmem:[#allocation4 + $0x340] sm:$0xff]
    %v2778 = vld [vmem:[#allocation4 + $0x348] sm:$0xff]
    %v2779 = vld [vmem:[#allocation4 + $0x350] sm:$0xff]
    %v2780 = vld [vmem:[#allocation4 + $0x358] sm:$0xff]
    %v2781 = vld [vmem:[#allocation4 + $0x360] sm:$0xff]
    %v2782 = vld [vmem:[#allocation4 + $0x368] sm:$0xff]
    %v2783 = vld [vmem:[#allocation4 + $0x370] sm:$0xff]
    %v2784 = vld [vmem:[#allocation4 + $0x378] sm:$0xff]
    %v2785 = vld [vmem:[#allocation4 + $0x380] sm:$0xff]
    %v2786 = vld [vmem:[#allocation4 + $0x388] sm:$0xff]
    %v2787 = vld [vmem:[#allocation4 + $0x390] sm:$0xff]
    %v2788 = vld [vmem:[#allocation4 + $0x398] sm:$0xff]
    %v2789 = vld [vmem:[#allocation4 + $0x3a0] sm:$0xff]
    %v2790 = vld [vmem:[#allocation4 + $0x3a8] sm:$0xff]
    %v2791 = vld [vmem:[#allocation4 + $0x3b0] sm:$0xff]
    %v2792 = vld [vmem:[#allocation4 + $0x3b8] sm:$0xff]
    %v2793 = vld [vmem:[#allocation4 + $0x3c0] sm:$0xff]
    %v2794 = vld [vmem:[#allocation4 + $0x3c8] sm:$0xff]
    %v2795 = vld [vmem:[#allocation4 + $0x3d0] sm:$0xff]
    %v2796 = vld [vmem:[#allocation4 + $0x3d8] sm:$0xff]
    %v2797 = vld [vmem:[#allocation4 + $0x3e0] sm:$0xff]
    %v2798 = vld [vmem:[#allocation4 + $0x3e8] sm:$0xff]
    %v2799 = vld [vmem:[#allocation4 + $0x3f0] sm:$0xff]
    %v2800 = vld [vmem:[#allocation4 + $0x3f8] sm:$0xff]
    %v2929 = vunpack.c.l.b16 %v2673
    %v2930 = vunpack.c.h.b16 %v2673
    %v2931 = vunpack.c.l.b16 %v2674
    %v2932 = vunpack.c.h.b16 %v2674
    %v2933 = vunpack.c.l.b16 %v2675
    %v2934 = vunpack.c.h.b16 %v2675
    %v2935 = vunpack.c.l.b16 %v2676
    %v2936 = vunpack.c.h.b16 %v2676
    %v2937 = vunpack.c.l.b16 %v2677
    %v2938 = vunpack.c.h.b16 %v2677
    %v2939 = vunpack.c.l.b16 %v2678
    %v2940 = vunpack.c.h.b16 %v2678
    %v2941 = vunpack.c.l.b16 %v2679
    %v2942 = vunpack.c.h.b16 %v2679
    %v2943 = vunpack.c.l.b16 %v2680
    %v2944 = vunpack.c.h.b16 %v2680
    %v2945 = vunpack.c.l.b16 %v2681
    %v2946 = vunpack.c.h.b16 %v2681
    %v2947 = vunpack.c.l.b16 %v2682
    %v2948 = vunpack.c.h.b16 %v2682
    %v2949 = vunpack.c.l.b16 %v2683
    %v2950 = vunpack.c.h.b16 %v2683
    %v2951 = vunpack.c.l.b16 %v2684
    %v2952 = vunpack.c.h.b16 %v2684
    %v2953 = vunpack.c.l.b16 %v2685
    %v2954 = vunpack.c.h.b16 %v2685
    %v2955 = vunpack.c.l.b16 %v2686
    %v2956 = vunpack.c.h.b16 %v2686
    %v2957 = vunpack.c.l.b16 %v2687
    %v2958 = vunpack.c.h.b16 %v2687
    %v2959 = vunpack.c.l.b16 %v2688
    %v2960 = vunpack.c.h.b16 %v2688
    %v2961 = vunpack.c.l.b16 %v2689
    %v2962 = vunpack.c.h.b16 %v2689
    %v2963 = vunpack.c.l.b16 %v2690
    %v2964 = vunpack.c.h.b16 %v2690
    %v2965 = vunpack.c.l.b16 %v2691
    %v2966 = vunpack.c.h.b16 %v2691
    %v2967 = vunpack.c.l.b16 %v2692
    %v2968 = vunpack.c.h.b16 %v2692
    %v2969 = vunpack.c.l.b16 %v2693
    %v2970 = vunpack.c.h.b16 %v2693
    %v2971 = vunpack.c.l.b16 %v2694
    %v2972 = vunpack.c.h.b16 %v2694
    %v2973 = vunpack.c.l.b16 %v2695
    %v2974 = vunpack.c.h.b16 %v2695
    %v2975 = vunpack.c.l.b16 %v2696
    %v2976 = vunpack.c.h.b16 %v2696
    %v2977 = vunpack.c.l.b16 %v2697
    %v2978 = vunpack.c.h.b16 %v2697
    %v2979 = vunpack.c.l.b16 %v2698
    %v2980 = vunpack.c.h.b16 %v2698
    %v2981 = vunpack.c.l.b16 %v2699
    %v2982 = vunpack.c.h.b16 %v2699
    %v2983 = vunpack.c.l.b16 %v2700
    %v2984 = vunpack.c.h.b16 %v2700
    %v2985 = vunpack.c.l.b16 %v2701
    %v2986 = vunpack.c.h.b16 %v2701
    %v2987 = vunpack.c.l.b16 %v2702
    %v2988 = vunpack.c.h.b16 %v2702
    %v2989 = vunpack.c.l.b16 %v2703
    %v2990 = vunpack.c.h.b16 %v2703
    %v2991 = vunpack.c.l.b16 %v2704
    %v2992 = vunpack.c.h.b16 %v2704
    %v2993 = vunpack.c.l.b16 %v2705
    %v2994 = vunpack.c.h.b16 %v2705
    %v2995 = vunpack.c.l.b16 %v2706
    %v2996 = vunpack.c.h.b16 %v2706
    %v2997 = vunpack.c.l.b16 %v2707
    %v2998 = vunpack.c.h.b16 %v2707
    %v2999 = vunpack.c.l.b16 %v2708
    %v3000 = vunpack.c.h.b16 %v2708
    %v3001 = vunpack.c.l.b16 %v2709
    %v3002 = vunpack.c.h.b16 %v2709
    %v3003 = vunpack.c.l.b16 %v2710
    %v3004 = vunpack.c.h.b16 %v2710
    %v3005 = vunpack.c.l.b16 %v2711
    %v3006 = vunpack.c.h.b16 %v2711
    %v3007 = vunpack.c.l.b16 %v2712
    %v3008 = vunpack.c.h.b16 %v2712
    %v3009 = vunpack.c.l.b16 %v2713
    %v3010 = vunpack.c.h.b16 %v2713
    %v3011 = vunpack.c.l.b16 %v2714
    %v3012 = vunpack.c.h.b16 %v2714
    %v3013 = vunpack.c.l.b16 %v2715
    %v3014 = vunpack.c.h.b16 %v2715
    %v3015 = vunpack.c.l.b16 %v2716
    %v3016 = vunpack.c.h.b16 %v2716
    %v3017 = vunpack.c.l.b16 %v2717
    %v3018 = vunpack.c.h.b16 %v2717
    %v3019 = vunpack.c.l.b16 %v2718
    %v3020 = vunpack.c.h.b16 %v2718
    %v3021 = vunpack.c.l.b16 %v2719
    %v3022 = vunpack.c.h.b16 %v2719
    %v3023 = vunpack.c.l.b16 %v2720
    %v3024 = vunpack.c.h.b16 %v2720
    %v3025 = vunpack.c.l.b16 %v2721
    %v3026 = vunpack.c.h.b16 %v2721
    %v3027 = vunpack.c.l.b16 %v2722
    %v3028 = vunpack.c.h.b16 %v2722
    %v3029 = vunpack.c.l.b16 %v2723
    %v3030 = vunpack.c.h.b16 %v2723
    %v3031 = vunpack.c.l.b16 %v2724
    %v3032 = vunpack.c.h.b16 %v2724
    %v3033 = vunpack.c.l.b16 %v2725
    %v3034 = vunpack.c.h.b16 %v2725
    %v3035 = vunpack.c.l.b16 %v2726
    %v3036 = vunpack.c.h.b16 %v2726
    %v3037 = vunpack.c.l.b16 %v2727
    %v3038 = vunpack.c.h.b16 %v2727
    %v3039 = vunpack.c.l.b16 %v2728
    %v3040 = vunpack.c.h.b16 %v2728
    %v3041 = vunpack.c.l.b16 %v2729
    %v3042 = vunpack.c.h.b16 %v2729
    %v3043 = vunpack.c.l.b16 %v2730
    %v3044 = vunpack.c.h.b16 %v2730
    %v3045 = vunpack.c.l.b16 %v2731
    %v3046 = vunpack.c.h.b16 %v2731
    %v3047 = vunpack.c.l.b16 %v2732
    %v3048 = vunpack.c.h.b16 %v2732
    %v3049 = vunpack.c.l.b16 %v2733
    %v3050 = vunpack.c.h.b16 %v2733
    %v3051 = vunpack.c.l.b16 %v2734
    %v3052 = vunpack.c.h.b16 %v2734
    %v3053 = vunpack.c.l.b16 %v2735
    %v3054 = vunpack.c.h.b16 %v2735
    %v3055 = vunpack.c.l.b16 %v2736
    %v3056 = vunpack.c.h.b16 %v2736
    %v3057 = vunpack.c.l.b16 %v2737
    %v3058 = vunpack.c.h.b16 %v2737
    %v3059 = vunpack.c.l.b16 %v2738
    %v3060 = vunpack.c.h.b16 %v2738
    %v3061 = vunpack.c.l.b16 %v2739
    %v3062 = vunpack.c.h.b16 %v2739
    %v3063 = vunpack.c.l.b16 %v2740
    %v3064 = vunpack.c.h.b16 %v2740
    %v3065 = vunpack.c.l.b16 %v2741
    %v3066 = vunpack.c.h.b16 %v2741
    %v3067 = vunpack.c.l.b16 %v2742
    %v3068 = vunpack.c.h.b16 %v2742
    %v3069 = vunpack.c.l.b16 %v2743
    %v3070 = vunpack.c.h.b16 %v2743
    %v3071 = vunpack.c.l.b16 %v2744
    %v3072 = vunpack.c.h.b16 %v2744
    %v3073 = vunpack.c.l.b16 %v2745
    %v3074 = vunpack.c.h.b16 %v2745
    %v3075 = vunpack.c.l.b16 %v2746
    %v3076 = vunpack.c.h.b16 %v2746
    %v3077 = vunpack.c.l.b16 %v2747
    %v3078 = vunpack.c.h.b16 %v2747
    %v3079 = vunpack.c.l.b16 %v2748
    %v3080 = vunpack.c.h.b16 %v2748
    %v3081 = vunpack.c.l.b16 %v2749
    %v3082 = vunpack.c.h.b16 %v2749
    %v3083 = vunpack.c.l.b16 %v2750
    %v3084 = vunpack.c.h.b16 %v2750
    %v3085 = vunpack.c.l.b16 %v2751
    %v3086 = vunpack.c.h.b16 %v2751
    %v3087 = vunpack.c.l.b16 %v2752
    %v3088 = vunpack.c.h.b16 %v2752
    %v3089 = vunpack.c.l.b16 %v2753
    %v3090 = vunpack.c.h.b16 %v2753
    %v3091 = vunpack.c.l.b16 %v2754
    %v3092 = vunpack.c.h.b16 %v2754
    %v3093 = vunpack.c.l.b16 %v2755
    %v3094 = vunpack.c.h.b16 %v2755
    %v3095 = vunpack.c.l.b16 %v2756
    %v3096 = vunpack.c.h.b16 %v2756
    %v3097 = vunpack.c.l.b16 %v2757
    %v3098 = vunpack.c.h.b16 %v2757
    %v3099 = vunpack.c.l.b16 %v2758
    %v3100 = vunpack.c.h.b16 %v2758
    %v3101 = vunpack.c.l.b16 %v2759
    %v3102 = vunpack.c.h.b16 %v2759
    %v3103 = vunpack.c.l.b16 %v2760
    %v3104 = vunpack.c.h.b16 %v2760
    %v3105 = vunpack.c.l.b16 %v2761
    %v3106 = vunpack.c.h.b16 %v2761
    %v3107 = vunpack.c.l.b16 %v2762
    %v3108 = vunpack.c.h.b16 %v2762
    %v3109 = vunpack.c.l.b16 %v2763
    %v3110 = vunpack.c.h.b16 %v2763
    %v3111 = vunpack.c.l.b16 %v2764
    %v3112 = vunpack.c.h.b16 %v2764
    %v3113 = vunpack.c.l.b16 %v2765
    %v3114 = vunpack.c.h.b16 %v2765
    %v3115 = vunpack.c.l.b16 %v2766
    %v3116 = vunpack.c.h.b16 %v2766
    %v3117 = vunpack.c.l.b16 %v2767
    %v3118 = vunpack.c.h.b16 %v2767
    %v3119 = vunpack.c.l.b16 %v2768
    %v3120 = vunpack.c.h.b16 %v2768
    %v3121 = vunpack.c.l.b16 %v2769
    %v3122 = vunpack.c.h.b16 %v2769
    %v3123 = vunpack.c.l.b16 %v2770
    %v3124 = vunpack.c.h.b16 %v2770
    %v3125 = vunpack.c.l.b16 %v2771
    %v3126 = vunpack.c.h.b16 %v2771
    %v3127 = vunpack.c.l.b16 %v2772
    %v3128 = vunpack.c.h.b16 %v2772
    %v3129 = vunpack.c.l.b16 %v2773
    %v3130 = vunpack.c.h.b16 %v2773
    %v3131 = vunpack.c.l.b16 %v2774
    %v3132 = vunpack.c.h.b16 %v2774
    %v3133 = vunpack.c.l.b16 %v2775
    %v3134 = vunpack.c.h.b16 %v2775
    %v3135 = vunpack.c.l.b16 %v2776
    %v3136 = vunpack.c.h.b16 %v2776
    %v3137 = vunpack.c.l.b16 %v2777
    %v3138 = vunpack.c.h.b16 %v2777
    %v3139 = vunpack.c.l.b16 %v2778
    %v3140 = vunpack.c.h.b16 %v2778
    %v3141 = vunpack.c.l.b16 %v2779
    %v3142 = vunpack.c.h.b16 %v2779
    %v3143 = vunpack.c.l.b16 %v2780
    %v3144 = vunpack.c.h.b16 %v2780
    %v3145 = vunpack.c.l.b16 %v2781
    %v3146 = vunpack.c.h.b16 %v2781
    %v3147 = vunpack.c.l.b16 %v2782
    %v3148 = vunpack.c.h.b16 %v2782
    %v3149 = vunpack.c.l.b16 %v2783
    %v3150 = vunpack.c.h.b16 %v2783
    %v3151 = vunpack.c.l.b16 %v2784
    %v3152 = vunpack.c.h.b16 %v2784
    %v3153 = vunpack.c.l.b16 %v2785
    %v3154 = vunpack.c.h.b16 %v2785
    %v3155 = vunpack.c.l.b16 %v2786
    %v3156 = vunpack.c.h.b16 %v2786
    %v3157 = vunpack.c.l.b16 %v2787
    %v3158 = vunpack.c.h.b16 %v2787
    %v3159 = vunpack.c.l.b16 %v2788
    %v3160 = vunpack.c.h.b16 %v2788
    %v3161 = vunpack.c.l.b16 %v2789
    %v3162 = vunpack.c.h.b16 %v2789
    %v3163 = vunpack.c.l.b16 %v2790
    %v3164 = vunpack.c.h.b16 %v2790
    %v3165 = vunpack.c.l.b16 %v2791
    %v3166 = vunpack.c.h.b16 %v2791
    %v3167 = vunpack.c.l.b16 %v2792
    %v3168 = vunpack.c.h.b16 %v2792
    %v3169 = vunpack.c.l.b16 %v2793
    %v3170 = vunpack.c.h.b16 %v2793
    %v3171 = vunpack.c.l.b16 %v2794
    %v3172 = vunpack.c.h.b16 %v2794
    %v3173 = vunpack.c.l.b16 %v2795
    %v3174 = vunpack.c.h.b16 %v2795
    %v3175 = vunpack.c.l.b16 %v2796
    %v3176 = vunpack.c.h.b16 %v2796
    %v3177 = vunpack.c.l.b16 %v2797
    %v3178 = vunpack.c.h.b16 %v2797
    %v3179 = vunpack.c.l.b16 %v2798
    %v3180 = vunpack.c.h.b16 %v2798
    %v3181 = vunpack.c.l.b16 %v2799
    %v3182 = vunpack.c.h.b16 %v2799
    %v3183 = vunpack.c.l.b16 %v2800
    %v3184 = vunpack.c.h.b16 %v2800
    %v3185 = vpack.c.b16 %v2933, %v2929
    %v3186 = vpack.c.b16 %v2934, %v2930
    %v3187 = vpack.c.b16 %v2935, %v2931
    %v3188 = vpack.c.b16 %v2936, %v2932
    %v3189 = vpack.c.b16 %v2941, %v2937
    %v3190 = vpack.c.b16 %v2942, %v2938
    %v3191 = vpack.c.b16 %v2943, %v2939
    %v3192 = vpack.c.b16 %v2944, %v2940
    %v3193 = vpack.c.b16 %v2949, %v2945
    %v3194 = vpack.c.b16 %v2950, %v2946
    %v3195 = vpack.c.b16 %v2951, %v2947
    %v3196 = vpack.c.b16 %v2952, %v2948
    %v3197 = vpack.c.b16 %v2957, %v2953
    %v3198 = vpack.c.b16 %v2958, %v2954
    %v3199 = vpack.c.b16 %v2959, %v2955
    %v3200 = vpack.c.b16 %v2960, %v2956
    %v3201 = vpack.c.b16 %v2965, %v2961
    %v3202 = vpack.c.b16 %v2966, %v2962
    %v3203 = vpack.c.b16 %v2967, %v2963
    %v3204 = vpack.c.b16 %v2968, %v2964
    %v3205 = vpack.c.b16 %v2973, %v2969
    %v3206 = vpack.c.b16 %v2974, %v2970
    %v3207 = vpack.c.b16 %v2975, %v2971
    %v3208 = vpack.c.b16 %v2976, %v2972
    %v3209 = vpack.c.b16 %v2981, %v2977
    %v3210 = vpack.c.b16 %v2982, %v2978
    %v3211 = vpack.c.b16 %v2983, %v2979
    %v3212 = vpack.c.b16 %v2984, %v2980
    %v3213 = vpack.c.b16 %v2989, %v2985
    %v3214 = vpack.c.b16 %v2990, %v2986
    %v3215 = vpack.c.b16 %v2991, %v2987
    %v3216 = vpack.c.b16 %v2992, %v2988
    %v3217 = vpack.c.b16 %v2997, %v2993
    %v3218 = vpack.c.b16 %v2998, %v2994
    %v3219 = vpack.c.b16 %v2999, %v2995
    %v3220 = vpack.c.b16 %v3000, %v2996
    %v3221 = vpack.c.b16 %v3005, %v3001
    %v3222 = vpack.c.b16 %v3006, %v3002
    %v3223 = vpack.c.b16 %v3007, %v3003
    %v3224 = vpack.c.b16 %v3008, %v3004
    %v3225 = vpack.c.b16 %v3013, %v3009
    %v3226 = vpack.c.b16 %v3014, %v3010
    %v3227 = vpack.c.b16 %v3015, %v3011
    %v3228 = vpack.c.b16 %v3016, %v3012
    %v3229 = vpack.c.b16 %v3021, %v3017
    %v3230 = vpack.c.b16 %v3022, %v3018
    %v3231 = vpack.c.b16 %v3023, %v3019
    %v3232 = vpack.c.b16 %v3024, %v3020
    %v3233 = vpack.c.b16 %v3029, %v3025
    %v3234 = vpack.c.b16 %v3030, %v3026
    %v3235 = vpack.c.b16 %v3031, %v3027
    %v3236 = vpack.c.b16 %v3032, %v3028
    %v3237 = vpack.c.b16 %v3037, %v3033
    %v3238 = vpack.c.b16 %v3038, %v3034
    %v3239 = vpack.c.b16 %v3039, %v3035
    %v3240 = vpack.c.b16 %v3040, %v3036
    %v3241 = vpack.c.b16 %v3045, %v3041
    %v3242 = vpack.c.b16 %v3046, %v3042
    %v3243 = vpack.c.b16 %v3047, %v3043
    %v3244 = vpack.c.b16 %v3048, %v3044
    %v3245 = vpack.c.b16 %v3053, %v3049
    %v3246 = vpack.c.b16 %v3054, %v3050
    %v3247 = vpack.c.b16 %v3055, %v3051
    %v3248 = vpack.c.b16 %v3056, %v3052
    %v3249 = vpack.c.b16 %v3061, %v3057
    %v3250 = vpack.c.b16 %v3062, %v3058
    %v3251 = vpack.c.b16 %v3063, %v3059
    %v3252 = vpack.c.b16 %v3064, %v3060
    %v3253 = vpack.c.b16 %v3069, %v3065
    %v3254 = vpack.c.b16 %v3070, %v3066
    %v3255 = vpack.c.b16 %v3071, %v3067
    %v3256 = vpack.c.b16 %v3072, %v3068
    %v3257 = vpack.c.b16 %v3077, %v3073
    %v3258 = vpack.c.b16 %v3078, %v3074
    %v3259 = vpack.c.b16 %v3079, %v3075
    %v3260 = vpack.c.b16 %v3080, %v3076
    %v3261 = vpack.c.b16 %v3085, %v3081
    %v3262 = vpack.c.b16 %v3086, %v3082
    %v3263 = vpack.c.b16 %v3087, %v3083
    %v3264 = vpack.c.b16 %v3088, %v3084
    %v3265 = vpack.c.b16 %v3093, %v3089
    %v3266 = vpack.c.b16 %v3094, %v3090
    %v3267 = vpack.c.b16 %v3095, %v3091
    %v3268 = vpack.c.b16 %v3096, %v3092
    %v3269 = vpack.c.b16 %v3101, %v3097
    %v3270 = vpack.c.b16 %v3102, %v3098
    %v3271 = vpack.c.b16 %v3103, %v3099
    %v3272 = vpack.c.b16 %v3104, %v3100
    %v3273 = vpack.c.b16 %v3109, %v3105
    %v3274 = vpack.c.b16 %v3110, %v3106
    %v3275 = vpack.c.b16 %v3111, %v3107
    %v3276 = vpack.c.b16 %v3112, %v3108
    %v3277 = vpack.c.b16 %v3117, %v3113
    %v3278 = vpack.c.b16 %v3118, %v3114
    %v3279 = vpack.c.b16 %v3119, %v3115
    %v3280 = vpack.c.b16 %v3120, %v3116
    %v3281 = vpack.c.b16 %v3125, %v3121
    %v3282 = vpack.c.b16 %v3126, %v3122
    %v3283 = vpack.c.b16 %v3127, %v3123
    %v3284 = vpack.c.b16 %v3128, %v3124
    %v3285 = vpack.c.b16 %v3133, %v3129
    %v3286 = vpack.c.b16 %v3134, %v3130
    %v3287 = vpack.c.b16 %v3135, %v3131
    %v3288 = vpack.c.b16 %v3136, %v3132
    %v3289 = vpack.c.b16 %v3141, %v3137
    %v3290 = vpack.c.b16 %v3142, %v3138
    %v3291 = vpack.c.b16 %v3143, %v3139
    %v3292 = vpack.c.b16 %v3144, %v3140
    %v3293 = vpack.c.b16 %v3149, %v3145
    %v3294 = vpack.c.b16 %v3150, %v3146
    %v3295 = vpack.c.b16 %v3151, %v3147
    %v3296 = vpack.c.b16 %v3152, %v3148
    %v3297 = vpack.c.b16 %v3157, %v3153
    %v3298 = vpack.c.b16 %v3158, %v3154
    %v3299 = vpack.c.b16 %v3159, %v3155
    %v3300 = vpack.c.b16 %v3160, %v3156
    %v3301 = vpack.c.b16 %v3165, %v3161
    %v3302 = vpack.c.b16 %v3166, %v3162
    %v3303 = vpack.c.b16 %v3167, %v3163
    %v3304 = vpack.c.b16 %v3168, %v3164
    %v3305 = vpack.c.b16 %v3173, %v3169
    %v3306 = vpack.c.b16 %v3174, %v3170
    %v3307 = vpack.c.b16 %v3175, %v3171
    %v3308 = vpack.c.b16 %v3176, %v3172
    %v3309 = vpack.c.b16 %v3181, %v3177
    %v3310 = vpack.c.b16 %v3182, %v3178
    %v3311 = vpack.c.b16 %v3183, %v3179
    %v3312 = vpack.c.b16 %v3184, %v3180
    %3441 = vmatprep.subr.bf16.mxu0 %v3186
    %3442 = vmatpush1.bf16.msra.mxu0 %v3185
    %3443 = vmatprep.subr.bf16.mxu0 %v3190
    %3444 = vmatpush1.bf16.msra.mxu0 %v3189
    %3445 = vmatprep.subr.bf16.mxu0 %v3194
    %3446 = vmatpush1.bf16.msra.mxu0 %v3193
    %3447 = vmatprep.subr.bf16.mxu0 %v3198
    %3448 = vmatpush1.bf16.msra.mxu0 %v3197
    %3449 = vmatprep.subr.bf16.mxu0 %v3202
    %3450 = vmatpush1.bf16.msra.mxu0 %v3201
    %3451 = vmatprep.subr.bf16.mxu0 %v3206
    %3452 = vmatpush1.bf16.msra.mxu0 %v3205
    %3453 = vmatprep.subr.bf16.mxu0 %v3210
    %3454 = vmatpush1.bf16.msra.mxu0 %v3209
    %3455 = vmatprep.subr.bf16.mxu0 %v3214
    %3456 = vmatpush1.bf16.msra.mxu0 %v3213
    %3457 = vmatprep.subr.bf16.mxu0 %v3218
    %3458 = vmatpush1.bf16.msra.mxu0 %v3217
    %3459 = vmatprep.subr.bf16.mxu0 %v3222
    %3460 = vmatpush1.bf16.msra.mxu0 %v3221
    %3461 = vmatprep.subr.bf16.mxu0 %v3226
    %3462 = vmatpush1.bf16.msra.mxu0 %v3225
    %3463 = vmatprep.subr.bf16.mxu0 %v3230
    %3464 = vmatpush1.bf16.msra.mxu0 %v3229
    %3465 = vmatprep.subr.bf16.mxu0 %v3234
    %3466 = vmatpush1.bf16.msra.mxu0 %v3233
    %3467 = vmatprep.subr.bf16.mxu0 %v3238
    %3468 = vmatpush1.bf16.msra.mxu0 %v3237
    %3469 = vmatprep.subr.bf16.mxu0 %v3242
    %3470 = vmatpush1.bf16.msra.mxu0 %v3241
    %3471 = vmatprep.subr.bf16.mxu0 %v3246
    %3472 = vmatpush1.bf16.msra.mxu0 %v3245
    %3473 = vmatprep.mubr.bf16.mxu0 %v2642
    %3474 = vmatmul.mubr.bf16.gmra.mrb[0].mxu0 %v2641
    %v3475 = vpop.f32.mrb[0].mxu0
    %v3476 = vadd.f32 0.0, %v3475
    %v3477 = vpop.f32.mrb[0].mxu0
    %v3478 = vadd.f32 0.0, %v3477
    %v3479 = vpop.f32.mrb[0].mxu0
    %v3480 = vadd.f32 0.0, %v3479
    %v3481 = vpop.f32.mrb[0].mxu0
    %v3482 = vadd.f32 0.0, %v3481
    %3483 = vmatprep.mubr.bf16.mxu0 %v2646
    %3484 = vmatmul.mubr.bf16.gmra.mrb[0].mxu0 %v2645
    %v3485 = vpop.f32.mrb[0].mxu0
    %v3486 = vadd.f32 0.0, %v3485
    %v3487 = vpop.f32.mrb[0].mxu0
    %v3488 = vadd.f32 0.0, %v3487
    %v3489 = vpop.f32.mrb[0].mxu0
    %v3490 = vadd.f32 0.0, %v3489
    %v3491 = vpop.f32.mrb[0].mxu0
    %v3492 = vadd.f32 0.0, %v3491
    %3493 = vmatprep.mubr.bf16.mxu0 %v2650
    %3494 = vmatmul.mubr.bf16.gmra.mrb[0].mxu0 %v2649
    %v3495 = vpop.f32.mrb[0].mxu0
    %v3496 = vadd.f32 0.0, %v3495
    %v3497 = vpop.f32.mrb[0].mxu0
    %v3498 = vadd.f32 0.0, %v3497
    %v3499 = vpop.f32.mrb[0].mxu0
    %v3500 = vadd.f32 0.0, %v3499
    %v3501 = vpop.f32.mrb[0].mxu0
    %v3502 = vadd.f32 0.0, %v3501
    %3503 = vmatprep.mubr.bf16.mxu0 %v2654
    %3504 = vmatmul.mubr.bf16.gmra.mrb[0].mxu0 %v2653
    %v3505 = vpop.f32.mrb[0].mxu0
    %v3506 = vadd.f32 0.0, %v3505
    %v3507 = vpop.f32.mrb[0].mxu0
    %v3508 = vadd.f32 0.0, %v3507
    %v3509 = vpop.f32.mrb[0].mxu0
    %v3510 = vadd.f32 0.0, %v3509
    %v3511 = vpop.f32.mrb[0].mxu0
    %v3512 = vadd.f32 0.0, %v3511
    %3513 = vmatprep.mubr.bf16.mxu0 %v2658
    %3514 = vmatmul.mubr.bf16.gmra.mrb[0].mxu0 %v2657
    %v3515 = vpop.f32.mrb[0].mxu0
    %v3516 = vadd.f32 0.0, %v3515
    %v3517 = vpop.f32.mrb[0].mxu0
    %v3518 = vadd.f32 0.0, %v3517
    %v3519 = vpop.f32.mrb[0].mxu0
    %v3520 = vadd.f32 0.0, %v3519
    %v3521 = vpop.f32.mrb[0].mxu0
    %v3522 = vadd.f32 0.0, %v3521
    %3523 = vmatprep.mubr.bf16.mxu0 %v2662
    %3524 = vmatmul.mubr.bf16.gmra.mrb[0].mxu0 %v2661
    %v3525 = vpop.f32.mrb[0].mxu0
    %v3526 = vadd.f32 0.0, %v3525
    %v3527 = vpop.f32.mrb[0].mxu0
    %v3528 = vadd.f32 0.0, %v3527
    %v3529 = vpop.f32.mrb[0].mxu0
    %v3530 = vadd.f32 0.0, %v3529
    %v3531 = vpop.f32.mrb[0].mxu0
    %v3532 = vadd.f32 0.0, %v3531
    %3533 = vmatprep.mubr.bf16.mxu0 %v2666
    %3534 = vmatmul.mubr.bf16.gmra.mrb[0].mxu0 %v2665
    %v3535 = vpop.f32.mrb[0].mxu0
    %v3536 = vadd.f32 0.0, %v3535
    %v3537 = vpop.f32.mrb[0].mxu0
    %v3538 = vadd.f32 0.0, %v3537
    %v3539 = vpop.f32.mrb[0].mxu0
    %v3540 = vadd.f32 0.0, %v3539
    %v3541 = vpop.f32.mrb[0].mxu0
    %v3542 = vadd.f32 0.0, %v3541
    %3543 = vmatprep.mubr.bf16.mxu0 %v2670
    %3544 = vmatmul.mubr.bf16.gmra.mrb[0].mxu0 %v2669
    %v3545 = vpop.f32.mrb[0].mxu0
    %v3546 = vadd.f32 0.0, %v3545
    %v3547 = vpop.f32.mrb[0].mxu0
    %v3548 = vadd.f32 0.0, %v3547
    %v3549 = vpop.f32.mrb[0].mxu0
    %v3550 = vadd.f32 0.0, %v3549
    %v3551 = vpop.f32.mrb[0].mxu0
    %v3552 = vadd.f32 0.0, %v3551
    %3553 = vdwg.mxu0
    %3554 = vmatprep.subr.bf16.mxu0 %v3250
    %3555 = vmatpush1.bf16.msra.mxu0 %v3249
    %3556 = vmatprep.subr.bf16.mxu0 %v3254
    %3557 = vmatpush1.bf16.msra.mxu0 %v3253
    %3558 = vmatprep.subr.bf16.mxu0 %v3258
    %3559 = vmatpush1.bf16.msra.mxu0 %v3257
    %3560 = vmatprep.subr.bf16.mxu0 %v3262
    %3561 = vmatpush1.bf16.msra.mxu0 %v3261
    %3562 = vmatprep.subr.bf16.mxu0 %v3266
    %3563 = vmatpush1.bf16.msra.mxu0 %v3265
    %3564 = vmatprep.subr.bf16.mxu0 %v3270
    %3565 = vmatpush1.bf16.msra.mxu0 %v3269
    %3566 = vmatprep.subr.bf16.mxu0 %v3274
    %3567 = vmatpush1.bf16.msra.mxu0 %v3273
    %3568 = vmatprep.subr.bf16.mxu0 %v3278
    %3569 = vmatpush1.bf16.msra.mxu0 %v3277
    %3570 = vmatprep.subr.bf16.mxu0 %v3282
    %3571 = vmatpush1.bf16.msra.mxu0 %v3281
    %3572 = vmatprep.subr.bf16.mxu0 %v3286
    %3573 = vmatpush1.bf16.msra.mxu0 %v3285
    %3574 = vmatprep.subr.bf16.mxu0 %v3290
    %3575 = vmatpush1.bf16.msra.mxu0 %v3289
    %3576 = vmatprep.subr.bf16.mxu0 %v3294
    %3577 = vmatpush1.bf16.msra.mxu0 %v3293
    %3578 = vmatprep.subr.bf16.mxu0 %v3298
    %3579 = vmatpush1.bf16.msra.mxu0 %v3297
    %3580 = vmatprep.subr.bf16.mxu0 %v3302
    %3581 = vmatpush1.bf16.msra.mxu0 %v3301
    %3582 = vmatprep.subr.bf16.mxu0 %v3306
    %3583 = vmatpush1.bf16.msra.mxu0 %v3305
    %3584 = vmatprep.subr.bf16.mxu0 %v3310
    %3585 = vmatpush1.bf16.msra.mxu0 %v3309
    %3586 = vmatprep.mubr.bf16.mxu0 %v2644
    %3587 = vmatmul.mubr.bf16.gmra.mrb[0].mxu0 %v2643
    %v3588 = vpop.f32.mrb[0].mxu0
    %v3589 = vadd.f32 %v3476, %v3588
    %v3590 = vpop.f32.mrb[0].mxu0
    %v3591 = vadd.f32 %v3478, %v3590
    %v3592 = vpop.f32.mrb[0].mxu0
    %v3593 = vadd.f32 %v3480, %v3592
    %v3594 = vpop.f32.mrb[0].mxu0
    %v3595 = vadd.f32 %v3482, %v3594
    %3596 = vmatprep.mubr.bf16.mxu0 %v2648
    %3597 = vmatmul.mubr.bf16.gmra.mrb[0].mxu0 %v2647
    %v3598 = vpop.f32.mrb[0].mxu0
    %v3599 = vadd.f32 %v3486, %v3598
    %v3600 = vpop.f32.mrb[0].mxu0
    %v3601 = vadd.f32 %v3488, %v3600
    %v3602 = vpop.f32.mrb[0].mxu0
    %v3603 = vadd.f32 %v3490, %v3602
    %v3604 = vpop.f32.mrb[0].mxu0
    %v3605 = vadd.f32 %v3492, %v3604
    %3606 = vmatprep.mubr.bf16.mxu0 %v2652
    %3607 = vmatmul.mubr.bf16.gmra.mrb[0].mxu0 %v2651
    %v3608 = vpop.f32.mrb[0].mxu0
    %v3609 = vadd.f32 %v3496, %v3608
    %v3610 = vpop.f32.mrb[0].mxu0
    %v3611 = vadd.f32 %v3498, %v3610
    %v3612 = vpop.f32.mrb[0].mxu0
    %v3613 = vadd.f32 %v3500, %v3612
    %v3614 = vpop.f32.mrb[0].mxu0
    %v3615 = vadd.f32 %v3502, %v3614
    %3616 = vmatprep.mubr.bf16.mxu0 %v2656
    %3617 = vmatmul.mubr.bf16.gmra.mrb[0].mxu0 %v2655
    %v3618 = vpop.f32.mrb[0].mxu0
    %v3619 = vadd.f32 %v3506, %v3618
    %v3620 = vpop.f32.mrb[0].mxu0
    %v3621 = vadd.f32 %v3508, %v3620
    %v3622 = vpop.f32.mrb[0].mxu0
    %v3623 = vadd.f32 %v3510, %v3622
    %v3624 = vpop.f32.mrb[0].mxu0
    %v3625 = vadd.f32 %v3512, %v3624
    %3626 = vmatprep.mubr.bf16.mxu0 %v2660
    %3627 = vmatmul.mubr.bf16.gmra.mrb[0].mxu0 %v2659
    %v3628 = vpop.f32.mrb[0].mxu0
    %v3629 = vadd.f32 %v3516, %v3628
    %v3630 = vpop.f32.mrb[0].mxu0
    %v3631 = vadd.f32 %v3518, %v3630
    %v3632 = vpop.f32.mrb[0].mxu0
    %v3633 = vadd.f32 %v3520, %v3632
    %v3634 = vpop.f32.mrb[0].mxu0
    %v3635 = vadd.f32 %v3522, %v3634
    %3636 = vmatprep.mubr.bf16.mxu0 %v2664
    %3637 = vmatmul.mubr.bf16.gmra.mrb[0].mxu0 %v2663
    %v3638 = vpop.f32.mrb[0].mxu0
    %v3639 = vadd.f32 %v3526, %v3638
    %v3640 = vpop.f32.mrb[0].mxu0
    %v3641 = vadd.f32 %v3528, %v3640
    %v3642 = vpop.f32.mrb[0].mxu0
    %v3643 = vadd.f32 %v3530, %v3642
    %v3644 = vpop.f32.mrb[0].mxu0
    %v3645 = vadd.f32 %v3532, %v3644
    %3646 = vmatprep.mubr.bf16.mxu0 %v2668
    %3647 = vmatmul.mubr.bf16.gmra.mrb[0].mxu0 %v2667
    %v3648 = vpop.f32.mrb[0].mxu0
    %v3649 = vadd.f32 %v3536, %v3648
    %v3650 = vpop.f32.mrb[0].mxu0
    %v3651 = vadd.f32 %v3538, %v3650
    %v3652 = vpop.f32.mrb[0].mxu0
    %v3653 = vadd.f32 %v3540, %v3652
    %v3654 = vpop.f32.mrb[0].mxu0
    %v3655 = vadd.f32 %v3542, %v3654
    %3656 = vmatprep.mubr.bf16.mxu0 %v2672
    %3657 = vmatmul.mubr.bf16.gmra.mrb[0].mxu0 %v2671
    %v3658 = vpop.f32.mrb[0].mxu0
    %v3659 = vadd.f32 %v3546, %v3658
    %v3660 = vpop.f32.mrb[0].mxu0
    %v3661 = vadd.f32 %v3548, %v3660
    %v3662 = vpop.f32.mrb[0].mxu0
    %v3663 = vadd.f32 %v3550, %v3662
    %v3664 = vpop.f32.mrb[0].mxu0
    %v3665 = vadd.f32 %v3552, %v3664
    %3666 = vdwg.mxu0
    %3667 = vmatprep.subr.bf16.mxu0 %v3188
    %3668 = vmatpush1.bf16.msra.mxu0 %v3187
    %3669 = vmatprep.subr.bf16.mxu0 %v3192
    %3670 = vmatpush1.bf16.msra.mxu0 %v3191
    %3671 = vmatprep.subr.bf16.mxu0 %v3196
    %3672 = vmatpush1.bf16.msra.mxu0 %v3195
    %3673 = vmatprep.subr.bf16.mxu0 %v3200
    %3674 = vmatpush1.bf16.msra.mxu0 %v3199
    %3675 = vmatprep.subr.bf16.mxu0 %v3204
    %3676 = vmatpush1.bf16.msra.mxu0 %v3203
    %3677 = vmatprep.subr.bf16.mxu0 %v3208
    %3678 = vmatpush1.bf16.msra.mxu0 %v3207
    %3679 = vmatprep.subr.bf16.mxu0 %v3212
    %3680 = vmatpush1.bf16.msra.mxu0 %v3211
    %3681 = vmatprep.subr.bf16.mxu0 %v3216
    %3682 = vmatpush1.bf16.msra.mxu0 %v3215
    %3683 = vmatprep.subr.bf16.mxu0 %v3220
    %3684 = vmatpush1.bf16.msra.mxu0 %v3219
    %3685 = vmatprep.subr.bf16.mxu0 %v3224
    %3686 = vmatpush1.bf16.msra.mxu0 %v3223
    %3687 = vmatprep.subr.bf16.mxu0 %v3228
    %3688 = vmatpush1.bf16.msra.mxu0 %v3227
    %3689 = vmatprep.subr.bf16.mxu0 %v3232
    %3690 = vmatpush1.bf16.msra.mxu0 %v3231
    %3691 = vmatprep.subr.bf16.mxu0 %v3236
    %3692 = vmatpush1.bf16.msra.mxu0 %v3235
    %3693 = vmatprep.subr.bf16.mxu0 %v3240
    %3694 = vmatpush1.bf16.msra.mxu0 %v3239
    %3695 = vmatprep.subr.bf16.mxu0 %v3244
    %3696 = vmatpush1.bf16.msra.mxu0 %v3243
    %3697 = vmatprep.subr.bf16.mxu0 %v3248
    %3698 = vmatpush1.bf16.msra.mxu0 %v3247
    %3699 = vmatprep.mubr.bf16.mxu0 %v2642
    %3700 = vmatmul.mubr.bf16.gmra.mrb[0].mxu0 %v2641
    %v3701 = vpop.f32.mrb[0].mxu0
    %v3702 = vadd.f32 0.0, %v3701
    %v3703 = vpop.f32.mrb[0].mxu0
    %v3704 = vadd.f32 0.0, %v3703
    %v3705 = vpop.f32.mrb[0].mxu0
    %v3706 = vadd.f32 0.0, %v3705
    %v3707 = vpop.f32.mrb[0].mxu0
    %v3708 = vadd.f32 0.0, %v3707
    %3709 = vmatprep.mubr.bf16.mxu0 %v2646
    %3710 = vmatmul.mubr.bf16.gmra.mrb[0].mxu0 %v2645
    %v3711 = vpop.f32.mrb[0].mxu0
    %v3712 = vadd.f32 0.0, %v3711
    %v3713 = vpop.f32.mrb[0].mxu0
    %v3714 = vadd.f32 0.0, %v3713
    %v3715 = vpop.f32.mrb[0].mxu0
    %v3716 = vadd.f32 0.0, %v3715
    %v3717 = vpop.f32.mrb[0].mxu0
    %v3718 = vadd.f32 0.0, %v3717
    %3719 = vmatprep.mubr.bf16.mxu0 %v2650
    %3720 = vmatmul.mubr.bf16.gmra.mrb[0].mxu0 %v2649
    %v3721 = vpop.f32.mrb[0].mxu0
    %v3722 = vadd.f32 0.0, %v3721
    %v3723 = vpop.f32.mrb[0].mxu0
    %v3724 = vadd.f32 0.0, %v3723
    %v3725 = vpop.f32.mrb[0].mxu0
    %v3726 = vadd.f32 0.0, %v3725
    %v3727 = vpop.f32.mrb[0].mxu0
    %v3728 = vadd.f32 0.0, %v3727
    %3729 = vmatprep.mubr.bf16.mxu0 %v2654
    %3730 = vmatmul.mubr.bf16.gmra.mrb[0].mxu0 %v2653
    %v3731 = vpop.f32.mrb[0].mxu0
    %v3732 = vadd.f32 0.0, %v3731
    %v3733 = vpop.f32.mrb[0].mxu0
    %v3734 = vadd.f32 0.0, %v3733
    %v3735 = vpop.f32.mrb[0].mxu0
    %v3736 = vadd.f32 0.0, %v3735
    %v3737 = vpop.f32.mrb[0].mxu0
    %v3738 = vadd.f32 0.0, %v3737
    %3739 = vmatprep.mubr.bf16.mxu0 %v2658
    %3740 = vmatmul.mubr.bf16.gmra.mrb[0].mxu0 %v2657
    %v3741 = vpop.f32.mrb[0].mxu0
    %v3742 = vadd.f32 0.0, %v3741
    %v3743 = vpop.f32.mrb[0].mxu0
    %v3744 = vadd.f32 0.0, %v3743
    %v3745 = vpop.f32.mrb[0].mxu0
    %v3746 = vadd.f32 0.0, %v3745
    %v3747 = vpop.f32.mrb[0].mxu0
    %v3748 = vadd.f32 0.0, %v3747
    %3749 = vmatprep.mubr.bf16.mxu0 %v2662
    %3750 = vmatmul.mubr.bf16.gmra.mrb[0].mxu0 %v2661
    %v3751 = vpop.f32.mrb[0].mxu0
    %v3752 = vadd.f32 0.0, %v3751
    %v3753 = vpop.f32.mrb[0].mxu0
    %v3754 = vadd.f32 0.0, %v3753
    %v3755 = vpop.f32.mrb[0].mxu0
    %v3756 = vadd.f32 0.0, %v3755
    %v3757 = vpop.f32.mrb[0].mxu0
    %v3758 = vadd.f32 0.0, %v3757
    %3759 = vmatprep.mubr.bf16.mxu0 %v2666
    %3760 = vmatmul.mubr.bf16.gmra.mrb[0].mxu0 %v2665
    %v3761 = vpop.f32.mrb[0].mxu0
    %v3762 = vadd.f32 0.0, %v3761
    %v3763 = vpop.f32.mrb[0].mxu0
    %v3764 = vadd.f32 0.0, %v3763
    %v3765 = vpop.f32.mrb[0].mxu0
    %v3766 = vadd.f32 0.0, %v3765
    %v3767 = vpop.f32.mrb[0].mxu0
    %v3768 = vadd.f32 0.0, %v3767
    %3769 = vmatprep.mubr.bf16.mxu0 %v2670
    %3770 = vmatmul.mubr.bf16.gmra.mrb[0].mxu0 %v2669
    %v3771 = vpop.f32.mrb[0].mxu0
    %v3772 = vadd.f32 0.0, %v3771
    %v3773 = vpop.f32.mrb[0].mxu0
    %v3774 = vadd.f32 0.0, %v3773
    %v3775 = vpop.f32.mrb[0].mxu0
    %v3776 = vadd.f32 0.0, %v3775
    %v3777 = vpop.f32.mrb[0].mxu0
    %v3778 = vadd.f32 0.0, %v3777
    %3779 = vdwg.mxu0
    %3780 = vmatprep.subr.bf16.mxu0 %v3252
    %3781 = vmatpush1.bf16.msra.mxu0 %v3251
    %3782 = vmatprep.subr.bf16.mxu0 %v3256
    %3783 = vmatpush1.bf16.msra.mxu0 %v3255
    %3784 = vmatprep.subr.bf16.mxu0 %v3260
    %3785 = vmatpush1.bf16.msra.mxu0 %v3259
    %3786 = vmatprep.subr.bf16.mxu0 %v3264
    %3787 = vmatpush1.bf16.msra.mxu0 %v3263
    %3788 = vmatprep.subr.bf16.mxu0 %v3268
    %3789 = vmatpush1.bf16.msra.mxu0 %v3267
    %3790 = vmatprep.subr.bf16.mxu0 %v3272
    %3791 = vmatpush1.bf16.msra.mxu0 %v3271
    %3792 = vmatprep.subr.bf16.mxu0 %v3276
    %3793 = vmatpush1.bf16.msra.mxu0 %v3275
    %3794 = vmatprep.subr.bf16.mxu0 %v3280
    %3795 = vmatpush1.bf16.msra.mxu0 %v3279
    %3796 = vmatprep.subr.bf16.mxu0 %v3284
    %3797 = vmatpush1.bf16.msra.mxu0 %v3283
    %3798 = vmatprep.subr.bf16.mxu0 %v3288
    %3799 = vmatpush1.bf16.msra.mxu0 %v3287
    %3800 = vmatprep.subr.bf16.mxu0 %v3292
    %3801 = vmatpush1.bf16.msra.mxu0 %v3291
    %3802 = vmatprep.subr.bf16.mxu0 %v3296
    %3803 = vmatpush1.bf16.msra.mxu0 %v3295
    %3804 = vmatprep.subr.bf16.mxu0 %v3300
    %3805 = vmatpush1.bf16.msra.mxu0 %v3299
    %3806 = vmatprep.subr.bf16.mxu0 %v3304
    %3807 = vmatpush1.bf16.msra.mxu0 %v3303
    %3808 = vmatprep.subr.bf16.mxu0 %v3308
    %3809 = vmatpush1.bf16.msra.mxu0 %v3307
    %3810 = vmatprep.subr.bf16.mxu0 %v3312
    %3811 = vmatpush1.bf16.msra.mxu0 %v3311
    %3812 = vmatprep.mubr.bf16.mxu0 %v2644
    %3813 = vmatmul.mubr.bf16.gmra.mrb[0].mxu0 %v2643
    %v3814 = vpop.f32.mrb[0].mxu0
    %v3815 = vadd.f32 %v3702, %v3814
    %v3816 = vpop.f32.mrb[0].mxu0
    %v3817 = vadd.f32 %v3704, %v3816
    %v3818 = vpop.f32.mrb[0].mxu0
    %v3819 = vadd.f32 %v3706, %v3818
    %v3820 = vpop.f32.mrb[0].mxu0
    %v3821 = vadd.f32 %v3708, %v3820
    %3822 = vmatprep.mubr.bf16.mxu0 %v2648
    %3823 = vmatmul.mubr.bf16.gmra.mrb[0].mxu0 %v2647
    %v3824 = vpop.f32.mrb[0].mxu0
    %v3825 = vadd.f32 %v3712, %v3824
    %v3826 = vpop.f32.mrb[0].mxu0
    %v3827 = vadd.f32 %v3714, %v3826
    %v3828 = vpop.f32.mrb[0].mxu0
    %v3829 = vadd.f32 %v3716, %v3828
    %v3830 = vpop.f32.mrb[0].mxu0
    %v3831 = vadd.f32 %v3718, %v3830
    %3832 = vmatprep.mubr.bf16.mxu0 %v2652
    %3833 = vmatmul.mubr.bf16.gmra.mrb[0].mxu0 %v2651
    %v3834 = vpop.f32.mrb[0].mxu0
    %v3835 = vadd.f32 %v3722, %v3834
    %v3836 = vpop.f32.mrb[0].mxu0
    %v3837 = vadd.f32 %v3724, %v3836
    %v3838 = vpop.f32.mrb[0].mxu0
    %v3839 = vadd.f32 %v3726, %v3838
    %v3840 = vpop.f32.mrb[0].mxu0
    %v3841 = vadd.f32 %v3728, %v3840
    %3842 = vmatprep.mubr.bf16.mxu0 %v2656
    %3843 = vmatmul.mubr.bf16.gmra.mrb[0].mxu0 %v2655
    %v3844 = vpop.f32.mrb[0].mxu0
    %v3845 = vadd.f32 %v3732, %v3844
    %v3846 = vpop.f32.mrb[0].mxu0
    %v3847 = vadd.f32 %v3734, %v3846
    %v3848 = vpop.f32.mrb[0].mxu0
    %v3849 = vadd.f32 %v3736, %v3848
    %v3850 = vpop.f32.mrb[0].mxu0
    %v3851 = vadd.f32 %v3738, %v3850
    %3852 = vmatprep.mubr.bf16.mxu0 %v2660
    %3853 = vmatmul.mubr.bf16.gmra.mrb[0].mxu0 %v2659
    %v3854 = vpop.f32.mrb[0].mxu0
    %v3855 = vadd.f32 %v3742, %v3854
    %v3856 = vpop.f32.mrb[0].mxu0
    %v3857 = vadd.f32 %v3744, %v3856
    %v3858 = vpop.f32.mrb[0].mxu0
    %v3859 = vadd.f32 %v3746, %v3858
    %v3860 = vpop.f32.mrb[0].mxu0
    %v3861 = vadd.f32 %v3748, %v3860
    %3862 = vmatprep.mubr.bf16.mxu0 %v2664
    %3863 = vmatmul.mubr.bf16.gmra.mrb[0].mxu0 %v2663
    %v3864 = vpop.f32.mrb[0].mxu0
    %v3865 = vadd.f32 %v3752, %v3864
    %v3866 = vpop.f32.mrb[0].mxu0
    %v3867 = vadd.f32 %v3754, %v3866
    %v3868 = vpop.f32.mrb[0].mxu0
    %v3869 = vadd.f32 %v3756, %v3868
    %v3870 = vpop.f32.mrb[0].mxu0
    %v3871 = vadd.f32 %v3758, %v3870
    %3872 = vmatprep.mubr.bf16.mxu0 %v2668
    %3873 = vmatmul.mubr.bf16.gmra.mrb[0].mxu0 %v2667
    %v3874 = vpop.f32.mrb[0].mxu0
    %v3875 = vadd.f32 %v3762, %v3874
    %v3876 = vpop.f32.mrb[0].mxu0
    %v3877 = vadd.f32 %v3764, %v3876
    %v3878 = vpop.f32.mrb[0].mxu0
    %v3879 = vadd.f32 %v3766, %v3878
    %v3880 = vpop.f32.mrb[0].mxu0
    %v3881 = vadd.f32 %v3768, %v3880
    %3882 = vmatprep.mubr.bf16.mxu0 %v2672
    %3883 = vmatmul.mubr.bf16.gmra.mrb[0].mxu0 %v2671
    %v3884 = vpop.f32.mrb[0].mxu0
    %v3885 = vadd.f32 %v3772, %v3884
    %v3886 = vpop.f32.mrb[0].mxu0
    %v3887 = vadd.f32 %v3774, %v3886
    %v3888 = vpop.f32.mrb[0].mxu0
    %v3889 = vadd.f32 %v3776, %v3888
    %v3890 = vpop.f32.mrb[0].mxu0
    %v3891 = vadd.f32 %v3778, %v3890
    %3892 = vdwg.mxu0
    %v3893 = vpack.c.bf16 %v3593, %v3589
    %v3894 = vpack.c.bf16 %v3595, %v3591
    %v3895 = vpack.c.bf16 %v3819, %v3815
    %v3896 = vpack.c.bf16 %v3821, %v3817
    %v3897 = vpack.c.bf16 %v3603, %v3599
    %v3898 = vpack.c.bf16 %v3605, %v3601
    %v3899 = vpack.c.bf16 %v3829, %v3825
    %v3900 = vpack.c.bf16 %v3831, %v3827
    %v3901 = vpack.c.bf16 %v3613, %v3609
    %v3902 = vpack.c.bf16 %v3615, %v3611
    %v3903 = vpack.c.bf16 %v3839, %v3835
    %v3904 = vpack.c.bf16 %v3841, %v3837
    %v3905 = vpack.c.bf16 %v3623, %v3619
    %v3906 = vpack.c.bf16 %v3625, %v3621
    %v3907 = vpack.c.bf16 %v3849, %v3845
    %v3908 = vpack.c.bf16 %v3851, %v3847
    %v3909 = vpack.c.bf16 %v3633, %v3629
    %v3910 = vpack.c.bf16 %v3635, %v3631
    %v3911 = vpack.c.bf16 %v3859, %v3855
    %v3912 = vpack.c.bf16 %v3861, %v3857
    %v3913 = vpack.c.bf16 %v3643, %v3639
    %v3914 = vpack.c.bf16 %v3645, %v3641
    %v3915 = vpack.c.bf16 %v3869, %v3865
    %v3916 = vpack.c.bf16 %v3871, %v3867
    %v3917 = vpack.c.bf16 %v3653, %v3649
    %v3918 = vpack.c.bf16 %v3655, %v3651
    %v3919 = vpack.c.bf16 %v3879, %v3875
    %v3920 = vpack.c.bf16 %v3881, %v3877
    %v3921 = vpack.c.bf16 %v3663, %v3659
    %v3922 = vpack.c.bf16 %v3665, %v3661
    %v3923 = vpack.c.bf16 %v3889, %v3885
    %v3924 = vpack.c.bf16 %v3891, %v3887
    %v3925 = vld [vmem:[%s4] sm:$0xf]
    %v3928 = vunpack.c.l.s4 1966171168
    %v3929 = vunpack.c.0.s8 %v3928
    %v3930 = vlaneseq
    %v3931 = vshrl.u32 %v3930, 7
    %v3932 = vsub.s32 %v3929, %v3931
    %v3933 = vrot.slane %v3925, %v3932
    %v3934 = vcombine.high %v3933, %v3933
    %v3936 = vunpack.c.l.s4 1966171168
    %v3937 = vunpack.c.0.s8 %v3936
    %v3938 = vlaneseq
    %v3939 = vshrl.u32 %v3938, 7
    %v3940 = vsub.s32 %v3937, %v3939
    %v3941 = vrot.slane %v3933, %v3940
    %v3943 = vunpack.c.l.s4 1966171168
    %v3944 = vunpack.c.0.s8 %v3943
    %v3945 = vlaneseq
    %v3946 = vshrl.u32 %v3945, 7
    %v3947 = vsub.s32 %v3944, %v3946
    %v3948 = vrot.slane %v3934, %v3947
    %v3949 = vcombine.high %v3941, %v3941
    %v3950 = vcombine.high %v3948, %v3948
    %v3952 = vpack.i.b16 %v3941, %v3941
    %v3954 = vlaneseq
    %v3955 = vshrl.u32 %v3954, 7
    %v3956 = vsub.s32 0, %v3955
    %v3957 = vrot.slane %v3952, %v3956
    %v3959 = vpack.i.b16 %v3948, %v3948
    %v3961 = vlaneseq
    %v3962 = vshrl.u32 %v3961, 7
    %v3963 = vsub.s32 0, %v3962
    %v3964 = vrot.slane %v3959, %v3963
    %v3966 = vpack.i.b16 %v3949, %v3949
    %v3968 = vlaneseq
    %v3969 = vshrl.u32 %v3968, 7
    %v3970 = vsub.s32 0, %v3969
    %v3971 = vrot.slane %v3966, %v3970
    %v3973 = vpack.i.b16 %v3950, %v3950
    %v3975 = vlaneseq
    %v3976 = vshrl.u32 %v3975, 7
    %v3977 = vsub.s32 0, %v3976
    %v3978 = vrot.slane %v3973, %v3977
    %v3979 = vadd.bf16 %v3893, %v3957
    %v3980 = vadd.bf16 %v3894, %v3964
    %v3981 = vadd.bf16 %v3895, %v3971
    %v3982 = vadd.bf16 %v3896, %v3978
    %v3983 = vadd.bf16 %v3897, %v3957
    %v3984 = vadd.bf16 %v3898, %v3964
    %v3985 = vadd.bf16 %v3899, %v3971
    %v3986 = vadd.bf16 %v3900, %v3978
    %v3987 = vadd.bf16 %v3901, %v3957
    %v3988 = vadd.bf16 %v3902, %v3964
    %v3989 = vadd.bf16 %v3903, %v3971
    %v3990 = vadd.bf16 %v3904, %v3978
    %v3991 = vadd.bf16 %v3905, %v3957
    %v3992 = vadd.bf16 %v3906, %v3964
    %v3993 = vadd.bf16 %v3907, %v3971
    %v3994 = vadd.bf16 %v3908, %v3978
    %v3995 = vadd.bf16 %v3909, %v3957
    %v3996 = vadd.bf16 %v3910, %v3964
    %v3997 = vadd.bf16 %v3911, %v3971
    %v3998 = vadd.bf16 %v3912, %v3978
    %v3999 = vadd.bf16 %v3913, %v3957
    %v4000 = vadd.bf16 %v3914, %v3964
    %v4001 = vadd.bf16 %v3915, %v3971
    %v4002 = vadd.bf16 %v3916, %v3978
    %v4003 = vadd.bf16 %v3917, %v3957
    %v4004 = vadd.bf16 %v3918, %v3964
    %v4005 = vadd.bf16 %v3919, %v3971
    %v4006 = vadd.bf16 %v3920, %v3978
    %v4007 = vadd.bf16 %v3921, %v3957
    %v4008 = vadd.bf16 %v3922, %v3964
    %v4009 = vadd.bf16 %v3923, %v3971
    %v4010 = vadd.bf16 %v3924, %v3978
    %v4011 = vmax.bf16 %v3979, 0
    %v4012 = vmax.bf16 %v3980, 0
    %v4013 = vmax.bf16 %v3981, 0
    %v4014 = vmax.bf16 %v3982, 0
    %v4015 = vmax.bf16 %v3983, 0
    %v4016 = vmax.bf16 %v3984, 0
    %v4017 = vmax.bf16 %v3985, 0
    %v4018 = vmax.bf16 %v3986, 0
    %v4019 = vmax.bf16 %v3987, 0
    %v4020 = vmax.bf16 %v3988, 0
    %v4021 = vmax.bf16 %v3989, 0
    %v4022 = vmax.bf16 %v3990, 0
    %v4023 = vmax.bf16 %v3991, 0
    %v4024 = vmax.bf16 %v3992, 0
    %v4025 = vmax.bf16 %v3993, 0
    %v4026 = vmax.bf16 %v3994, 0
    %v4027 = vmax.bf16 %v3995, 0
    %v4028 = vmax.bf16 %v3996, 0
    %v4029 = vmax.bf16 %v3997, 0
    %v4030 = vmax.bf16 %v3998, 0
    %v4031 = vmax.bf16 %v3999, 0
    %v4032 = vmax.bf16 %v4000, 0
    %v4033 = vmax.bf16 %v4001, 0
    %v4034 = vmax.bf16 %v4002, 0
    %v4035 = vmax.bf16 %v4003, 0
    %v4036 = vmax.bf16 %v4004, 0
    %v4037 = vmax.bf16 %v4005, 0
    %v4038 = vmax.bf16 %v4006, 0
    %v4039 = vmax.bf16 %v4007, 0
    %v4040 = vmax.bf16 %v4008, 0
    %v4041 = vmax.bf16 %v4009, 0
    %v4042 = vmax.bf16 %v4010, 0
    %v4043 = vld [vmem:[#allocation6] sm:$0xff]
    %v4044 = vld [vmem:[#allocation6 + $0x8] sm:$0xff]
    %v4045 = vld [vmem:[#allocation6 + $0x10] sm:$0xff]
    %v4046 = vld [vmem:[#allocation6 + $0x18] sm:$0xff]
    %v4047 = vld [vmem:[#allocation6 + $0x20] sm:$0xff]
    %v4048 = vld [vmem:[#allocation6 + $0x28] sm:$0xff]
    %v4049 = vld [vmem:[#allocation6 + $0x30] sm:$0xff]
    %v4050 = vld [vmem:[#allocation6 + $0x38] sm:$0xff]
    %v4051 = vld [vmem:[#allocation6 + $0x40] sm:$0xff]
    %v4052 = vld [vmem:[#allocation6 + $0x48] sm:$0xff]
    %v4053 = vld [vmem:[#allocation6 + $0x50] sm:$0xff]
    %v4054 = vld [vmem:[#allocation6 + $0x58] sm:$0xff]
    %v4055 = vld [vmem:[#allocation6 + $0x60] sm:$0xff]
    %v4056 = vld [vmem:[#allocation6 + $0x68] sm:$0xff]
    %v4057 = vld [vmem:[#allocation6 + $0x70] sm:$0xff]
    %v4058 = vld [vmem:[#allocation6 + $0x78] sm:$0xff]
    %v4059 = vld [vmem:[#allocation6 + $0x80] sm:$0xff]
    %v4060 = vld [vmem:[#allocation6 + $0x88] sm:$0xff]
    %v4061 = vld [vmem:[#allocation6 + $0x90] sm:$0xff]
    %v4062 = vld [vmem:[#allocation6 + $0x98] sm:$0xff]
    %v4063 = vld [vmem:[#allocation6 + $0xa0] sm:$0xff]
    %v4064 = vld [vmem:[#allocation6 + $0xa8] sm:$0xff]
    %v4065 = vld [vmem:[#allocation6 + $0xb0] sm:$0xff]
    %v4066 = vld [vmem:[#allocation6 + $0xb8] sm:$0xff]
    %v4067 = vld [vmem:[#allocation6 + $0xc0] sm:$0xff]
    %v4068 = vld [vmem:[#allocation6 + $0xc8] sm:$0xff]
    %v4069 = vld [vmem:[#allocation6 + $0xd0] sm:$0xff]
    %v4070 = vld [vmem:[#allocation6 + $0xd8] sm:$0xff]
    %v4071 = vld [vmem:[#allocation6 + $0xe0] sm:$0xff]
    %v4072 = vld [vmem:[#allocation6 + $0xe8] sm:$0xff]
    %v4073 = vld [vmem:[#allocation6 + $0xf0] sm:$0xff]
    %v4074 = vld [vmem:[#allocation6 + $0xf8] sm:$0xff]
    %v4075 = vld [vmem:[#allocation6 + $0x100] sm:$0xff]
    %v4076 = vld [vmem:[#allocation6 + $0x108] sm:$0xff]
    %v4077 = vld [vmem:[#allocation6 + $0x110] sm:$0xff]
    %v4078 = vld [vmem:[#allocation6 + $0x118] sm:$0xff]
    %v4079 = vld [vmem:[#allocation6 + $0x120] sm:$0xff]
    %v4080 = vld [vmem:[#allocation6 + $0x128] sm:$0xff]
    %v4081 = vld [vmem:[#allocation6 + $0x130] sm:$0xff]
    %v4082 = vld [vmem:[#allocation6 + $0x138] sm:$0xff]
    %v4083 = vld [vmem:[#allocation6 + $0x140] sm:$0xff]
    %v4084 = vld [vmem:[#allocation6 + $0x148] sm:$0xff]
    %v4085 = vld [vmem:[#allocation6 + $0x150] sm:$0xff]
    %v4086 = vld [vmem:[#allocation6 + $0x158] sm:$0xff]
    %v4087 = vld [vmem:[#allocation6 + $0x160] sm:$0xff]
    %v4088 = vld [vmem:[#allocation6 + $0x168] sm:$0xff]
    %v4089 = vld [vmem:[#allocation6 + $0x170] sm:$0xff]
    %v4090 = vld [vmem:[#allocation6 + $0x178] sm:$0xff]
    %v4091 = vld [vmem:[#allocation6 + $0x180] sm:$0xff]
    %v4092 = vld [vmem:[#allocation6 + $0x188] sm:$0xff]
    %v4093 = vld [vmem:[#allocation6 + $0x190] sm:$0xff]
    %v4094 = vld [vmem:[#allocation6 + $0x198] sm:$0xff]
    %v4095 = vld [vmem:[#allocation6 + $0x1a0] sm:$0xff]
    %v4096 = vld [vmem:[#allocation6 + $0x1a8] sm:$0xff]
    %v4097 = vld [vmem:[#allocation6 + $0x1b0] sm:$0xff]
    %v4098 = vld [vmem:[#allocation6 + $0x1b8] sm:$0xff]
    %v4099 = vld [vmem:[#allocation6 + $0x1c0] sm:$0xff]
    %v4100 = vld [vmem:[#allocation6 + $0x1c8] sm:$0xff]
    %v4101 = vld [vmem:[#allocation6 + $0x1d0] sm:$0xff]
    %v4102 = vld [vmem:[#allocation6 + $0x1d8] sm:$0xff]
    %v4103 = vld [vmem:[#allocation6 + $0x1e0] sm:$0xff]
    %v4104 = vld [vmem:[#allocation6 + $0x1e8] sm:$0xff]
    %v4105 = vld [vmem:[#allocation6 + $0x1f0] sm:$0xff]
    %v4106 = vld [vmem:[#allocation6 + $0x1f8] sm:$0xff]
    %v4107 = vld [vmem:[#allocation6 + $0x200] sm:$0xff]
    %v4108 = vld [vmem:[#allocation6 + $0x208] sm:$0xff]
    %v4109 = vld [vmem:[#allocation6 + $0x210] sm:$0xff]
    %v4110 = vld [vmem:[#allocation6 + $0x218] sm:$0xff]
    %v4111 = vld [vmem:[#allocation6 + $0x220] sm:$0xff]
    %v4112 = vld [vmem:[#allocation6 + $0x228] sm:$0xff]
    %v4113 = vld [vmem:[#allocation6 + $0x230] sm:$0xff]
    %v4114 = vld [vmem:[#allocation6 + $0x238] sm:$0xff]
    %v4115 = vld [vmem:[#allocation6 + $0x240] sm:$0xff]
    %v4116 = vld [vmem:[#allocation6 + $0x248] sm:$0xff]
    %v4117 = vld [vmem:[#allocation6 + $0x250] sm:$0xff]
    %v4118 = vld [vmem:[#allocation6 + $0x258] sm:$0xff]
    %v4119 = vld [vmem:[#allocation6 + $0x260] sm:$0xff]
    %v4120 = vld [vmem:[#allocation6 + $0x268] sm:$0xff]
    %v4121 = vld [vmem:[#allocation6 + $0x270] sm:$0xff]
    %v4122 = vld [vmem:[#allocation6 + $0x278] sm:$0xff]
    %v4123 = vld [vmem:[#allocation6 + $0x280] sm:$0xff]
    %v4124 = vld [vmem:[#allocation6 + $0x288] sm:$0xff]
    %v4125 = vld [vmem:[#allocation6 + $0x290] sm:$0xff]
    %v4126 = vld [vmem:[#allocation6 + $0x298] sm:$0xff]
    %v4127 = vld [vmem:[#allocation6 + $0x2a0] sm:$0xff]
    %v4128 = vld [vmem:[#allocation6 + $0x2a8] sm:$0xff]
    %v4129 = vld [vmem:[#allocation6 + $0x2b0] sm:$0xff]
    %v4130 = vld [vmem:[#allocation6 + $0x2b8] sm:$0xff]
    %v4131 = vld [vmem:[#allocation6 + $0x2c0] sm:$0xff]
    %v4132 = vld [vmem:[#allocation6 + $0x2c8] sm:$0xff]
    %v4133 = vld [vmem:[#allocation6 + $0x2d0] sm:$0xff]
    %v4134 = vld [vmem:[#allocation6 + $0x2d8] sm:$0xff]
    %v4135 = vld [vmem:[#allocation6 + $0x2e0] sm:$0xff]
    %v4136 = vld [vmem:[#allocation6 + $0x2e8] sm:$0xff]
    %v4137 = vld [vmem:[#allocation6 + $0x2f0] sm:$0xff]
    %v4138 = vld [vmem:[#allocation6 + $0x2f8] sm:$0xff]
    %v4139 = vld [vmem:[#allocation6 + $0x300] sm:$0xff]
    %v4140 = vld [vmem:[#allocation6 + $0x308] sm:$0xff]
    %v4141 = vld [vmem:[#allocation6 + $0x310] sm:$0xff]
    %v4142 = vld [vmem:[#allocation6 + $0x318] sm:$0xff]
    %v4143 = vld [vmem:[#allocation6 + $0x320] sm:$0xff]
    %v4144 = vld [vmem:[#allocation6 + $0x328] sm:$0xff]
    %v4145 = vld [vmem:[#allocation6 + $0x330] sm:$0xff]
    %v4146 = vld [vmem:[#allocation6 + $0x338] sm:$0xff]
    %v4147 = vld [vmem:[#allocation6 + $0x340] sm:$0xff]
    %v4148 = vld [vmem:[#allocation6 + $0x348] sm:$0xff]
    %v4149 = vld [vmem:[#allocation6 + $0x350] sm:$0xff]
    %v4150 = vld [vmem:[#allocation6 + $0x358] sm:$0xff]
    %v4151 = vld [vmem:[#allocation6 + $0x360] sm:$0xff]
    %v4152 = vld [vmem:[#allocation6 + $0x368] sm:$0xff]
    %v4153 = vld [vmem:[#allocation6 + $0x370] sm:$0xff]
    %v4154 = vld [vmem:[#allocation6 + $0x378] sm:$0xff]
    %v4155 = vld [vmem:[#allocation6 + $0x380] sm:$0xff]
    %v4156 = vld [vmem:[#allocation6 + $0x388] sm:$0xff]
    %v4157 = vld [vmem:[#allocation6 + $0x390] sm:$0xff]
    %v4158 = vld [vmem:[#allocation6 + $0x398] sm:$0xff]
    %v4159 = vld [vmem:[#allocation6 + $0x3a0] sm:$0xff]
    %v4160 = vld [vmem:[#allocation6 + $0x3a8] sm:$0xff]
    %v4161 = vld [vmem:[#allocation6 + $0x3b0] sm:$0xff]
    %v4162 = vld [vmem:[#allocation6 + $0x3b8] sm:$0xff]
    %v4163 = vld [vmem:[#allocation6 + $0x3c0] sm:$0xff]
    %v4164 = vld [vmem:[#allocation6 + $0x3c8] sm:$0xff]
    %v4165 = vld [vmem:[#allocation6 + $0x3d0] sm:$0xff]
    %v4166 = vld [vmem:[#allocation6 + $0x3d8] sm:$0xff]
    %v4167 = vld [vmem:[#allocation6 + $0x3e0] sm:$0xff]
    %v4168 = vld [vmem:[#allocation6 + $0x3e8] sm:$0xff]
    %v4169 = vld [vmem:[#allocation6 + $0x3f0] sm:$0xff]
    %v4170 = vld [vmem:[#allocation6 + $0x3f8] sm:$0xff]
    %v4299 = vunpack.c.l.b16 %v4043
    %v4300 = vunpack.c.h.b16 %v4043
    %v4301 = vunpack.c.l.b16 %v4044
    %v4302 = vunpack.c.h.b16 %v4044
    %v4303 = vunpack.c.l.b16 %v4045
    %v4304 = vunpack.c.h.b16 %v4045
    %v4305 = vunpack.c.l.b16 %v4046
    %v4306 = vunpack.c.h.b16 %v4046
    %v4307 = vunpack.c.l.b16 %v4047
    %v4308 = vunpack.c.h.b16 %v4047
    %v4309 = vunpack.c.l.b16 %v4048
    %v4310 = vunpack.c.h.b16 %v4048
    %v4311 = vunpack.c.l.b16 %v4049
    %v4312 = vunpack.c.h.b16 %v4049
    %v4313 = vunpack.c.l.b16 %v4050
    %v4314 = vunpack.c.h.b16 %v4050
    %v4315 = vunpack.c.l.b16 %v4051
    %v4316 = vunpack.c.h.b16 %v4051
    %v4317 = vunpack.c.l.b16 %v4052
    %v4318 = vunpack.c.h.b16 %v4052
    %v4319 = vunpack.c.l.b16 %v4053
    %v4320 = vunpack.c.h.b16 %v4053
    %v4321 = vunpack.c.l.b16 %v4054
    %v4322 = vunpack.c.h.b16 %v4054
    %v4323 = vunpack.c.l.b16 %v4055
    %v4324 = vunpack.c.h.b16 %v4055
    %v4325 = vunpack.c.l.b16 %v4056
    %v4326 = vunpack.c.h.b16 %v4056
    %v4327 = vunpack.c.l.b16 %v4057
    %v4328 = vunpack.c.h.b16 %v4057
    %v4329 = vunpack.c.l.b16 %v4058
    %v4330 = vunpack.c.h.b16 %v4058
    %v4331 = vunpack.c.l.b16 %v4059
    %v4332 = vunpack.c.h.b16 %v4059
    %v4333 = vunpack.c.l.b16 %v4060
    %v4334 = vunpack.c.h.b16 %v4060
    %v4335 = vunpack.c.l.b16 %v4061
    %v4336 = vunpack.c.h.b16 %v4061
    %v4337 = vunpack.c.l.b16 %v4062
    %v4338 = vunpack.c.h.b16 %v4062
    %v4339 = vunpack.c.l.b16 %v4063
    %v4340 = vunpack.c.h.b16 %v4063
    %v4341 = vunpack.c.l.b16 %v4064
    %v4342 = vunpack.c.h.b16 %v4064
    %v4343 = vunpack.c.l.b16 %v4065
    %v4344 = vunpack.c.h.b16 %v4065
    %v4345 = vunpack.c.l.b16 %v4066
    %v4346 = vunpack.c.h.b16 %v4066
    %v4347 = vunpack.c.l.b16 %v4067
    %v4348 = vunpack.c.h.b16 %v4067
    %v4349 = vunpack.c.l.b16 %v4068
    %v4350 = vunpack.c.h.b16 %v4068
    %v4351 = vunpack.c.l.b16 %v4069
    %v4352 = vunpack.c.h.b16 %v4069
    %v4353 = vunpack.c.l.b16 %v4070
    %v4354 = vunpack.c.h.b16 %v4070
    %v4355 = vunpack.c.l.b16 %v4071
    %v4356 = vunpack.c.h.b16 %v4071
    %v4357 = vunpack.c.l.b16 %v4072
    %v4358 = vunpack.c.h.b16 %v4072
    %v4359 = vunpack.c.l.b16 %v4073
    %v4360 = vunpack.c.h.b16 %v4073
    %v4361 = vunpack.c.l.b16 %v4074
    %v4362 = vunpack.c.h.b16 %v4074
    %v4363 = vunpack.c.l.b16 %v4075
    %v4364 = vunpack.c.h.b16 %v4075
    %v4365 = vunpack.c.l.b16 %v4076
    %v4366 = vunpack.c.h.b16 %v4076
    %v4367 = vunpack.c.l.b16 %v4077
    %v4368 = vunpack.c.h.b16 %v4077
    %v4369 = vunpack.c.l.b16 %v4078
    %v4370 = vunpack.c.h.b16 %v4078
    %v4371 = vunpack.c.l.b16 %v4079
    %v4372 = vunpack.c.h.b16 %v4079
    %v4373 = vunpack.c.l.b16 %v4080
    %v4374 = vunpack.c.h.b16 %v4080
    %v4375 = vunpack.c.l.b16 %v4081
    %v4376 = vunpack.c.h.b16 %v4081
    %v4377 = vunpack.c.l.b16 %v4082
    %v4378 = vunpack.c.h.b16 %v4082
    %v4379 = vunpack.c.l.b16 %v4083
    %v4380 = vunpack.c.h.b16 %v4083
    %v4381 = vunpack.c.l.b16 %v4084
    %v4382 = vunpack.c.h.b16 %v4084
    %v4383 = vunpack.c.l.b16 %v4085
    %v4384 = vunpack.c.h.b16 %v4085
    %v4385 = vunpack.c.l.b16 %v4086
    %v4386 = vunpack.c.h.b16 %v4086
    %v4387 = vunpack.c.l.b16 %v4087
    %v4388 = vunpack.c.h.b16 %v4087
    %v4389 = vunpack.c.l.b16 %v4088
    %v4390 = vunpack.c.h.b16 %v4088
    %v4391 = vunpack.c.l.b16 %v4089
    %v4392 = vunpack.c.h.b16 %v4089
    %v4393 = vunpack.c.l.b16 %v4090
    %v4394 = vunpack.c.h.b16 %v4090
    %v4395 = vunpack.c.l.b16 %v4091
    %v4396 = vunpack.c.h.b16 %v4091
    %v4397 = vunpack.c.l.b16 %v4092
    %v4398 = vunpack.c.h.b16 %v4092
    %v4399 = vunpack.c.l.b16 %v4093
    %v4400 = vunpack.c.h.b16 %v4093
    %v4401 = vunpack.c.l.b16 %v4094
    %v4402 = vunpack.c.h.b16 %v4094
    %v4403 = vunpack.c.l.b16 %v4095
    %v4404 = vunpack.c.h.b16 %v4095
    %v4405 = vunpack.c.l.b16 %v4096
    %v4406 = vunpack.c.h.b16 %v4096
    %v4407 = vunpack.c.l.b16 %v4097
    %v4408 = vunpack.c.h.b16 %v4097
    %v4409 = vunpack.c.l.b16 %v4098
    %v4410 = vunpack.c.h.b16 %v4098
    %v4411 = vunpack.c.l.b16 %v4099
    %v4412 = vunpack.c.h.b16 %v4099
    %v4413 = vunpack.c.l.b16 %v4100
    %v4414 = vunpack.c.h.b16 %v4100
    %v4415 = vunpack.c.l.b16 %v4101
    %v4416 = vunpack.c.h.b16 %v4101
    %v4417 = vunpack.c.l.b16 %v4102
    %v4418 = vunpack.c.h.b16 %v4102
    %v4419 = vunpack.c.l.b16 %v4103
    %v4420 = vunpack.c.h.b16 %v4103
    %v4421 = vunpack.c.l.b16 %v4104
    %v4422 = vunpack.c.h.b16 %v4104
    %v4423 = vunpack.c.l.b16 %v4105
    %v4424 = vunpack.c.h.b16 %v4105
    %v4425 = vunpack.c.l.b16 %v4106
    %v4426 = vunpack.c.h.b16 %v4106
    %v4427 = vunpack.c.l.b16 %v4107
    %v4428 = vunpack.c.h.b16 %v4107
    %v4429 = vunpack.c.l.b16 %v4108
    %v4430 = vunpack.c.h.b16 %v4108
    %v4431 = vunpack.c.l.b16 %v4109
    %v4432 = vunpack.c.h.b16 %v4109
    %v4433 = vunpack.c.l.b16 %v4110
    %v4434 = vunpack.c.h.b16 %v4110
    %v4435 = vunpack.c.l.b16 %v4111
    %v4436 = vunpack.c.h.b16 %v4111
    %v4437 = vunpack.c.l.b16 %v4112
    %v4438 = vunpack.c.h.b16 %v4112
    %v4439 = vunpack.c.l.b16 %v4113
    %v4440 = vunpack.c.h.b16 %v4113
    %v4441 = vunpack.c.l.b16 %v4114
    %v4442 = vunpack.c.h.b16 %v4114
    %v4443 = vunpack.c.l.b16 %v4115
    %v4444 = vunpack.c.h.b16 %v4115
    %v4445 = vunpack.c.l.b16 %v4116
    %v4446 = vunpack.c.h.b16 %v4116
    %v4447 = vunpack.c.l.b16 %v4117
    %v4448 = vunpack.c.h.b16 %v4117
    %v4449 = vunpack.c.l.b16 %v4118
    %v4450 = vunpack.c.h.b16 %v4118
    %v4451 = vunpack.c.l.b16 %v4119
    %v4452 = vunpack.c.h.b16 %v4119
    %v4453 = vunpack.c.l.b16 %v4120
    %v4454 = vunpack.c.h.b16 %v4120
    %v4455 = vunpack.c.l.b16 %v4121
    %v4456 = vunpack.c.h.b16 %v4121
    %v4457 = vunpack.c.l.b16 %v4122
    %v4458 = vunpack.c.h.b16 %v4122
    %v4459 = vunpack.c.l.b16 %v4123
    %v4460 = vunpack.c.h.b16 %v4123
    %v4461 = vunpack.c.l.b16 %v4124
    %v4462 = vunpack.c.h.b16 %v4124
    %v4463 = vunpack.c.l.b16 %v4125
    %v4464 = vunpack.c.h.b16 %v4125
    %v4465 = vunpack.c.l.b16 %v4126
    %v4466 = vunpack.c.h.b16 %v4126
    %v4467 = vunpack.c.l.b16 %v4127
    %v4468 = vunpack.c.h.b16 %v4127
    %v4469 = vunpack.c.l.b16 %v4128
    %v4470 = vunpack.c.h.b16 %v4128
    %v4471 = vunpack.c.l.b16 %v4129
    %v4472 = vunpack.c.h.b16 %v4129
    %v4473 = vunpack.c.l.b16 %v4130
    %v4474 = vunpack.c.h.b16 %v4130
    %v4475 = vunpack.c.l.b16 %v4131
    %v4476 = vunpack.c.h.b16 %v4131
    %v4477 = vunpack.c.l.b16 %v4132
    %v4478 = vunpack.c.h.b16 %v4132
    %v4479 = vunpack.c.l.b16 %v4133
    %v4480 = vunpack.c.h.b16 %v4133
    %v4481 = vunpack.c.l.b16 %v4134
    %v4482 = vunpack.c.h.b16 %v4134
    %v4483 = vunpack.c.l.b16 %v4135
    %v4484 = vunpack.c.h.b16 %v4135
    %v4485 = vunpack.c.l.b16 %v4136
    %v4486 = vunpack.c.h.b16 %v4136
    %v4487 = vunpack.c.l.b16 %v4137
    %v4488 = vunpack.c.h.b16 %v4137
    %v4489 = vunpack.c.l.b16 %v4138
    %v4490 = vunpack.c.h.b16 %v4138
    %v4491 = vunpack.c.l.b16 %v4139
    %v4492 = vunpack.c.h.b16 %v4139
    %v4493 = vunpack.c.l.b16 %v4140
    %v4494 = vunpack.c.h.b16 %v4140
    %v4495 = vunpack.c.l.b16 %v4141
    %v4496 = vunpack.c.h.b16 %v4141
    %v4497 = vunpack.c.l.b16 %v4142
    %v4498 = vunpack.c.h.b16 %v4142
    %v4499 = vunpack.c.l.b16 %v4143
    %v4500 = vunpack.c.h.b16 %v4143
    %v4501 = vunpack.c.l.b16 %v4144
    %v4502 = vunpack.c.h.b16 %v4144
    %v4503 = vunpack.c.l.b16 %v4145
    %v4504 = vunpack.c.h.b16 %v4145
    %v4505 = vunpack.c.l.b16 %v4146
    %v4506 = vunpack.c.h.b16 %v4146
    %v4507 = vunpack.c.l.b16 %v4147
    %v4508 = vunpack.c.h.b16 %v4147
    %v4509 = vunpack.c.l.b16 %v4148
    %v4510 = vunpack.c.h.b16 %v4148
    %v4511 = vunpack.c.l.b16 %v4149
    %v4512 = vunpack.c.h.b16 %v4149
    %v4513 = vunpack.c.l.b16 %v4150
    %v4514 = vunpack.c.h.b16 %v4150
    %v4515 = vunpack.c.l.b16 %v4151
    %v4516 = vunpack.c.h.b16 %v4151
    %v4517 = vunpack.c.l.b16 %v4152
    %v4518 = vunpack.c.h.b16 %v4152
    %v4519 = vunpack.c.l.b16 %v4153
    %v4520 = vunpack.c.h.b16 %v4153
    %v4521 = vunpack.c.l.b16 %v4154
    %v4522 = vunpack.c.h.b16 %v4154
    %v4523 = vunpack.c.l.b16 %v4155
    %v4524 = vunpack.c.h.b16 %v4155
    %v4525 = vunpack.c.l.b16 %v4156
    %v4526 = vunpack.c.h.b16 %v4156
    %v4527 = vunpack.c.l.b16 %v4157
    %v4528 = vunpack.c.h.b16 %v4157
    %v4529 = vunpack.c.l.b16 %v4158
    %v4530 = vunpack.c.h.b16 %v4158
    %v4531 = vunpack.c.l.b16 %v4159
    %v4532 = vunpack.c.h.b16 %v4159
    %v4533 = vunpack.c.l.b16 %v4160
    %v4534 = vunpack.c.h.b16 %v4160
    %v4535 = vunpack.c.l.b16 %v4161
    %v4536 = vunpack.c.h.b16 %v4161
    %v4537 = vunpack.c.l.b16 %v4162
    %v4538 = vunpack.c.h.b16 %v4162
    %v4539 = vunpack.c.l.b16 %v4163
    %v4540 = vunpack.c.h.b16 %v4163
    %v4541 = vunpack.c.l.b16 %v4164
    %v4542 = vunpack.c.h.b16 %v4164
    %v4543 = vunpack.c.l.b16 %v4165
    %v4544 = vunpack.c.h.b16 %v4165
    %v4545 = vunpack.c.l.b16 %v4166
    %v4546 = vunpack.c.h.b16 %v4166
    %v4547 = vunpack.c.l.b16 %v4167
    %v4548 = vunpack.c.h.b16 %v4167
    %v4549 = vunpack.c.l.b16 %v4168
    %v4550 = vunpack.c.h.b16 %v4168
    %v4551 = vunpack.c.l.b16 %v4169
    %v4552 = vunpack.c.h.b16 %v4169
    %v4553 = vunpack.c.l.b16 %v4170
    %v4554 = vunpack.c.h.b16 %v4170
    %v4555 = vpack.c.b16 %v4303, %v4299
    %v4556 = vpack.c.b16 %v4304, %v4300
    %v4557 = vpack.c.b16 %v4305, %v4301
    %v4558 = vpack.c.b16 %v4306, %v4302
    %v4559 = vpack.c.b16 %v4311, %v4307
    %v4560 = vpack.c.b16 %v4312, %v4308
    %v4561 = vpack.c.b16 %v4313, %v4309
    %v4562 = vpack.c.b16 %v4314, %v4310
    %v4563 = vpack.c.b16 %v4319, %v4315
    %v4564 = vpack.c.b16 %v4320, %v4316
    %v4565 = vpack.c.b16 %v4321, %v4317
    %v4566 = vpack.c.b16 %v4322, %v4318
    %v4567 = vpack.c.b16 %v4327, %v4323
    %v4568 = vpack.c.b16 %v4328, %v4324
    %v4569 = vpack.c.b16 %v4329, %v4325
    %v4570 = vpack.c.b16 %v4330, %v4326
    %v4571 = vpack.c.b16 %v4335, %v4331
    %v4572 = vpack.c.b16 %v4336, %v4332
    %v4573 = vpack.c.b16 %v4337, %v4333
    %v4574 = vpack.c.b16 %v4338, %v4334
    %v4575 = vpack.c.b16 %v4343, %v4339
    %v4576 = vpack.c.b16 %v4344, %v4340
    %v4577 = vpack.c.b16 %v4345, %v4341
    %v4578 = vpack.c.b16 %v4346, %v4342
    %v4579 = vpack.c.b16 %v4351, %v4347
    %v4580 = vpack.c.b16 %v4352, %v4348
    %v4581 = vpack.c.b16 %v4353, %v4349
    %v4582 = vpack.c.b16 %v4354, %v4350
    %v4583 = vpack.c.b16 %v4359, %v4355
    %v4584 = vpack.c.b16 %v4360, %v4356
    %v4585 = vpack.c.b16 %v4361, %v4357
    %v4586 = vpack.c.b16 %v4362, %v4358
    %v4587 = vpack.c.b16 %v4367, %v4363
    %v4588 = vpack.c.b16 %v4368, %v4364
    %v4589 = vpack.c.b16 %v4369, %v4365
    %v4590 = vpack.c.b16 %v4370, %v4366
    %v4591 = vpack.c.b16 %v4375, %v4371
    %v4592 = vpack.c.b16 %v4376, %v4372
    %v4593 = vpack.c.b16 %v4377, %v4373
    %v4594 = vpack.c.b16 %v4378, %v4374
    %v4595 = vpack.c.b16 %v4383, %v4379
    %v4596 = vpack.c.b16 %v4384, %v4380
    %v4597 = vpack.c.b16 %v4385, %v4381
    %v4598 = vpack.c.b16 %v4386, %v4382
    %v4599 = vpack.c.b16 %v4391, %v4387
    %v4600 = vpack.c.b16 %v4392, %v4388
    %v4601 = vpack.c.b16 %v4393, %v4389
    %v4602 = vpack.c.b16 %v4394, %v4390
    %v4603 = vpack.c.b16 %v4399, %v4395
    %v4604 = vpack.c.b16 %v4400, %v4396
    %v4605 = vpack.c.b16 %v4401, %v4397
    %v4606 = vpack.c.b16 %v4402, %v4398
    %v4607 = vpack.c.b16 %v4407, %v4403
    %v4608 = vpack.c.b16 %v4408, %v4404
    %v4609 = vpack.c.b16 %v4409, %v4405
    %v4610 = vpack.c.b16 %v4410, %v4406
    %v4611 = vpack.c.b16 %v4415, %v4411
    %v4612 = vpack.c.b16 %v4416, %v4412
    %v4613 = vpack.c.b16 %v4417, %v4413
    %v4614 = vpack.c.b16 %v4418, %v4414
    %v4615 = vpack.c.b16 %v4423, %v4419
    %v4616 = vpack.c.b16 %v4424, %v4420
    %v4617 = vpack.c.b16 %v4425, %v4421
    %v4618 = vpack.c.b16 %v4426, %v4422
    %v4619 = vpack.c.b16 %v4431, %v4427
    %v4620 = vpack.c.b16 %v4432, %v4428
    %v4621 = vpack.c.b16 %v4433, %v4429
    %v4622 = vpack.c.b16 %v4434, %v4430
    %v4623 = vpack.c.b16 %v4439, %v4435
    %v4624 = vpack.c.b16 %v4440, %v4436
    %v4625 = vpack.c.b16 %v4441, %v4437
    %v4626 = vpack.c.b16 %v4442, %v4438
    %v4627 = vpack.c.b16 %v4447, %v4443
    %v4628 = vpack.c.b16 %v4448, %v4444
    %v4629 = vpack.c.b16 %v4449, %v4445
    %v4630 = vpack.c.b16 %v4450, %v4446
    %v4631 = vpack.c.b16 %v4455, %v4451
    %v4632 = vpack.c.b16 %v4456, %v4452
    %v4633 = vpack.c.b16 %v4457, %v4453
    %v4634 = vpack.c.b16 %v4458, %v4454
    %v4635 = vpack.c.b16 %v4463, %v4459
    %v4636 = vpack.c.b16 %v4464, %v4460
    %v4637 = vpack.c.b16 %v4465, %v4461
    %v4638 = vpack.c.b16 %v4466, %v4462
    %v4639 = vpack.c.b16 %v4471, %v4467
    %v4640 = vpack.c.b16 %v4472, %v4468
    %v4641 = vpack.c.b16 %v4473, %v4469
    %v4642 = vpack.c.b16 %v4474, %v4470
    %v4643 = vpack.c.b16 %v4479, %v4475
    %v4644 = vpack.c.b16 %v4480, %v4476
    %v4645 = vpack.c.b16 %v4481, %v4477
    %v4646 = vpack.c.b16 %v4482, %v4478
    %v4647 = vpack.c.b16 %v4487, %v4483
    %v4648 = vpack.c.b16 %v4488, %v4484
    %v4649 = vpack.c.b16 %v4489, %v4485
    %v4650 = vpack.c.b16 %v4490, %v4486
    %v4651 = vpack.c.b16 %v4495, %v4491
    %v4652 = vpack.c.b16 %v4496, %v4492
    %v4653 = vpack.c.b16 %v4497, %v4493
    %v4654 = vpack.c.b16 %v4498, %v4494
    %v4655 = vpack.c.b16 %v4503, %v4499
    %v4656 = vpack.c.b16 %v4504, %v4500
    %v4657 = vpack.c.b16 %v4505, %v4501
    %v4658 = vpack.c.b16 %v4506, %v4502
    %v4659 = vpack.c.b16 %v4511, %v4507
    %v4660 = vpack.c.b16 %v4512, %v4508
    %v4661 = vpack.c.b16 %v4513, %v4509
    %v4662 = vpack.c.b16 %v4514, %v4510
    %v4663 = vpack.c.b16 %v4519, %v4515
    %v4664 = vpack.c.b16 %v4520, %v4516
    %v4665 = vpack.c.b16 %v4521, %v4517
    %v4666 = vpack.c.b16 %v4522, %v4518
    %v4667 = vpack.c.b16 %v4527, %v4523
    %v4668 = vpack.c.b16 %v4528, %v4524
    %v4669 = vpack.c.b16 %v4529, %v4525
    %v4670 = vpack.c.b16 %v4530, %v4526
    %v4671 = vpack.c.b16 %v4535, %v4531
    %v4672 = vpack.c.b16 %v4536, %v4532
    %v4673 = vpack.c.b16 %v4537, %v4533
    %v4674 = vpack.c.b16 %v4538, %v4534
    %v4675 = vpack.c.b16 %v4543, %v4539
    %v4676 = vpack.c.b16 %v4544, %v4540
    %v4677 = vpack.c.b16 %v4545, %v4541
    %v4678 = vpack.c.b16 %v4546, %v4542
    %v4679 = vpack.c.b16 %v4551, %v4547
    %v4680 = vpack.c.b16 %v4552, %v4548
    %v4681 = vpack.c.b16 %v4553, %v4549
    %v4682 = vpack.c.b16 %v4554, %v4550
    %4811 = vmatprep.subr.bf16.mxu0 %v4556
    %4812 = vmatpush1.bf16.msra.mxu0 %v4555
    %4813 = vmatprep.subr.bf16.mxu0 %v4560
    %4814 = vmatpush1.bf16.msra.mxu0 %v4559
    %4815 = vmatprep.subr.bf16.mxu0 %v4564
    %4816 = vmatpush1.bf16.msra.mxu0 %v4563
    %4817 = vmatprep.subr.bf16.mxu0 %v4568
    %4818 = vmatpush1.bf16.msra.mxu0 %v4567
    %4819 = vmatprep.subr.bf16.mxu0 %v4572
    %4820 = vmatpush1.bf16.msra.mxu0 %v4571
    %4821 = vmatprep.subr.bf16.mxu0 %v4576
    %4822 = vmatpush1.bf16.msra.mxu0 %v4575
    %4823 = vmatprep.subr.bf16.mxu0 %v4580
    %4824 = vmatpush1.bf16.msra.mxu0 %v4579
    %4825 = vmatprep.subr.bf16.mxu0 %v4584
    %4826 = vmatpush1.bf16.msra.mxu0 %v4583
    %4827 = vmatprep.subr.bf16.mxu0 %v4588
    %4828 = vmatpush1.bf16.msra.mxu0 %v4587
    %4829 = vmatprep.subr.bf16.mxu0 %v4592
    %4830 = vmatpush1.bf16.msra.mxu0 %v4591
    %4831 = vmatprep.subr.bf16.mxu0 %v4596
    %4832 = vmatpush1.bf16.msra.mxu0 %v4595
    %4833 = vmatprep.subr.bf16.mxu0 %v4600
    %4834 = vmatpush1.bf16.msra.mxu0 %v4599
    %4835 = vmatprep.subr.bf16.mxu0 %v4604
    %4836 = vmatpush1.bf16.msra.mxu0 %v4603
    %4837 = vmatprep.subr.bf16.mxu0 %v4608
    %4838 = vmatpush1.bf16.msra.mxu0 %v4607
    %4839 = vmatprep.subr.bf16.mxu0 %v4612
    %4840 = vmatpush1.bf16.msra.mxu0 %v4611
    %4841 = vmatprep.subr.bf16.mxu0 %v4616
    %4842 = vmatpush1.bf16.msra.mxu0 %v4615
    %4843 = vmatprep.mubr.bf16.mxu0 %v4012
    %4844 = vmatmul.mubr.bf16.gmra.mrb[0].mxu0 %v4011
    %v4845 = vpop.f32.mrb[0].mxu0
    %v4846 = vadd.f32 0.0, %v4845
    %v4847 = vpop.f32.mrb[0].mxu0
    %v4848 = vadd.f32 0.0, %v4847
    %v4849 = vpop.f32.mrb[0].mxu0
    %v4850 = vadd.f32 0.0, %v4849
    %v4851 = vpop.f32.mrb[0].mxu0
    %v4852 = vadd.f32 0.0, %v4851
    %4853 = vmatprep.mubr.bf16.mxu0 %v4016
    %4854 = vmatmul.mubr.bf16.gmra.mrb[0].mxu0 %v4015
    %v4855 = vpop.f32.mrb[0].mxu0
    %v4856 = vadd.f32 0.0, %v4855
    %v4857 = vpop.f32.mrb[0].mxu0
    %v4858 = vadd.f32 0.0, %v4857
    %v4859 = vpop.f32.mrb[0].mxu0
    %v4860 = vadd.f32 0.0, %v4859
    %v4861 = vpop.f32.mrb[0].mxu0
    %v4862 = vadd.f32 0.0, %v4861
    %4863 = vmatprep.mubr.bf16.mxu0 %v4020
    %4864 = vmatmul.mubr.bf16.gmra.mrb[0].mxu0 %v4019
    %v4865 = vpop.f32.mrb[0].mxu0
    %v4866 = vadd.f32 0.0, %v4865
    %v4867 = vpop.f32.mrb[0].mxu0
    %v4868 = vadd.f32 0.0, %v4867
    %v4869 = vpop.f32.mrb[0].mxu0
    %v4870 = vadd.f32 0.0, %v4869
    %v4871 = vpop.f32.mrb[0].mxu0
    %v4872 = vadd.f32 0.0, %v4871
    %4873 = vmatprep.mubr.bf16.mxu0 %v4024
    %4874 = vmatmul.mubr.bf16.gmra.mrb[0].mxu0 %v4023
    %v4875 = vpop.f32.mrb[0].mxu0
    %v4876 = vadd.f32 0.0, %v4875
    %v4877 = vpop.f32.mrb[0].mxu0
    %v4878 = vadd.f32 0.0, %v4877
    %v4879 = vpop.f32.mrb[0].mxu0
    %v4880 = vadd.f32 0.0, %v4879
    %v4881 = vpop.f32.mrb[0].mxu0
    %v4882 = vadd.f32 0.0, %v4881
    %4883 = vmatprep.mubr.bf16.mxu0 %v4028
    %4884 = vmatmul.mubr.bf16.gmra.mrb[0].mxu0 %v4027
    %v4885 = vpop.f32.mrb[0].mxu0
    %v4886 = vadd.f32 0.0, %v4885
    %v4887 = vpop.f32.mrb[0].mxu0
    %v4888 = vadd.f32 0.0, %v4887
    %v4889 = vpop.f32.mrb[0].mxu0
    %v4890 = vadd.f32 0.0, %v4889
    %v4891 = vpop.f32.mrb[0].mxu0
    %v4892 = vadd.f32 0.0, %v4891
    %4893 = vmatprep.mubr.bf16.mxu0 %v4032
    %4894 = vmatmul.mubr.bf16.gmra.mrb[0].mxu0 %v4031
    %v4895 = vpop.f32.mrb[0].mxu0
    %v4896 = vadd.f32 0.0, %v4895
    %v4897 = vpop.f32.mrb[0].mxu0
    %v4898 = vadd.f32 0.0, %v4897
    %v4899 = vpop.f32.mrb[0].mxu0
    %v4900 = vadd.f32 0.0, %v4899
    %v4901 = vpop.f32.mrb[0].mxu0
    %v4902 = vadd.f32 0.0, %v4901
    %4903 = vmatprep.mubr.bf16.mxu0 %v4036
    %4904 = vmatmul.mubr.bf16.gmra.mrb[0].mxu0 %v4035
    %v4905 = vpop.f32.mrb[0].mxu0
    %v4906 = vadd.f32 0.0, %v4905
    %v4907 = vpop.f32.mrb[0].mxu0
    %v4908 = vadd.f32 0.0, %v4907
    %v4909 = vpop.f32.mrb[0].mxu0
    %v4910 = vadd.f32 0.0, %v4909
    %v4911 = vpop.f32.mrb[0].mxu0
    %v4912 = vadd.f32 0.0, %v4911
    %4913 = vmatprep.mubr.bf16.mxu0 %v4040
    %4914 = vmatmul.mubr.bf16.gmra.mrb[0].mxu0 %v4039
    %v4915 = vpop.f32.mrb[0].mxu0
    %v4916 = vadd.f32 0.0, %v4915
    %v4917 = vpop.f32.mrb[0].mxu0
    %v4918 = vadd.f32 0.0, %v4917
    %v4919 = vpop.f32.mrb[0].mxu0
    %v4920 = vadd.f32 0.0, %v4919
    %v4921 = vpop.f32.mrb[0].mxu0
    %v4922 = vadd.f32 0.0, %v4921
    %4923 = vdwg.mxu0
    %4924 = vmatprep.subr.bf16.mxu0 %v4620
    %4925 = vmatpush1.bf16.msra.mxu0 %v4619
    %4926 = vmatprep.subr.bf16.mxu0 %v4624
    %4927 = vmatpush1.bf16.msra.mxu0 %v4623
    %4928 = vmatprep.subr.bf16.mxu0 %v4628
    %4929 = vmatpush1.bf16.msra.mxu0 %v4627
    %4930 = vmatprep.subr.bf16.mxu0 %v4632
    %4931 = vmatpush1.bf16.msra.mxu0 %v4631
    %4932 = vmatprep.subr.bf16.mxu0 %v4636
    %4933 = vmatpush1.bf16.msra.mxu0 %v4635
    %4934 = vmatprep.subr.bf16.mxu0 %v4640
    %4935 = vmatpush1.bf16.msra.mxu0 %v4639
    %4936 = vmatprep.subr.bf16.mxu0 %v4644
    %4937 = vmatpush1.bf16.msra.mxu0 %v4643
    %4938 = vmatprep.subr.bf16.mxu0 %v4648
    %4939 = vmatpush1.bf16.msra.mxu0 %v4647
    %4940 = vmatprep.subr.bf16.mxu0 %v4652
    %4941 = vmatpush1.bf16.msra.mxu0 %v4651
    %4942 = vmatprep.subr.bf16.mxu0 %v4656
    %4943 = vmatpush1.bf16.msra.mxu0 %v4655
    %4944 = vmatprep.subr.bf16.mxu0 %v4660
    %4945 = vmatpush1.bf16.msra.mxu0 %v4659
    %4946 = vmatprep.subr.bf16.mxu0 %v4664
    %4947 = vmatpush1.bf16.msra.mxu0 %v4663
    %4948 = vmatprep.subr.bf16.mxu0 %v4668
    %4949 = vmatpush1.bf16.msra.mxu0 %v4667
    %4950 = vmatprep.subr.bf16.mxu0 %v4672
    %4951 = vmatpush1.bf16.msra.mxu0 %v4671
    %4952 = vmatprep.subr.bf16.mxu0 %v4676
    %4953 = vmatpush1.bf16.msra.mxu0 %v4675
    %4954 = vmatprep.subr.bf16.mxu0 %v4680
    %4955 = vmatpush1.bf16.msra.mxu0 %v4679
    %4956 = vmatprep.mubr.bf16.mxu0 %v4014
    %4957 = vmatmul.mubr.bf16.gmra.mrb[0].mxu0 %v4013
    %v4958 = vpop.f32.mrb[0].mxu0
    %v4959 = vadd.f32 %v4846, %v4958
    %v4960 = vpop.f32.mrb[0].mxu0
    %v4961 = vadd.f32 %v4848, %v4960
    %v4962 = vpop.f32.mrb[0].mxu0
    %v4963 = vadd.f32 %v4850, %v4962
    %v4964 = vpop.f32.mrb[0].mxu0
    %v4965 = vadd.f32 %v4852, %v4964
    %4966 = vmatprep.mubr.bf16.mxu0 %v4018
    %4967 = vmatmul.mubr.bf16.gmra.mrb[0].mxu0 %v4017
    %v4968 = vpop.f32.mrb[0].mxu0
    %v4969 = vadd.f32 %v4856, %v4968
    %v4970 = vpop.f32.mrb[0].mxu0
    %v4971 = vadd.f32 %v4858, %v4970
    %v4972 = vpop.f32.mrb[0].mxu0
    %v4973 = vadd.f32 %v4860, %v4972
    %v4974 = vpop.f32.mrb[0].mxu0
    %v4975 = vadd.f32 %v4862, %v4974
    %4976 = vmatprep.mubr.bf16.mxu0 %v4022
    %4977 = vmatmul.mubr.bf16.gmra.mrb[0].mxu0 %v4021
    %v4978 = vpop.f32.mrb[0].mxu0
    %v4979 = vadd.f32 %v4866, %v4978
    %v4980 = vpop.f32.mrb[0].mxu0
    %v4981 = vadd.f32 %v4868, %v4980
    %v4982 = vpop.f32.mrb[0].mxu0
    %v4983 = vadd.f32 %v4870, %v4982
    %v4984 = vpop.f32.mrb[0].mxu0
    %v4985 = vadd.f32 %v4872, %v4984
    %4986 = vmatprep.mubr.bf16.mxu0 %v4026
    %4987 = vmatmul.mubr.bf16.gmra.mrb[0].mxu0 %v4025
    %v4988 = vpop.f32.mrb[0].mxu0
    %v4989 = vadd.f32 %v4876, %v4988
    %v4990 = vpop.f32.mrb[0].mxu0
    %v4991 = vadd.f32 %v4878, %v4990
    %v4992 = vpop.f32.mrb[0].mxu0
    %v4993 = vadd.f32 %v4880, %v4992
    %v4994 = vpop.f32.mrb[0].mxu0
    %v4995 = vadd.f32 %v4882, %v4994
    %4996 = vmatprep.mubr.bf16.mxu0 %v4030
    %4997 = vmatmul.mubr.bf16.gmra.mrb[0].mxu0 %v4029
    %v4998 = vpop.f32.mrb[0].mxu0
    %v4999 = vadd.f32 %v4886, %v4998
    %v5000 = vpop.f32.mrb[0].mxu0
    %v5001 = vadd.f32 %v4888, %v5000
    %v5002 = vpop.f32.mrb[0].mxu0
    %v5003 = vadd.f32 %v4890, %v5002
    %v5004 = vpop.f32.mrb[0].mxu0
    %v5005 = vadd.f32 %v4892, %v5004
    %5006 = vmatprep.mubr.bf16.mxu0 %v4034
    %5007 = vmatmul.mubr.bf16.gmra.mrb[0].mxu0 %v4033
    %v5008 = vpop.f32.mrb[0].mxu0
    %v5009 = vadd.f32 %v4896, %v5008
    %v5010 = vpop.f32.mrb[0].mxu0
    %v5011 = vadd.f32 %v4898, %v5010
    %v5012 = vpop.f32.mrb[0].mxu0
    %v5013 = vadd.f32 %v4900, %v5012
    %v5014 = vpop.f32.mrb[0].mxu0
    %v5015 = vadd.f32 %v4902, %v5014
    %5016 = vmatprep.mubr.bf16.mxu0 %v4038
    %5017 = vmatmul.mubr.bf16.gmra.mrb[0].mxu0 %v4037
    %v5018 = vpop.f32.mrb[0].mxu0
    %v5019 = vadd.f32 %v4906, %v5018
    %v5020 = vpop.f32.mrb[0].mxu0
    %v5021 = vadd.f32 %v4908, %v5020
    %v5022 = vpop.f32.mrb[0].mxu0
    %v5023 = vadd.f32 %v4910, %v5022
    %v5024 = vpop.f32.mrb[0].mxu0
    %v5025 = vadd.f32 %v4912, %v5024
    %5026 = vmatprep.mubr.bf16.mxu0 %v4042
    %5027 = vmatmul.mubr.bf16.gmra.mrb[0].mxu0 %v4041
    %v5028 = vpop.f32.mrb[0].mxu0
    %v5029 = vadd.f32 %v4916, %v5028
    %v5030 = vpop.f32.mrb[0].mxu0
    %v5031 = vadd.f32 %v4918, %v5030
    %v5032 = vpop.f32.mrb[0].mxu0
    %v5033 = vadd.f32 %v4920, %v5032
    %v5034 = vpop.f32.mrb[0].mxu0
    %v5035 = vadd.f32 %v4922, %v5034
    %5036 = vdwg.mxu0
    %5037 = vmatprep.subr.bf16.mxu0 %v4558
    %5038 = vmatpush1.bf16.msra.mxu0 %v4557
    %5039 = vmatprep.subr.bf16.mxu0 %v4562
    %5040 = vmatpush1.bf16.msra.mxu0 %v4561
    %5041 = vmatprep.subr.bf16.mxu0 %v4566
    %5042 = vmatpush1.bf16.msra.mxu0 %v4565
    %5043 = vmatprep.subr.bf16.mxu0 %v4570
    %5044 = vmatpush1.bf16.msra.mxu0 %v4569
    %5045 = vmatprep.subr.bf16.mxu0 %v4574
    %5046 = vmatpush1.bf16.msra.mxu0 %v4573
    %5047 = vmatprep.subr.bf16.mxu0 %v4578
    %5048 = vmatpush1.bf16.msra.mxu0 %v4577
    %5049 = vmatprep.subr.bf16.mxu0 %v4582
    %5050 = vmatpush1.bf16.msra.mxu0 %v4581
    %5051 = vmatprep.subr.bf16.mxu0 %v4586
    %5052 = vmatpush1.bf16.msra.mxu0 %v4585
    %5053 = vmatprep.subr.bf16.mxu0 %v4590
    %5054 = vmatpush1.bf16.msra.mxu0 %v4589
    %5055 = vmatprep.subr.bf16.mxu0 %v4594
    %5056 = vmatpush1.bf16.msra.mxu0 %v4593
    %5057 = vmatprep.subr.bf16.mxu0 %v4598
    %5058 = vmatpush1.bf16.msra.mxu0 %v4597
    %5059 = vmatprep.subr.bf16.mxu0 %v4602
    %5060 = vmatpush1.bf16.msra.mxu0 %v4601
    %5061 = vmatprep.subr.bf16.mxu0 %v4606
    %5062 = vmatpush1.bf16.msra.mxu0 %v4605
    %5063 = vmatprep.subr.bf16.mxu0 %v4610
    %5064 = vmatpush1.bf16.msra.mxu0 %v4609
    %5065 = vmatprep.subr.bf16.mxu0 %v4614
    %5066 = vmatpush1.bf16.msra.mxu0 %v4613
    %5067 = vmatprep.subr.bf16.mxu0 %v4618
    %5068 = vmatpush1.bf16.msra.mxu0 %v4617
    %5069 = vmatprep.mubr.bf16.mxu0 %v4012
    %5070 = vmatmul.mubr.bf16.gmra.mrb[0].mxu0 %v4011
    %v5071 = vpop.f32.mrb[0].mxu0
    %v5072 = vadd.f32 0.0, %v5071
    %v5073 = vpop.f32.mrb[0].mxu0
    %v5074 = vadd.f32 0.0, %v5073
    %v5075 = vpop.f32.mrb[0].mxu0
    %v5076 = vadd.f32 0.0, %v5075
    %v5077 = vpop.f32.mrb[0].mxu0
    %v5078 = vadd.f32 0.0, %v5077
    %5079 = vmatprep.mubr.bf16.mxu0 %v4016
    %5080 = vmatmul.mubr.bf16.gmra.mrb[0].mxu0 %v4015
    %v5081 = vpop.f32.mrb[0].mxu0
    %v5082 = vadd.f32 0.0, %v5081
    %v5083 = vpop.f32.mrb[0].mxu0
    %v5084 = vadd.f32 0.0, %v5083
    %v5085 = vpop.f32.mrb[0].mxu0
    %v5086 = vadd.f32 0.0, %v5085
    %v5087 = vpop.f32.mrb[0].mxu0
    %v5088 = vadd.f32 0.0, %v5087
    %5089 = vmatprep.mubr.bf16.mxu0 %v4020
    %5090 = vmatmul.mubr.bf16.gmra.mrb[0].mxu0 %v4019
    %v5091 = vpop.f32.mrb[0].mxu0
    %v5092 = vadd.f32 0.0, %v5091
    %v5093 = vpop.f32.mrb[0].mxu0
    %v5094 = vadd.f32 0.0, %v5093
    %v5095 = vpop.f32.mrb[0].mxu0
    %v5096 = vadd.f32 0.0, %v5095
    %v5097 = vpop.f32.mrb[0].mxu0
    %v5098 = vadd.f32 0.0, %v5097
    %5099 = vmatprep.mubr.bf16.mxu0 %v4024
    %5100 = vmatmul.mubr.bf16.gmra.mrb[0].mxu0 %v4023
    %v5101 = vpop.f32.mrb[0].mxu0
    %v5102 = vadd.f32 0.0, %v5101
    %v5103 = vpop.f32.mrb[0].mxu0
    %v5104 = vadd.f32 0.0, %v5103
    %v5105 = vpop.f32.mrb[0].mxu0
    %v5106 = vadd.f32 0.0, %v5105
    %v5107 = vpop.f32.mrb[0].mxu0
    %v5108 = vadd.f32 0.0, %v5107
    %5109 = vmatprep.mubr.bf16.mxu0 %v4028
    %5110 = vmatmul.mubr.bf16.gmra.mrb[0].mxu0 %v4027
    %v5111 = vpop.f32.mrb[0].mxu0
    %v5112 = vadd.f32 0.0, %v5111
    %v5113 = vpop.f32.mrb[0].mxu0
    %v5114 = vadd.f32 0.0, %v5113
    %v5115 = vpop.f32.mrb[0].mxu0
    %v5116 = vadd.f32 0.0, %v5115
    %v5117 = vpop.f32.mrb[0].mxu0
    %v5118 = vadd.f32 0.0, %v5117
    %5119 = vmatprep.mubr.bf16.mxu0 %v4032
    %5120 = vmatmul.mubr.bf16.gmra.mrb[0].mxu0 %v4031
    %v5121 = vpop.f32.mrb[0].mxu0
    %v5122 = vadd.f32 0.0, %v5121
    %v5123 = vpop.f32.mrb[0].mxu0
    %v5124 = vadd.f32 0.0, %v5123
    %v5125 = vpop.f32.mrb[0].mxu0
    %v5126 = vadd.f32 0.0, %v5125
    %v5127 = vpop.f32.mrb[0].mxu0
    %v5128 = vadd.f32 0.0, %v5127
    %5129 = vmatprep.mubr.bf16.mxu0 %v4036
    %5130 = vmatmul.mubr.bf16.gmra.mrb[0].mxu0 %v4035
    %v5131 = vpop.f32.mrb[0].mxu0
    %v5132 = vadd.f32 0.0, %v5131
    %v5133 = vpop.f32.mrb[0].mxu0
    %v5134 = vadd.f32 0.0, %v5133
    %v5135 = vpop.f32.mrb[0].mxu0
    %v5136 = vadd.f32 0.0, %v5135
    %v5137 = vpop.f32.mrb[0].mxu0
    %v5138 = vadd.f32 0.0, %v5137
    %5139 = vmatprep.mubr.bf16.mxu0 %v4040
    %5140 = vmatmul.mubr.bf16.gmra.mrb[0].mxu0 %v4039
    %v5141 = vpop.f32.mrb[0].mxu0
    %v5142 = vadd.f32 0.0, %v5141
    %v5143 = vpop.f32.mrb[0].mxu0
    %v5144 = vadd.f32 0.0, %v5143
    %v5145 = vpop.f32.mrb[0].mxu0
    %v5146 = vadd.f32 0.0, %v5145
    %v5147 = vpop.f32.mrb[0].mxu0
    %v5148 = vadd.f32 0.0, %v5147
    %5149 = vdwg.mxu0
    %5150 = vmatprep.subr.bf16.mxu0 %v4622
    %5151 = vmatpush1.bf16.msra.mxu0 %v4621
    %5152 = vmatprep.subr.bf16.mxu0 %v4626
    %5153 = vmatpush1.bf16.msra.mxu0 %v4625
    %5154 = vmatprep.subr.bf16.mxu0 %v4630
    %5155 = vmatpush1.bf16.msra.mxu0 %v4629
    %5156 = vmatprep.subr.bf16.mxu0 %v4634
    %5157 = vmatpush1.bf16.msra.mxu0 %v4633
    %5158 = vmatprep.subr.bf16.mxu0 %v4638
    %5159 = vmatpush1.bf16.msra.mxu0 %v4637
    %5160 = vmatprep.subr.bf16.mxu0 %v4642
    %5161 = vmatpush1.bf16.msra.mxu0 %v4641
    %5162 = vmatprep.subr.bf16.mxu0 %v4646
    %5163 = vmatpush1.bf16.msra.mxu0 %v4645
    %5164 = vmatprep.subr.bf16.mxu0 %v4650
    %5165 = vmatpush1.bf16.msra.mxu0 %v4649
    %5166 = vmatprep.subr.bf16.mxu0 %v4654
    %5167 = vmatpush1.bf16.msra.mxu0 %v4653
    %5168 = vmatprep.subr.bf16.mxu0 %v4658
    %5169 = vmatpush1.bf16.msra.mxu0 %v4657
    %5170 = vmatprep.subr.bf16.mxu0 %v4662
    %5171 = vmatpush1.bf16.msra.mxu0 %v4661
    %5172 = vmatprep.subr.bf16.mxu0 %v4666
    %5173 = vmatpush1.bf16.msra.mxu0 %v4665
    %5174 = vmatprep.subr.bf16.mxu0 %v4670
    %5175 = vmatpush1.bf16.msra.mxu0 %v4669
    %5176 = vmatprep.subr.bf16.mxu0 %v4674
    %5177 = vmatpush1.bf16.msra.mxu0 %v4673
    %5178 = vmatprep.subr.bf16.mxu0 %v4678
    %5179 = vmatpush1.bf16.msra.mxu0 %v4677
    %5180 = vmatprep.subr.bf16.mxu0 %v4682
    %5181 = vmatpush1.bf16.msra.mxu0 %v4681
    %5182 = vmatprep.mubr.bf16.mxu0 %v4014
    %5183 = vmatmul.mubr.bf16.gmra.mrb[0].mxu0 %v4013
    %v5184 = vpop.f32.mrb[0].mxu0
    %v5185 = vadd.f32 %v5072, %v5184
    %v5186 = vpop.f32.mrb[0].mxu0
    %v5187 = vadd.f32 %v5074, %v5186
    %v5188 = vpop.f32.mrb[0].mxu0
    %v5189 = vadd.f32 %v5076, %v5188
    %v5190 = vpop.f32.mrb[0].mxu0
    %v5191 = vadd.f32 %v5078, %v5190
    %5192 = vmatprep.mubr.bf16.mxu0 %v4018
    %5193 = vmatmul.mubr.bf16.gmra.mrb[0].mxu0 %v4017
    %v5194 = vpop.f32.mrb[0].mxu0
    %v5195 = vadd.f32 %v5082, %v5194
    %v5196 = vpop.f32.mrb[0].mxu0
    %v5197 = vadd.f32 %v5084, %v5196
    %v5198 = vpop.f32.mrb[0].mxu0
    %v5199 = vadd.f32 %v5086, %v5198
    %v5200 = vpop.f32.mrb[0].mxu0
    %v5201 = vadd.f32 %v5088, %v5200
    %5202 = vmatprep.mubr.bf16.mxu0 %v4022
    %5203 = vmatmul.mubr.bf16.gmra.mrb[0].mxu0 %v4021
    %v5204 = vpop.f32.mrb[0].mxu0
    %v5205 = vadd.f32 %v5092, %v5204
    %v5206 = vpop.f32.mrb[0].mxu0
    %v5207 = vadd.f32 %v5094, %v5206
    %v5208 = vpop.f32.mrb[0].mxu0
    %v5209 = vadd.f32 %v5096, %v5208
    %v5210 = vpop.f32.mrb[0].mxu0
    %v5211 = vadd.f32 %v5098, %v5210
    %5212 = vmatprep.mubr.bf16.mxu0 %v4026
    %5213 = vmatmul.mubr.bf16.gmra.mrb[0].mxu0 %v4025
    %v5214 = vpop.f32.mrb[0].mxu0
    %v5215 = vadd.f32 %v5102, %v5214
    %v5216 = vpop.f32.mrb[0].mxu0
    %v5217 = vadd.f32 %v5104, %v5216
    %v5218 = vpop.f32.mrb[0].mxu0
    %v5219 = vadd.f32 %v5106, %v5218
    %v5220 = vpop.f32.mrb[0].mxu0
    %v5221 = vadd.f32 %v5108, %v5220
    %5222 = vmatprep.mubr.bf16.mxu0 %v4030
    %5223 = vmatmul.mubr.bf16.gmra.mrb[0].mxu0 %v4029
    %v5224 = vpop.f32.mrb[0].mxu0
    %v5225 = vadd.f32 %v5112, %v5224
    %v5226 = vpop.f32.mrb[0].mxu0
    %v5227 = vadd.f32 %v5114, %v5226
    %v5228 = vpop.f32.mrb[0].mxu0
    %v5229 = vadd.f32 %v5116, %v5228
    %v5230 = vpop.f32.mrb[0].mxu0
    %v5231 = vadd.f32 %v5118, %v5230
    %5232 = vmatprep.mubr.bf16.mxu0 %v4034
    %5233 = vmatmul.mubr.bf16.gmra.mrb[0].mxu0 %v4033
    %v5234 = vpop.f32.mrb[0].mxu0
    %v5235 = vadd.f32 %v5122, %v5234
    %v5236 = vpop.f32.mrb[0].mxu0
    %v5237 = vadd.f32 %v5124, %v5236
    %v5238 = vpop.f32.mrb[0].mxu0
    %v5239 = vadd.f32 %v5126, %v5238
    %v5240 = vpop.f32.mrb[0].mxu0
    %v5241 = vadd.f32 %v5128, %v5240
    %5242 = vmatprep.mubr.bf16.mxu0 %v4038
    %5243 = vmatmul.mubr.bf16.gmra.mrb[0].mxu0 %v4037
    %v5244 = vpop.f32.mrb[0].mxu0
    %v5245 = vadd.f32 %v5132, %v5244
    %v5246 = vpop.f32.mrb[0].mxu0
    %v5247 = vadd.f32 %v5134, %v5246
    %v5248 = vpop.f32.mrb[0].mxu0
    %v5249 = vadd.f32 %v5136, %v5248
    %v5250 = vpop.f32.mrb[0].mxu0
    %v5251 = vadd.f32 %v5138, %v5250
    %5252 = vmatprep.mubr.bf16.mxu0 %v4042
    %5253 = vmatmul.mubr.bf16.gmra.mrb[0].mxu0 %v4041
    %v5254 = vpop.f32.mrb[0].mxu0
    %v5255 = vadd.f32 %v5142, %v5254
    %v5256 = vpop.f32.mrb[0].mxu0
    %v5257 = vadd.f32 %v5144, %v5256
    %v5258 = vpop.f32.mrb[0].mxu0
    %v5259 = vadd.f32 %v5146, %v5258
    %v5260 = vpop.f32.mrb[0].mxu0
    %v5261 = vadd.f32 %v5148, %v5260
    %5262 = vdwg.mxu0
    %v5263 = vpack.c.bf16 %v4963, %v4959
    %v5264 = vpack.c.bf16 %v4965, %v4961
    %v5265 = vpack.c.bf16 %v5189, %v5185
    %v5266 = vpack.c.bf16 %v5191, %v5187
    %v5267 = vpack.c.bf16 %v4973, %v4969
    %v5268 = vpack.c.bf16 %v4975, %v4971
    %v5269 = vpack.c.bf16 %v5199, %v5195
    %v5270 = vpack.c.bf16 %v5201, %v5197
    %v5271 = vpack.c.bf16 %v4983, %v4979
    %v5272 = vpack.c.bf16 %v4985, %v4981
    %v5273 = vpack.c.bf16 %v5209, %v5205
    %v5274 = vpack.c.bf16 %v5211, %v5207
    %v5275 = vpack.c.bf16 %v4993, %v4989
    %v5276 = vpack.c.bf16 %v4995, %v4991
    %v5277 = vpack.c.bf16 %v5219, %v5215
    %v5278 = vpack.c.bf16 %v5221, %v5217
    %v5279 = vpack.c.bf16 %v5003, %v4999
    %v5280 = vpack.c.bf16 %v5005, %v5001
    %v5281 = vpack.c.bf16 %v5229, %v5225
    %v5282 = vpack.c.bf16 %v5231, %v5227
    %v5283 = vpack.c.bf16 %v5013, %v5009
    %v5284 = vpack.c.bf16 %v5015, %v5011
    %v5285 = vpack.c.bf16 %v5239, %v5235
    %v5286 = vpack.c.bf16 %v5241, %v5237
    %v5287 = vpack.c.bf16 %v5023, %v5019
    %v5288 = vpack.c.bf16 %v5025, %v5021
    %v5289 = vpack.c.bf16 %v5249, %v5245
    %v5290 = vpack.c.bf16 %v5251, %v5247
    %v5291 = vpack.c.bf16 %v5033, %v5029
    %v5292 = vpack.c.bf16 %v5035, %v5031
    %v5293 = vpack.c.bf16 %v5259, %v5255
    %v5294 = vpack.c.bf16 %v5261, %v5257
    %v5295 = vld [vmem:[%s6] sm:$0xf]
    %v5298 = vunpack.c.l.s4 1966171168
    %v5299 = vunpack.c.0.s8 %v5298
    %v5300 = vlaneseq
    %v5301 = vshrl.u32 %v5300, 7
    %v5302 = vsub.s32 %v5299, %v5301
    %v5303 = vrot.slane %v5295, %v5302
    %v5304 = vcombine.high %v5303, %v5303
    %v5306 = vunpack.c.l.s4 1966171168
    %v5307 = vunpack.c.0.s8 %v5306
    %v5308 = vlaneseq
    %v5309 = vshrl.u32 %v5308, 7
    %v5310 = vsub.s32 %v5307, %v5309
    %v5311 = vrot.slane %v5303, %v5310
    %v5313 = vunpack.c.l.s4 1966171168
    %v5314 = vunpack.c.0.s8 %v5313
    %v5315 = vlaneseq
    %v5316 = vshrl.u32 %v5315, 7
    %v5317 = vsub.s32 %v5314, %v5316
    %v5318 = vrot.slane %v5304, %v5317
    %v5319 = vcombine.high %v5311, %v5311
    %v5320 = vcombine.high %v5318, %v5318
    %v5322 = vpack.i.b16 %v5311, %v5311
    %v5324 = vlaneseq
    %v5325 = vshrl.u32 %v5324, 7
    %v5326 = vsub.s32 0, %v5325
    %v5327 = vrot.slane %v5322, %v5326
    %v5329 = vpack.i.b16 %v5318, %v5318
    %v5331 = vlaneseq
    %v5332 = vshrl.u32 %v5331, 7
    %v5333 = vsub.s32 0, %v5332
    %v5334 = vrot.slane %v5329, %v5333
    %v5336 = vpack.i.b16 %v5319, %v5319
    %v5338 = vlaneseq
    %v5339 = vshrl.u32 %v5338, 7
    %v5340 = vsub.s32 0, %v5339
    %v5341 = vrot.slane %v5336, %v5340
    %v5343 = vpack.i.b16 %v5320, %v5320
    %v5345 = vlaneseq
    %v5346 = vshrl.u32 %v5345, 7
    %v5347 = vsub.s32 0, %v5346
    %v5348 = vrot.slane %v5343, %v5347
    %v5349 = vadd.bf16 %v5263, %v5327
    %v5350 = vadd.bf16 %v5264, %v5334
    %v5351 = vadd.bf16 %v5265, %v5341
    %v5352 = vadd.bf16 %v5266, %v5348
    %v5353 = vadd.bf16 %v5267, %v5327
    %v5354 = vadd.bf16 %v5268, %v5334
    %v5355 = vadd.bf16 %v5269, %v5341
    %v5356 = vadd.bf16 %v5270, %v5348
    %v5357 = vadd.bf16 %v5271, %v5327
    %v5358 = vadd.bf16 %v5272, %v5334
    %v5359 = vadd.bf16 %v5273, %v5341
    %v5360 = vadd.bf16 %v5274, %v5348
    %v5361 = vadd.bf16 %v5275, %v5327
    %v5362 = vadd.bf16 %v5276, %v5334
    %v5363 = vadd.bf16 %v5277, %v5341
    %v5364 = vadd.bf16 %v5278, %v5348
    %v5365 = vadd.bf16 %v5279, %v5327
    %v5366 = vadd.bf16 %v5280, %v5334
    %v5367 = vadd.bf16 %v5281, %v5341
    %v5368 = vadd.bf16 %v5282, %v5348
    %v5369 = vadd.bf16 %v5283, %v5327
    %v5370 = vadd.bf16 %v5284, %v5334
    %v5371 = vadd.bf16 %v5285, %v5341
    %v5372 = vadd.bf16 %v5286, %v5348
    %v5373 = vadd.bf16 %v5287, %v5327
    %v5374 = vadd.bf16 %v5288, %v5334
    %v5375 = vadd.bf16 %v5289, %v5341
    %v5376 = vadd.bf16 %v5290, %v5348
    %v5377 = vadd.bf16 %v5291, %v5327
    %v5378 = vadd.bf16 %v5292, %v5334
    %v5379 = vadd.bf16 %v5293, %v5341
    %v5380 = vadd.bf16 %v5294, %v5348
    %v5381 = vmax.bf16 %v5349, 0
    %v5382 = vmax.bf16 %v5350, 0
    %v5383 = vmax.bf16 %v5351, 0
    %v5384 = vmax.bf16 %v5352, 0
    %v5385 = vmax.bf16 %v5353, 0
    %v5386 = vmax.bf16 %v5354, 0
    %v5387 = vmax.bf16 %v5355, 0
    %v5388 = vmax.bf16 %v5356, 0
    %v5389 = vmax.bf16 %v5357, 0
    %v5390 = vmax.bf16 %v5358, 0
    %v5391 = vmax.bf16 %v5359, 0
    %v5392 = vmax.bf16 %v5360, 0
    %v5393 = vmax.bf16 %v5361, 0
    %v5394 = vmax.bf16 %v5362, 0
    %v5395 = vmax.bf16 %v5363, 0
    %v5396 = vmax.bf16 %v5364, 0
    %v5397 = vmax.bf16 %v5365, 0
    %v5398 = vmax.bf16 %v5366, 0
    %v5399 = vmax.bf16 %v5367, 0
    %v5400 = vmax.bf16 %v5368, 0
    %v5401 = vmax.bf16 %v5369, 0
    %v5402 = vmax.bf16 %v5370, 0
    %v5403 = vmax.bf16 %v5371, 0
    %v5404 = vmax.bf16 %v5372, 0
    %v5405 = vmax.bf16 %v5373, 0
    %v5406 = vmax.bf16 %v5374, 0
    %v5407 = vmax.bf16 %v5375, 0
    %v5408 = vmax.bf16 %v5376, 0
    %v5409 = vmax.bf16 %v5377, 0
    %v5410 = vmax.bf16 %v5378, 0
    %v5411 = vmax.bf16 %v5379, 0
    %v5412 = vmax.bf16 %v5380, 0
    %v5413 = vld [vmem:[%s7] sm:$0xf]
    %v5414 = vld [vmem:[%s7 + $0x4] sm:$0xf]
    %v5415 = vld [vmem:[%s7 + $0x8] sm:$0xf]
    %v5416 = vld [vmem:[%s7 + $0xc] sm:$0xf]
    %v5417 = vld [vmem:[%s7 + $0x10] sm:$0xf]
    %v5418 = vld [vmem:[%s7 + $0x14] sm:$0xf]
    %v5419 = vld [vmem:[%s7 + $0x18] sm:$0xf]
    %v5420 = vld [vmem:[%s7 + $0x1c] sm:$0xf]
    %v5421 = vld [vmem:[%s7 + $0x20] sm:$0xf]
    %v5422 = vld [vmem:[%s7 + $0x24] sm:$0xf]
    %v5423 = vld [vmem:[%s7 + $0x28] sm:$0xf]
    %v5424 = vld [vmem:[%s7 + $0x2c] sm:$0xf]
    %v5425 = vld [vmem:[%s7 + $0x30] sm:$0xf]
    %v5426 = vld [vmem:[%s7 + $0x34] sm:$0xf]
    %v5427 = vld [vmem:[%s7 + $0x38] sm:$0xf]
    %v5428 = vld [vmem:[%s7 + $0x3c] sm:$0xf]
    %v5429 = vld [vmem:[%s7 + $0x40] sm:$0xf]
    %v5430 = vld [vmem:[%s7 + $0x44] sm:$0xf]
    %v5431 = vld [vmem:[%s7 + $0x48] sm:$0xf]
    %v5432 = vld [vmem:[%s7 + $0x4c] sm:$0xf]
    %v5433 = vld [vmem:[%s7 + $0x50] sm:$0xf]
    %v5434 = vld [vmem:[%s7 + $0x54] sm:$0xf]
    %v5435 = vld [vmem:[%s7 + $0x58] sm:$0xf]
    %v5436 = vld [vmem:[%s7 + $0x5c] sm:$0xf]
    %v5437 = vld [vmem:[%s7 + $0x60] sm:$0xf]
    %v5438 = vld [vmem:[%s7 + $0x64] sm:$0xf]
    %v5439 = vld [vmem:[%s7 + $0x68] sm:$0xf]
    %v5440 = vld [vmem:[%s7 + $0x6c] sm:$0xf]
    %v5441 = vld [vmem:[%s7 + $0x70] sm:$0xf]
    %v5442 = vld [vmem:[%s7 + $0x74] sm:$0xf]
    %v5443 = vld [vmem:[%s7 + $0x78] sm:$0xf]
    %v5444 = vld [vmem:[%s7 + $0x7c] sm:$0xf]
    %v5445 = vld [vmem:[%s7 + $0x80] sm:$0xf]
    %v5446 = vld [vmem:[%s7 + $0x84] sm:$0xf]
    %v5447 = vld [vmem:[%s7 + $0x88] sm:$0xf]
    %v5448 = vld [vmem:[%s7 + $0x8c] sm:$0xf]
    %v5449 = vld [vmem:[%s7 + $0x90] sm:$0xf]
    %v5450 = vld [vmem:[%s7 + $0x94] sm:$0xf]
    %v5451 = vld [vmem:[%s7 + $0x98] sm:$0xf]
    %v5452 = vld [vmem:[%s7 + $0x9c] sm:$0xf]
    %v5453 = vld [vmem:[%s7 + $0xa0] sm:$0xf]
    %v5454 = vld [vmem:[%s7 + $0xa4] sm:$0xf]
    %v5455 = vld [vmem:[%s7 + $0xa8] sm:$0xf]
    %v5456 = vld [vmem:[%s7 + $0xac] sm:$0xf]
    %v5457 = vld [vmem:[%s7 + $0xb0] sm:$0xf]
    %v5458 = vld [vmem:[%s7 + $0xb4] sm:$0xf]
    %v5459 = vld [vmem:[%s7 + $0xb8] sm:$0xf]
    %v5460 = vld [vmem:[%s7 + $0xbc] sm:$0xf]
    %v5461 = vld [vmem:[%s7 + $0xc0] sm:$0xf]
    %v5462 = vld [vmem:[%s7 + $0xc4] sm:$0xf]
    %v5463 = vld [vmem:[%s7 + $0xc8] sm:$0xf]
    %v5464 = vld [vmem:[%s7 + $0xcc] sm:$0xf]
    %v5465 = vld [vmem:[%s7 + $0xd0] sm:$0xf]
    %v5466 = vld [vmem:[%s7 + $0xd4] sm:$0xf]
    %v5467 = vld [vmem:[%s7 + $0xd8] sm:$0xf]
    %v5468 = vld [vmem:[%s7 + $0xdc] sm:$0xf]
    %v5469 = vld [vmem:[%s7 + $0xe0] sm:$0xf]
    %v5470 = vld [vmem:[%s7 + $0xe4] sm:$0xf]
    %v5471 = vld [vmem:[%s7 + $0xe8] sm:$0xf]
    %v5472 = vld [vmem:[%s7 + $0xec] sm:$0xf]
    %v5473 = vld [vmem:[%s7 + $0xf0] sm:$0xf]
    %v5474 = vld [vmem:[%s7 + $0xf4] sm:$0xf]
    %v5475 = vld [vmem:[%s7 + $0xf8] sm:$0xf]
    %v5476 = vld [vmem:[%s7 + $0xfc] sm:$0xf]
    %v5477 = vld [vmem:[%s8] sm:$0x1]
    %v5479 = vlaneseq
    %v5480 = vshrl.u32 %v5479, 7
    %v5481 = vsub.s32 0, %v5480
    %v5482 = vrot.slane %v5477, %v5481
    %v5548 = vunpack.c.l.b16 %v5413
    %v5549 = vunpack.c.l.b16 %v5414
    %v5550 = vunpack.c.l.b16 %v5415
    %v5551 = vunpack.c.l.b16 %v5416
    %v5552 = vunpack.c.l.b16 %v5417
    %v5553 = vunpack.c.l.b16 %v5418
    %v5554 = vunpack.c.l.b16 %v5419
    %v5555 = vunpack.c.l.b16 %v5420
    %v5556 = vunpack.c.l.b16 %v5421
    %v5557 = vunpack.c.l.b16 %v5422
    %v5558 = vunpack.c.l.b16 %v5423
    %v5559 = vunpack.c.l.b16 %v5424
    %v5560 = vunpack.c.l.b16 %v5425
    %v5561 = vunpack.c.l.b16 %v5426
    %v5562 = vunpack.c.l.b16 %v5427
    %v5563 = vunpack.c.l.b16 %v5428
    %v5564 = vunpack.c.l.b16 %v5429
    %v5565 = vunpack.c.l.b16 %v5430
    %v5566 = vunpack.c.l.b16 %v5431
    %v5567 = vunpack.c.l.b16 %v5432
    %v5568 = vunpack.c.l.b16 %v5433
    %v5569 = vunpack.c.l.b16 %v5434
    %v5570 = vunpack.c.l.b16 %v5435
    %v5571 = vunpack.c.l.b16 %v5436
    %v5572 = vunpack.c.l.b16 %v5437
    %v5573 = vunpack.c.l.b16 %v5438
    %v5574 = vunpack.c.l.b16 %v5439
    %v5575 = vunpack.c.l.b16 %v5440
    %v5576 = vunpack.c.l.b16 %v5441
    %v5577 = vunpack.c.l.b16 %v5442
    %v5578 = vunpack.c.l.b16 %v5443
    %v5579 = vunpack.c.l.b16 %v5444
    %v5580 = vunpack.c.l.b16 %v5445
    %v5581 = vunpack.c.l.b16 %v5446
    %v5582 = vunpack.c.l.b16 %v5447
    %v5583 = vunpack.c.l.b16 %v5448
    %v5584 = vunpack.c.l.b16 %v5449
    %v5585 = vunpack.c.l.b16 %v5450
    %v5586 = vunpack.c.l.b16 %v5451
    %v5587 = vunpack.c.l.b16 %v5452
    %v5588 = vunpack.c.l.b16 %v5453
    %v5589 = vunpack.c.l.b16 %v5454
    %v5590 = vunpack.c.l.b16 %v5455
    %v5591 = vunpack.c.l.b16 %v5456
    %v5592 = vunpack.c.l.b16 %v5457
    %v5593 = vunpack.c.l.b16 %v5458
    %v5594 = vunpack.c.l.b16 %v5459
    %v5595 = vunpack.c.l.b16 %v5460
    %v5596 = vunpack.c.l.b16 %v5461
    %v5597 = vunpack.c.l.b16 %v5462
    %v5598 = vunpack.c.l.b16 %v5463
    %v5599 = vunpack.c.l.b16 %v5464
    %v5600 = vunpack.c.l.b16 %v5465
    %v5601 = vunpack.c.l.b16 %v5466
    %v5602 = vunpack.c.l.b16 %v5467
    %v5603 = vunpack.c.l.b16 %v5468
    %v5604 = vunpack.c.l.b16 %v5469
    %v5605 = vunpack.c.l.b16 %v5470
    %v5606 = vunpack.c.l.b16 %v5471
    %v5607 = vunpack.c.l.b16 %v5472
    %v5608 = vunpack.c.l.b16 %v5473
    %v5609 = vunpack.c.l.b16 %v5474
    %v5610 = vunpack.c.l.b16 %v5475
    %v5611 = vunpack.c.l.b16 %v5476
    %v5612 = vpack.c.b16 %v5549, %v5548
    %v5613 = vpack.c.b16 %v5551, %v5550
    %v5614 = vpack.c.b16 %v5553, %v5552
    %v5615 = vpack.c.b16 %v5555, %v5554
    %v5616 = vpack.c.b16 %v5557, %v5556
    %v5617 = vpack.c.b16 %v5559, %v5558
    %v5618 = vpack.c.b16 %v5561, %v5560
    %v5619 = vpack.c.b16 %v5563, %v5562
    %v5620 = vpack.c.b16 %v5565, %v5564
    %v5621 = vpack.c.b16 %v5567, %v5566
    %v5622 = vpack.c.b16 %v5569, %v5568
    %v5623 = vpack.c.b16 %v5571, %v5570
    %v5624 = vpack.c.b16 %v5573, %v5572
    %v5625 = vpack.c.b16 %v5575, %v5574
    %v5626 = vpack.c.b16 %v5577, %v5576
    %v5627 = vpack.c.b16 %v5579, %v5578
    %v5628 = vpack.c.b16 %v5581, %v5580
    %v5629 = vpack.c.b16 %v5583, %v5582
    %v5630 = vpack.c.b16 %v5585, %v5584
    %v5631 = vpack.c.b16 %v5587, %v5586
    %v5632 = vpack.c.b16 %v5589, %v5588
    %v5633 = vpack.c.b16 %v5591, %v5590
    %v5634 = vpack.c.b16 %v5593, %v5592
    %v5635 = vpack.c.b16 %v5595, %v5594
    %v5636 = vpack.c.b16 %v5597, %v5596
    %v5637 = vpack.c.b16 %v5599, %v5598
    %v5638 = vpack.c.b16 %v5601, %v5600
    %v5639 = vpack.c.b16 %v5603, %v5602
    %v5640 = vpack.c.b16 %v5605, %v5604
    %v5641 = vpack.c.b16 %v5607, %v5606
    %v5642 = vpack.c.b16 %v5609, %v5608
    %v5643 = vpack.c.b16 %v5611, %v5610
    %5676 = vmatprep.subr.bf16.mxu0 0
    %5677 = vmatpush1.bf16.msra.mxu0 %v5612
    %5678 = vmatprep.subr.bf16.mxu0 0
    %5679 = vmatpush1.bf16.msra.mxu0 %v5613
    %5680 = vmatprep.subr.bf16.mxu0 0
    %5681 = vmatpush1.bf16.msra.mxu0 %v5614
    %5682 = vmatprep.subr.bf16.mxu0 0
    %5683 = vmatpush1.bf16.msra.mxu0 %v5615
    %5684 = vmatprep.subr.bf16.mxu0 0
    %5685 = vmatpush1.bf16.msra.mxu0 %v5616
    %5686 = vmatprep.subr.bf16.mxu0 0
    %5687 = vmatpush1.bf16.msra.mxu0 %v5617
    %5688 = vmatprep.subr.bf16.mxu0 0
    %5689 = vmatpush1.bf16.msra.mxu0 %v5618
    %5690 = vmatprep.subr.bf16.mxu0 0
    %5691 = vmatpush1.bf16.msra.mxu0 %v5619
    %5692 = vmatprep.subr.bf16.mxu0 0
    %5693 = vmatpush1.bf16.msra.mxu0 %v5620
    %5694 = vmatprep.subr.bf16.mxu0 0
    %5695 = vmatpush1.bf16.msra.mxu0 %v5621
    %5696 = vmatprep.subr.bf16.mxu0 0
    %5697 = vmatpush1.bf16.msra.mxu0 %v5622
    %5698 = vmatprep.subr.bf16.mxu0 0
    %5699 = vmatpush1.bf16.msra.mxu0 %v5623
    %5700 = vmatprep.subr.bf16.mxu0 0
    %5701 = vmatpush1.bf16.msra.mxu0 %v5624
    %5702 = vmatprep.subr.bf16.mxu0 0
    %5703 = vmatpush1.bf16.msra.mxu0 %v5625
    %5704 = vmatprep.subr.bf16.mxu0 0
    %5705 = vmatpush1.bf16.msra.mxu0 %v5626
    %5706 = vmatprep.subr.bf16.mxu0 0
    %5707 = vmatpush1.bf16.msra.mxu0 %v5627
    %5708 = vmatprep.mubr.bf16.mxu0 %v5382
    %5709 = vmatmul.mubr.bf16.gmra.mrb[0].mxu0 %v5381
    %v5710 = vpop.f32.mrb[0].mxu0
    %v5711 = vadd.f32 %v5482, %v5710
    %v5712 = vpop.f32.mrb[0].mxu0
    %v5713 = vpop.f32.mrb[0].mxu0
    %v5714 = vadd.f32 %v5482, %v5713
    %v5715 = vpop.f32.mrb[0].mxu0
    %5716 = vmatprep.mubr.bf16.mxu0 %v5386
    %5717 = vmatmul.mubr.bf16.gmra.mrb[0].mxu0 %v5385
    %v5718 = vpop.f32.mrb[0].mxu0
    %v5719 = vadd.f32 %v5482, %v5718
    %v5720 = vpop.f32.mrb[0].mxu0
    %v5721 = vpop.f32.mrb[0].mxu0
    %v5722 = vadd.f32 %v5482, %v5721
    %v5723 = vpop.f32.mrb[0].mxu0
    %5724 = vmatprep.mubr.bf16.mxu0 %v5390
    %5725 = vmatmul.mubr.bf16.gmra.mrb[0].mxu0 %v5389
    %v5726 = vpop.f32.mrb[0].mxu0
    %v5727 = vadd.f32 %v5482, %v5726
    %v5728 = vpop.f32.mrb[0].mxu0
    %v5729 = vpop.f32.mrb[0].mxu0
    %v5730 = vadd.f32 %v5482, %v5729
    %v5731 = vpop.f32.mrb[0].mxu0
    %5732 = vmatprep.mubr.bf16.mxu0 %v5394
    %5733 = vmatmul.mubr.bf16.gmra.mrb[0].mxu0 %v5393
    %v5734 = vpop.f32.mrb[0].mxu0
    %v5735 = vadd.f32 %v5482, %v5734
    %v5736 = vpop.f32.mrb[0].mxu0
    %v5737 = vpop.f32.mrb[0].mxu0
    %v5738 = vadd.f32 %v5482, %v5737
    %v5739 = vpop.f32.mrb[0].mxu0
    %5740 = vmatprep.mubr.bf16.mxu0 %v5398
    %5741 = vmatmul.mubr.bf16.gmra.mrb[0].mxu0 %v5397
    %v5742 = vpop.f32.mrb[0].mxu0
    %v5743 = vadd.f32 %v5482, %v5742
    %v5744 = vpop.f32.mrb[0].mxu0
    %v5745 = vpop.f32.mrb[0].mxu0
    %v5746 = vadd.f32 %v5482, %v5745
    %v5747 = vpop.f32.mrb[0].mxu0
    %5748 = vmatprep.mubr.bf16.mxu0 %v5402
    %5749 = vmatmul.mubr.bf16.gmra.mrb[0].mxu0 %v5401
    %v5750 = vpop.f32.mrb[0].mxu0
    %v5751 = vadd.f32 %v5482, %v5750
    %v5752 = vpop.f32.mrb[0].mxu0
    %v5753 = vpop.f32.mrb[0].mxu0
    %v5754 = vadd.f32 %v5482, %v5753
    %v5755 = vpop.f32.mrb[0].mxu0
    %5756 = vmatprep.mubr.bf16.mxu0 %v5406
    %5757 = vmatmul.mubr.bf16.gmra.mrb[0].mxu0 %v5405
    %v5758 = vpop.f32.mrb[0].mxu0
    %v5759 = vadd.f32 %v5482, %v5758
    %v5760 = vpop.f32.mrb[0].mxu0
    %v5761 = vpop.f32.mrb[0].mxu0
    %v5762 = vadd.f32 %v5482, %v5761
    %v5763 = vpop.f32.mrb[0].mxu0
    %5764 = vmatprep.mubr.bf16.mxu0 %v5410
    %5765 = vmatmul.mubr.bf16.gmra.mrb[0].mxu0 %v5409
    %v5766 = vpop.f32.mrb[0].mxu0
    %v5767 = vadd.f32 %v5482, %v5766
    %v5768 = vpop.f32.mrb[0].mxu0
    %v5769 = vpop.f32.mrb[0].mxu0
    %v5770 = vadd.f32 %v5482, %v5769
    %v5771 = vpop.f32.mrb[0].mxu0
    %5772 = vdwg.mxu0
    %5773 = vmatprep.subr.bf16.mxu0 0
    %5774 = vmatpush1.bf16.msra.mxu0 %v5628
    %5775 = vmatprep.subr.bf16.mxu0 0
    %5776 = vmatpush1.bf16.msra.mxu0 %v5629
    %5777 = vmatprep.subr.bf16.mxu0 0
    %5778 = vmatpush1.bf16.msra.mxu0 %v5630
    %5779 = vmatprep.subr.bf16.mxu0 0
    %5780 = vmatpush1.bf16.msra.mxu0 %v5631
    %5781 = vmatprep.subr.bf16.mxu0 0
    %5782 = vmatpush1.bf16.msra.mxu0 %v5632
    %5783 = vmatprep.subr.bf16.mxu0 0
    %5784 = vmatpush1.bf16.msra.mxu0 %v5633
    %5785 = vmatprep.subr.bf16.mxu0 0
    %5786 = vmatpush1.bf16.msra.mxu0 %v5634
    %5787 = vmatprep.subr.bf16.mxu0 0
    %5788 = vmatpush1.bf16.msra.mxu0 %v5635
    %5789 = vmatprep.subr.bf16.mxu0 0
    %5790 = vmatpush1.bf16.msra.mxu0 %v5636
    %5791 = vmatprep.subr.bf16.mxu0 0
    %5792 = vmatpush1.bf16.msra.mxu0 %v5637
    %5793 = vmatprep.subr.bf16.mxu0 0
    %5794 = vmatpush1.bf16.msra.mxu0 %v5638
    %5795 = vmatprep.subr.bf16.mxu0 0
    %5796 = vmatpush1.bf16.msra.mxu0 %v5639
    %5797 = vmatprep.subr.bf16.mxu0 0
    %5798 = vmatpush1.bf16.msra.mxu0 %v5640
    %5799 = vmatprep.subr.bf16.mxu0 0
    %5800 = vmatpush1.bf16.msra.mxu0 %v5641
    %5801 = vmatprep.subr.bf16.mxu0 0
    %5802 = vmatpush1.bf16.msra.mxu0 %v5642
    %5803 = vmatprep.subr.bf16.mxu0 0
    %5804 = vmatpush1.bf16.msra.mxu0 %v5643
    %5805 = vmatprep.mubr.bf16.mxu0 %v5384
    %5806 = vmatmul.mubr.bf16.gmra.mrb[0].mxu0 %v5383
    %v5807 = vpop.f32.mrb[0].mxu0
    %v5808 = vadd.f32 %v5711, %v5807
    %v5809 = vpop.f32.mrb[0].mxu0
    %v5810 = vpop.f32.mrb[0].mxu0
    %v5811 = vadd.f32 %v5714, %v5810
    %v5812 = vpop.f32.mrb[0].mxu0
    %5813 = vmatprep.mubr.bf16.mxu0 %v5388
    %5814 = vmatmul.mubr.bf16.gmra.mrb[0].mxu0 %v5387
    %v5815 = vpop.f32.mrb[0].mxu0
    %v5816 = vadd.f32 %v5719, %v5815
    %v5817 = vpop.f32.mrb[0].mxu0
    %v5818 = vpop.f32.mrb[0].mxu0
    %v5819 = vadd.f32 %v5722, %v5818
    %v5820 = vpop.f32.mrb[0].mxu0
    %5821 = vmatprep.mubr.bf16.mxu0 %v5392
    %5822 = vmatmul.mubr.bf16.gmra.mrb[0].mxu0 %v5391
    %v5823 = vpop.f32.mrb[0].mxu0
    %v5824 = vadd.f32 %v5727, %v5823
    %v5825 = vpop.f32.mrb[0].mxu0
    %v5826 = vpop.f32.mrb[0].mxu0
    %v5827 = vadd.f32 %v5730, %v5826
    %v5828 = vpop.f32.mrb[0].mxu0
    %5829 = vmatprep.mubr.bf16.mxu0 %v5396
    %5830 = vmatmul.mubr.bf16.gmra.mrb[0].mxu0 %v5395
    %v5831 = vpop.f32.mrb[0].mxu0
    %v5832 = vadd.f32 %v5735, %v5831
    %v5833 = vpop.f32.mrb[0].mxu0
    %v5834 = vpop.f32.mrb[0].mxu0
    %v5835 = vadd.f32 %v5738, %v5834
    %v5836 = vpop.f32.mrb[0].mxu0
    %5837 = vmatprep.mubr.bf16.mxu0 %v5400
    %5838 = vmatmul.mubr.bf16.gmra.mrb[0].mxu0 %v5399
    %v5839 = vpop.f32.mrb[0].mxu0
    %v5840 = vadd.f32 %v5743, %v5839
    %v5841 = vpop.f32.mrb[0].mxu0
    %v5842 = vpop.f32.mrb[0].mxu0
    %v5843 = vadd.f32 %v5746, %v5842
    %v5844 = vpop.f32.mrb[0].mxu0
    %5845 = vmatprep.mubr.bf16.mxu0 %v5404
    %5846 = vmatmul.mubr.bf16.gmra.mrb[0].mxu0 %v5403
    %v5847 = vpop.f32.mrb[0].mxu0
    %v5848 = vadd.f32 %v5751, %v5847
    %v5849 = vpop.f32.mrb[0].mxu0
    %v5850 = vpop.f32.mrb[0].mxu0
    %v5851 = vadd.f32 %v5754, %v5850
    %v5852 = vpop.f32.mrb[0].mxu0
    %5853 = vmatprep.mubr.bf16.mxu0 %v5408
    %5854 = vmatmul.mubr.bf16.gmra.mrb[0].mxu0 %v5407
    %v5855 = vpop.f32.mrb[0].mxu0
    %v5856 = vadd.f32 %v5759, %v5855
    %v5857 = vpop.f32.mrb[0].mxu0
    %v5858 = vpop.f32.mrb[0].mxu0
    %v5859 = vadd.f32 %v5762, %v5858
    %v5860 = vpop.f32.mrb[0].mxu0
    %5861 = vmatprep.mubr.bf16.mxu0 %v5412
    %5862 = vmatmul.mubr.bf16.gmra.mrb[0].mxu0 %v5411
    %v5863 = vpop.f32.mrb[0].mxu0
    %v5864 = vadd.f32 %v5767, %v5863
    %v5865 = vpop.f32.mrb[0].mxu0
    %v5866 = vpop.f32.mrb[0].mxu0
    %v5867 = vadd.f32 %v5770, %v5866
    %v5868 = vpop.f32.mrb[0].mxu0
    %5869 = vdwg.mxu0
    %5870 = vst [vmem:[%s9] sm:$0xff] %v5808
    %5871 = vst [vmem:[%s9 + $0x8] sm:$0xff] %v5811
    %5872 = vst [vmem:[%s9 + $0x10] sm:$0xff] %v5816
    %5873 = vst [vmem:[%s9 + $0x18] sm:$0xff] %v5819
    %5874 = vst [vmem:[%s9 + $0x20] sm:$0xff] %v5824
    %5875 = vst [vmem:[%s9 + $0x28] sm:$0xff] %v5827
    %5876 = vst [vmem:[%s9 + $0x30] sm:$0xff] %v5832
    %5877 = vst [vmem:[%s9 + $0x38] sm:$0xff] %v5835
    %5878 = vst [vmem:[%s9 + $0x40] sm:$0xff] %v5840
    %5879 = vst [vmem:[%s9 + $0x48] sm:$0xff] %v5843
    %5880 = vst [vmem:[%s9 + $0x50] sm:$0xff] %v5848
    %5881 = vst [vmem:[%s9 + $0x58] sm:$0xff] %v5851
    %5882 = vst [vmem:[%s9 + $0x60] sm:$0xff] %v5856
    %5883 = vst [vmem:[%s9 + $0x68] sm:$0xff] %v5859
    %5884 = vst [vmem:[%s9 + $0x70] sm:$0xff] %v5864
    %5885 = vst [vmem:[%s9 + $0x78] sm:$0xff] %v5867
    // Predicated region
    $region50: #{net_forward.1} parent=1 // pred_check
      _
    $region51: #{net_forward.1} parent=1 // pred_check_branch
      %5887 = sbr.rel (0) target = $region53
    $region52: #{net_forward.1} parent=1 // pred_region
      _
    $region53: #{net_forward.1} parent=1 // pred_fallthru
      _
    // Predicated region
    $region54: #{net_forward.1} parent=1 // pred_check
      _
    $region55: #{net_forward.1} parent=1 // pred_check_branch
      %5889 = sbr.rel (0) target = $region57
    $region56: #{net_forward.1} parent=1 // pred_region
      _
    $region57: #{net_forward.1} parent=1 // pred_fallthru
      _
    %5890 = vsyncpa [#allocation3], 1
    %5891 = vsyncpa [#allocation5], 1

</llo_original>
